<compile_context>
chip_gen: v6e
topology: v6e:2x2x1
jax: 0.10.0
libtpu: 0.0.40
codegen_flags: <defaults>
</compile_context>

<pallas_src>
import jax
import jax.numpy as jnp
from jax import lax
from jax.experimental import pallas as pl
from jax.experimental.pallas import tpu as pltpu

EPS = 1e-5          # nn.LayerNorm default eps
LANES = 128
HALO = 8            # leading/trailing halo rows (sublane aligned; >= max dilation 2)
DILATIONS = (1, 1, 2)


def _round_up(x, m):
    return ((x + m - 1) // m) * m


def _make_kernel(block_b, L, Lp, F, Fp, Dp, tap_packed):
    M = block_b * Lp
    inv_f = 1.0 / float(F)

    def kernel(x_ref, wl_ref, bl_ref, w0_ref, b0_ref, w1_ref, b1_ref,
               w2_ref, b2_ref, o_ref, pad_ref):
        cd = wl_ref.dtype                      # MXU operand dtype (f32 or bf16)

        # Mask of logical (non-padded) channel lanes, used once per LayerNorm.
        lane_mask = (lax.broadcasted_iota(jnp.int32, (1, Fp), 1) < F).astype(jnp.float32)
        # Time-row mask, only needed if L was padded up to a multiple of 8.
        tmask = None
        if Lp != L:
            tmask = lax.broadcasted_iota(jnp.int32, (1, Lp, 1), 1) < L

        # Biases read once and reused by all (unrolled) conv calls.
        bl = bl_ref[...]
        b0 = b0_ref[...]
        b1 = b1_ref[...]
        b2 = b2_ref[...]

        # Zero the halo rows of the persistent conv scratch once per grid step;
        # the interior rows are fully overwritten before every read.
        zhalo = jnp.zeros((block_b, HALO, Fp), jnp.float32)
        pad_ref[:, 0:HALO, :] = zhalo
        pad_ref[:, HALO + Lp:HALO + Lp + HALO, :] = zhalo

        def layernorm(v):
            # v: (M, Fp) f32 with zero padded lanes -> stats over the true F lanes.
            mu = jnp.sum(v, axis=-1, keepdims=True) * inv_f
            c = (v - mu) * lane_mask           # single mask; keeps padded lanes zero
            var = jnp.sum(c * c, axis=-1, keepdims=True) * inv_f
            return c * lax.rsqrt(var + EPS)

        def conv(v, w_ref, bias, d):
            # v: (M, Fp) f32 with zero padded lanes.  "same" Conv1d, K=3, dilation d.
            v3 = v.reshape(block_b, Lp, Fp)
            if tmask is not None:              # re-zero padded time rows (not traced
                v3 = jnp.where(tmask, v3, 0.0)  # when L is already a multiple of 8)
            # Tile-aligned interior store (HALO and Lp are multiples of 8); the two
            # shifted reads pick up the zero halo at the sequence boundaries.
            pad_ref[:, HALO:HALO + Lp, :] = v3
            left = pad_ref[:, HALO - d:HALO - d + Lp, :]     # x[t-d]
            right = pad_ref[:, HALO + d:HALO + d + Lp, :]    # x[t+d]
            if tap_packed:
                # 3*F <= 128: pack the three taps into one 128-lane slab via lane
                # rolls (XLU slot) so the matmul K is 128, not 3*Fp.  Relies on
                # lanes >= F being exactly zero in left/center/right.
                x3 = (left
                      + pltpu.roll(v3, F, axis=2)
                      + pltpu.roll(right, 2 * F, axis=2)).reshape(M, Fp)
            else:
                x3 = jnp.concatenate(
                    [left.reshape(M, Fp), v3.reshape(M, Fp), right.reshape(M, Fp)],
                    axis=-1)                                  # (M, 3*Fp) im2col
            out = jnp.dot(x3.astype(cd), w_ref[...],
                          preferred_element_type=jnp.float32)
            return out + bias

        # Linear(input_size -> filters), fused over all block_b * Lp rows.
        x = x_ref[...].reshape(M, Dp).astype(cd)
        h = jnp.dot(x, wl_ref[...], preferred_element_type=jnp.float32) + bl

        def net(v):
            v = conv(v, w0_ref, b0, DILATIONS[0])   # layer0, dilation 1
            v = jnp.maximum(v, 0.0)                 # relu (only after layer0)
            v = layernorm(v)                        # norms_1[2] (no affine)
            v = conv(v, w1_ref, b1, DILATIONS[1])   # layer1, dilation 1
            v = conv(v, w2_ref, b2, DILATIONS[2])   # layer2, dilation 2
            return v

        h = net(h)                                  # block0
        h = layernorm(jnp.maximum(h, 0.0))          # relu + norms_2[3] (no affine)
        h = net(h)                                  # block1 (weights shared)
        h = net(h)                                  # block2
        h = net(h)                                  # block3
        o_ref[...] = h.reshape(block_b, Lp, Fp).astype(o_ref.dtype)

    return kernel


def _pack_params(params, compute_dtype, Dp, Fp, tap_packed):
    """Pad channels to lane width; pre-pack conv weights for the fused matmul.

    Expected layout (PyTorch -> here):
      wl: (input_size, filters)   == nn.Linear.weight.T
      bl: (1, filters)            == nn.Linear.bias[None]
      wi: (3, filters, filters)   == Conv1d.weight.permute(2, 1, 0)  (tap, Cin, Cout)
      bi: (1, filters)            == Conv1d.bias[None]
    """
    D, F = params["wl"].shape

    def pad_bias(b):
        return jnp.pad(b, ((0, 0), (0, Fp - F))).astype(jnp.float32)

    packed = {
        "wl": jnp.pad(params["wl"], ((0, Dp - D), (0, Fp - F))).astype(compute_dtype),
        "bl": pad_bias(params["bl"]),
    }
    for i in range(3):
        w = params[f"w{i}"]                        # (3, F, F) = (tap, Cin, Cout)
        if tap_packed:
            # One 128-lane slab: rows [k*F, (k+1)*F) hold tap k; all other rows /
            # padded output columns are zero (keeps the lane-zero invariant).
            wp = jnp.zeros((Fp, Fp), jnp.float32)
            for k in range(3):
                wp = wp.at[k * F:(k + 1) * F, :F].set(w[k])
        else:
            wp = jnp.pad(w, ((0, 0), (0, Fp - F), (0, Fp - F))).reshape(3 * Fp, Fp)
        packed[f"w{i}"] = wp.astype(compute_dtype)
        packed[f"b{i}"] = pad_bias(params[f"b{i}"])
    return packed


def _vmem_budget_bytes():
    cap = 64 << 20
    try:
        cap = int(getattr(pltpu.get_tpu_info(), "vmem_capacity_bytes", cap))
    except Exception:
        pass
    # ~96 MiB on 128 MiB parts (v5e/v6e), ~48 MiB on the 64 MiB part (v7x).
    return int(min((cap * 3) // 4, 100 << 20))


def _pick_block_b(B, Lp, Dp, Fp, kw_rows, cd_bytes, budget):
    """Pick a divisor of B so that matmul M = block_b*Lp >= 512 and VMEM fits."""
    def step_bytes(bb):
        m = bb * Lp
        io = 2 * m * (Dp + Fp) * 4                       # double-buffered in/out blocks
        wts = 2 * ((Dp + 3 * kw_rows) * Fp * cd_bytes + 4 * Fp * 4)
        scratch = bb * (Lp + 2 * HALO) * Fp * 4          # conv halo scratch
        live = 10 * m * Fp * 4                           # transient value slabs (rough)
        return io + wts + scratch + live

    best = 1
    for d in range(1, B + 1):
        if B % d != 0:
            continue
        if step_bytes(d) > budget:
            break
        best = d
        if d * Lp >= 512:                                # enough rows to fill MXU M dim
            break
    return best


def idcnn_forward(emb, params, *, compute_dtype=jnp.float32, block_b=None):
    B, L, D = emb.shape
    F = params["wl"].shape[1]
    Lp = _round_up(L, 8)
    Dp = _round_up(max(D, LANES), LANES)
    Fp = _round_up(max(F, LANES), LANES)
    tap_packed = (3 * F <= LANES)          # single 128-lane im2col slab per conv
    kw_rows = Fp if tap_packed else 3 * Fp
    cd_bytes = jnp.dtype(compute_dtype).itemsize

    budget = _vmem_budget_bytes()
    if block_b is None:
        block_b = _pick_block_b(B, Lp, Dp, Fp, kw_rows, cd_bytes, budget)
    assert B % block_b == 0, "block_b must divide the batch size"
    grid = (B // block_b,)

    packed = _pack_params(params, compute_dtype, Dp, Fp, tap_packed)
    emb_p = jnp.pad(emb.astype(jnp.float32), ((0, 0), (0, Lp - L), (0, Dp - D)))

    const2 = lambda b: (0, 0)
    out = pl.pallas_call(
        _make_kernel(block_b, L, Lp, F, Fp, Dp, tap_packed),
        out_shape=jax.ShapeDtypeStruct((B, Lp, Fp), jnp.float32),
        grid_spec=pltpu.PrefetchScalarGridSpec(
            num_scalar_prefetch=0,
            grid=grid,
            in_specs=[
                pl.BlockSpec((block_b, Lp, Dp), lambda b: (b, 0, 0)),  # embeddings
                pl.BlockSpec((Dp, Fp), const2),          # linear weight (padded)
                pl.BlockSpec((1, Fp), const2),           # linear bias
                pl.BlockSpec((kw_rows, Fp), const2),     # conv layer0 weight (packed)
                pl.BlockSpec((1, Fp), const2),
                pl.BlockSpec((kw_rows, Fp), const2),     # conv layer1 weight
                pl.BlockSpec((1, Fp), const2),
                pl.BlockSpec((kw_rows, Fp), const2),     # conv layer2 weight
                pl.BlockSpec((1, Fp), const2),
            ],
            out_specs=pl.BlockSpec((block_b, Lp, Fp), lambda b: (b, 0, 0)),
            scratch_shapes=[pltpu.VMEM((block_b, Lp + 2 * HALO, Fp), jnp.float32)],
        ),
        compiler_params=pltpu.CompilerParams(
            dimension_semantics=("parallel",),
            vmem_limit_bytes=budget,
        ),
    )(emb_p, packed["wl"], packed["bl"],
      packed["w0"], packed["b0"], packed["w1"], packed["b1"],
      packed["w2"], packed["b2"])

    # TODO(synk): consumers that accept the padded (B, Lp, 128) layout should skip
    # this slice (it is an extra full-tensor HBM pass outside the kernel).
    return out[:, :L, :F]


def reference(emb, p):
    # Independent pure-JAX reference using lax.conv_general_dilated in NCW.
    h = emb @ p["wl"] + p["bl"][0]
    x = jnp.transpose(h, (0, 2, 1))            # (B, F, L)

    def ln(x):
        y = jnp.transpose(x, (0, 2, 1))
        mu = y.mean(-1, keepdims=True)
        var = ((y - mu) ** 2).mean(-1, keepdims=True)
        y = (y - mu) / jnp.sqrt(var + EPS)
        return jnp.transpose(y, (0, 2, 1))

    def conv(x, w, b, d):
        wt = jnp.transpose(w, (2, 1, 0))       # (K,I,O) -> (O,I,K)
        out = lax.conv_general_dilated(
            x, wt, window_strides=(1,), padding=[(d, d)], rhs_dilation=(d,),
            dimension_numbers=('NCH', 'OIH', 'NCH'))
        return out + b[0][None, :, None]

    def net(x):
        x = conv(x, p["w0"], p["b0"], 1)
        x = jnp.maximum(x, 0.0)
        x = ln(x)
        x = conv(x, p["w1"], p["b1"], 1)
        x = conv(x, p["w2"], p["b2"], 2)
        return x

    x = net(x)
    x = jnp.maximum(x, 0.0)
    x = ln(x)
    x = net(x)
    x = net(x)
    x = net(x)
    return jnp.transpose(x, (0, 2, 1))


if __name__ == "__main__":
    B, L, INPUT_SIZE, FILTERS = 2, 16, 32, 8
    key = jax.random.PRNGKey(0)
    ks = jax.random.split(key, 9)
    s = 0.1
    params = {
        "wl": s * jax.random.normal(ks[0], (INPUT_SIZE, FILTERS), jnp.float32),
        "bl": s * jax.random.normal(ks[1], (1, FILTERS), jnp.float32),
        "w0": s * jax.random.normal(ks[2], (3, FILTERS, FILTERS), jnp.float32),
        "b0": s * jax.random.normal(ks[3], (1, FILTERS), jnp.float32),
        "w1": s * jax.random.normal(ks[4], (3, FILTERS, FILTERS), jnp.float32),
        "b1": s * jax.random.normal(ks[5], (1, FILTERS), jnp.float32),
        "w2": s * jax.random.normal(ks[6], (3, FILTERS, FILTERS), jnp.float32),
        "b2": s * jax.random.normal(ks[7], (1, FILTERS), jnp.float32),
    }
    emb = jax.random.normal(ks[8], (B, L, INPUT_SIZE), jnp.float32)

    # f32 operand path: verified tightly against the pure-JAX reference.
    out = jax.block_until_ready(idcnn_forward(emb, params))
    assert out.shape == (B, L, FILTERS)
    ref = reference(emb, params)
    assert jnp.allclose(out, ref, atol=2e-3, rtol=2e-3), "f32 kernel/reference mismatch"

    # bf16 MXU-operand path (full MXU rate on v5e/v6e/v7x): f32 accumulation and
    # f32 LayerNorm.  Accuracy-checked with a loose tolerance since rounding
    # compounds across 12 chained shared-weight convs.
    out_bf = jax.block_until_ready(
        idcnn_forward(emb, params, compute_dtype=jnp.bfloat16))
    assert out_bf.shape == (B, L, FILTERS)
    assert bool(jnp.all(jnp.isfinite(out_bf)))
    max_err = float(jnp.max(jnp.abs(out_bf - ref)))
    assert max_err < 0.35, f"bf16 path drifted too far from f32 reference: {max_err}"

    print("KERNEL_OK")
</pallas_src>

<mosaic_0001>
module attributes {stable_mosaic.version = 11 : i64} {
  func.func @kernel(%arg0: i32, %arg1: memref<2x16x128xf32, #tpu.memory_space<vmem>>, %arg2: memref<128x128xf32, #tpu.memory_space<vmem>>, %arg3: memref<1x128xf32, #tpu.memory_space<vmem>>, %arg4: memref<128x128xf32, #tpu.memory_space<vmem>>, %arg5: memref<1x128xf32, #tpu.memory_space<vmem>>, %arg6: memref<128x128xf32, #tpu.memory_space<vmem>>, %arg7: memref<1x128xf32, #tpu.memory_space<vmem>>, %arg8: memref<128x128xf32, #tpu.memory_space<vmem>>, %arg9: memref<1x128xf32, #tpu.memory_space<vmem>>, %arg10: memref<2x16x128xf32, #tpu.memory_space<vmem>>, %arg11: memref<2x32x128xf32, #tpu.memory_space<vmem>>) attributes {dimension_semantics = [#tpu.dimension_semantics<parallel>], iteration_bounds = array<i64: 1>, scalar_prefetch = 0 : i64, scratch_operands = 1 : i64, tpu.core_type = #tpu.core_type<tc>, window_params = [{transform_indices = @transform_0, window_bounds = array<i64: 2, 16, 128>}, {pipeline_mode = #tpu.pipeline_mode<synchronous>, transform_indices = @transform_1, window_bounds = array<i64: 128, 128>}, {pipeline_mode = #tpu.pipeline_mode<synchronous>, transform_indices = @transform_2, window_bounds = array<i64: 1, 128>}, {pipeline_mode = #tpu.pipeline_mode<synchronous>, transform_indices = @transform_3, window_bounds = array<i64: 128, 128>}, {pipeline_mode = #tpu.pipeline_mode<synchronous>, transform_indices = @transform_4, window_bounds = array<i64: 1, 128>}, {pipeline_mode = #tpu.pipeline_mode<synchronous>, transform_indices = @transform_5, window_bounds = array<i64: 128, 128>}, {pipeline_mode = #tpu.pipeline_mode<synchronous>, transform_indices = @transform_6, window_bounds = array<i64: 1, 128>}, {pipeline_mode = #tpu.pipeline_mode<synchronous>, transform_indices = @transform_7, window_bounds = array<i64: 128, 128>}, {pipeline_mode = #tpu.pipeline_mode<synchronous>, transform_indices = @transform_8, window_bounds = array<i64: 1, 128>}, {transform_indices = @transform_9, window_bounds = array<i64: 2, 16, 128>}]} {
    %0 = tpu.iota {dimensions = array<i32: 1>} : vector<1x128xi32>
    %c8_i32 = arith.constant 8 : i32
    %1 = vector.broadcast %c8_i32 : i32 to vector<1x128xi32>
    %2 = arith.cmpi slt, %0, %1 : vector<1x128xi32>
    %3 = arith.extui %2 : vector<1x128xi1> to vector<1x128xi32>
    %4 = arith.sitofp %3 : vector<1x128xi32> to vector<1x128xf32>
    %c0 = arith.constant 0 : index
    %c0_0 = arith.constant 0 : index
    %5 = vector.load %arg3[%c0, %c0_0] : memref<1x128xf32, #tpu.memory_space<vmem>>, vector<1x128xf32>
    %c0_1 = arith.constant 0 : index
    %c0_2 = arith.constant 0 : index
    %6 = vector.load %arg5[%c0_1, %c0_2] : memref<1x128xf32, #tpu.memory_space<vmem>>, vector<1x128xf32>
    %c0_3 = arith.constant 0 : index
    %c0_4 = arith.constant 0 : index
    %7 = vector.load %arg7[%c0_3, %c0_4] : memref<1x128xf32, #tpu.memory_space<vmem>>, vector<1x128xf32>
    %c0_5 = arith.constant 0 : index
    %c0_6 = arith.constant 0 : index
    %8 = vector.load %arg9[%c0_5, %c0_6] : memref<1x128xf32, #tpu.memory_space<vmem>>, vector<1x128xf32>
    %cst = arith.constant 0.000000e+00 : f32
    %9 = vector.broadcast %cst : f32 to vector<2x8x128xf32>
    %c0_7 = arith.constant 0 : index
    %c0_8 = arith.constant 0 : index
    %c0_9 = arith.constant 0 : index
    %10 = vector.load %arg11[%c0_7, %c0_8, %c0_9] : memref<2x32x128xf32, #tpu.memory_space<vmem>>, vector<2x8x128xf32>
    tpu.vector_store %arg11[%c0_7, %c0_8, %c0_9], %9 {strides = array<i32>} : memref<2x32x128xf32, #tpu.memory_space<vmem>>, vector<2x8x128xf32>,
    %c0_10 = arith.constant 0 : index
    %c24 = arith.constant 24 : index
    %c0_11 = arith.constant 0 : index
    %11 = vector.load %arg11[%c0_10, %c24, %c0_11] : memref<2x32x128xf32, #tpu.memory_space<vmem>>, vector<2x8x128xf32>
    tpu.vector_store %arg11[%c0_10, %c24, %c0_11], %9 {strides = array<i32>} : memref<2x32x128xf32, #tpu.memory_space<vmem>>, vector<2x8x128xf32>,
    %c0_12 = arith.constant 0 : index
    %c0_13 = arith.constant 0 : index
    %c0_14 = arith.constant 0 : index
    %12 = vector.load %arg1[%c0_12, %c0_13, %c0_14] : memref<2x16x128xf32, #tpu.memory_space<vmem>>, vector<2x16x128xf32>
    %13 = vector.shape_cast %12 : vector<2x16x128xf32> to vector<32x128xf32>
    %c0_15 = arith.constant 0 : index
    %c0_16 = arith.constant 0 : index
    %14 = vector.load %arg2[%c0_15, %c0_16] : memref<128x128xf32, #tpu.memory_space<vmem>>, vector<128x128xf32>
    %cst_17 = arith.constant dense<0.000000e+00> : vector<32x128xf32>
    %15 = tpu.matmul %13, %14, %cst_17 {dimension_numbers = #tpu.dot_dimension_numbers<[1], [0], [0], [1], [0, 0, 1, 1], [], []>} : vector<32x128xf32>, vector<128x128xf32>, vector<32x128xf32> -> vector<32x128xf32>
    %16 = vector.broadcast %5 : vector<1x128xf32> to vector<32x128xf32>
    %17 = arith.addf %15, %16 : vector<32x128xf32>
    %18 = vector.shape_cast %17 : vector<32x128xf32> to vector<2x16x128xf32>
    %c0_18 = arith.constant 0 : index
    %c8 = arith.constant 8 : index
    %c0_19 = arith.constant 0 : index
    %19 = vector.load %arg11[%c0_18, %c8, %c0_19] : memref<2x32x128xf32, #tpu.memory_space<vmem>>, vector<2x16x128xf32>
    tpu.vector_store %arg11[%c0_18, %c8, %c0_19], %18 {strides = array<i32>} : memref<2x32x128xf32, #tpu.memory_space<vmem>>, vector<2x16x128xf32>,
    %c0_20 = arith.constant 0 : index
    %c7 = arith.constant 7 : index
    %c0_21 = arith.constant 0 : index
    %20 = vector.load %arg11[%c0_20, %c7, %c0_21] : memref<2x32x128xf32, #tpu.memory_space<vmem>>, vector<2x16x128xf32>
    %c0_22 = arith.constant 0 : index
    %c9 = arith.constant 9 : index
    %c0_23 = arith.constant 0 : index
    %21 = vector.load %arg11[%c0_22, %c9, %c0_23] : memref<2x32x128xf32, #tpu.memory_space<vmem>>, vector<2x16x128xf32>
    %c8_i32_24 = arith.constant 8 : i32
    %22 = tpu.dynamic_rotate %18 by %c8_i32_24 dim 2 : vector<2x16x128xf32>, i32 -> vector<2x16x128xf32>
    %23 = arith.addf %20, %22 : vector<2x16x128xf32>
    %c16_i32 = arith.constant 16 : i32
    %24 = tpu.dynamic_rotate %21 by %c16_i32 dim 2 : vector<2x16x128xf32>, i32 -> vector<2x16x128xf32>
    %25 = arith.addf %23, %24 : vector<2x16x128xf32>
    %26 = vector.shape_cast %25 : vector<2x16x128xf32> to vector<32x128xf32>
    %c0_25 = arith.constant 0 : index
    %c0_26 = arith.constant 0 : index
    %27 = vector.load %arg4[%c0_25, %c0_26] : memref<128x128xf32, #tpu.memory_space<vmem>>, vector<128x128xf32>
    %cst_27 = arith.constant dense<0.000000e+00> : vector<32x128xf32>
    %28 = tpu.matmul %26, %27, %cst_27 {dimension_numbers = #tpu.dot_dimension_numbers<[1], [0], [0], [1], [0, 0, 1, 1], [], []>} : vector<32x128xf32>, vector<128x128xf32>, vector<32x128xf32> -> vector<32x128xf32>
    %29 = vector.broadcast %6 : vector<1x128xf32> to vector<32x128xf32>
    %30 = arith.addf %28, %29 : vector<32x128xf32>
    %cst_28 = arith.constant 0.000000e+00 : f32
    %31 = vector.broadcast %cst_28 : f32 to vector<32x128xf32>
    %32 = arith.maximumf %30, %31 : vector<32x128xf32>
    %cst_29 = arith.constant dense<0.000000e+00> : vector<32xf32>
    %33 = vector.multi_reduction <add>, %32, %cst_29 [1] : vector<32x128xf32> to vector<32xf32>
    %34 = vector.shape_cast %33 : vector<32xf32> to vector<32x1xf32>
    %cst_30 = arith.constant 1.250000e-01 : f32
    %35 = vector.broadcast %cst_30 : f32 to vector<32x1xf32>
    %36 = arith.mulf %34, %35 : vector<32x1xf32>
    %37 = vector.broadcast %36 : vector<32x1xf32> to vector<32x128xf32>
    %38 = arith.subf %32, %37 : vector<32x128xf32>
    %39 = vector.broadcast %4 : vector<1x128xf32> to vector<32x128xf32>
    %40 = arith.mulf %38, %39 : vector<32x128xf32>
    %41 = arith.mulf %40, %40 : vector<32x128xf32>
    %cst_31 = arith.constant dense<0.000000e+00> : vector<32xf32>
    %42 = vector.multi_reduction <add>, %41, %cst_31 [1] : vector<32x128xf32> to vector<32xf32>
    %43 = vector.shape_cast %42 : vector<32xf32> to vector<32x1xf32>
    %cst_32 = arith.constant 1.250000e-01 : f32
    %44 = vector.broadcast %cst_32 : f32 to vector<32x1xf32>
    %45 = arith.mulf %43, %44 : vector<32x1xf32>
    %cst_33 = arith.constant 9.99999974E-6 : f32
    %46 = vector.broadcast %cst_33 : f32 to vector<32x1xf32>
    %47 = arith.addf %45, %46 : vector<32x1xf32>
    %48 = math.rsqrt %47 : vector<32x1xf32>
    %49 = vector.broadcast %48 : vector<32x1xf32> to vector<32x128xf32>
    %50 = arith.mulf %40, %49 : vector<32x128xf32>
    %51 = vector.shape_cast %50 : vector<32x128xf32> to vector<2x16x128xf32>
    %c0_34 = arith.constant 0 : index
    %c8_35 = arith.constant 8 : index
    %c0_36 = arith.constant 0 : index
    %52 = vector.load %arg11[%c0_34, %c8_35, %c0_36] : memref<2x32x128xf32, #tpu.memory_space<vmem>>, vector<2x16x128xf32>
    tpu.vector_store %arg11[%c0_34, %c8_35, %c0_36], %51 {strides = array<i32>} : memref<2x32x128xf32, #tpu.memory_space<vmem>>, vector<2x16x128xf32>,
    %c0_37 = arith.constant 0 : index
    %c7_38 = arith.constant 7 : index
    %c0_39 = arith.constant 0 : index
    %53 = vector.load %arg11[%c0_37, %c7_38, %c0_39] : memref<2x32x128xf32, #tpu.memory_space<vmem>>, vector<2x16x128xf32>
    %c0_40 = arith.constant 0 : index
    %c9_41 = arith.constant 9 : index
    %c0_42 = arith.constant 0 : index
    %54 = vector.load %arg11[%c0_40, %c9_41, %c0_42] : memref<2x32x128xf32, #tpu.memory_space<vmem>>, vector<2x16x128xf32>
    %c8_i32_43 = arith.constant 8 : i32
    %55 = tpu.dynamic_rotate %51 by %c8_i32_43 dim 2 : vector<2x16x128xf32>, i32 -> vector<2x16x128xf32>
    %56 = arith.addf %53, %55 : vector<2x16x128xf32>
    %c16_i32_44 = arith.constant 16 : i32
    %57 = tpu.dynamic_rotate %54 by %c16_i32_44 dim 2 : vector<2x16x128xf32>, i32 -> vector<2x16x128xf32>
    %58 = arith.addf %56, %57 : vector<2x16x128xf32>
    %59 = vector.shape_cast %58 : vector<2x16x128xf32> to vector<32x128xf32>
    %c0_45 = arith.constant 0 : index
    %c0_46 = arith.constant 0 : index
    %60 = vector.load %arg6[%c0_45, %c0_46] : memref<128x128xf32, #tpu.memory_space<vmem>>, vector<128x128xf32>
    %cst_47 = arith.constant dense<0.000000e+00> : vector<32x128xf32>
    %61 = tpu.matmul %59, %60, %cst_47 {dimension_numbers = #tpu.dot_dimension_numbers<[1], [0], [0], [1], [0, 0, 1, 1], [], []>} : vector<32x128xf32>, vector<128x128xf32>, vector<32x128xf32> -> vector<32x128xf32>
    %62 = vector.broadcast %7 : vector<1x128xf32> to vector<32x128xf32>
    %63 = arith.addf %61, %62 : vector<32x128xf32>
    %64 = vector.shape_cast %63 : vector<32x128xf32> to vector<2x16x128xf32>
    %c0_48 = arith.constant 0 : index
    %c8_49 = arith.constant 8 : index
    %c0_50 = arith.constant 0 : index
    %65 = vector.load %arg11[%c0_48, %c8_49, %c0_50] : memref<2x32x128xf32, #tpu.memory_space<vmem>>, vector<2x16x128xf32>
    tpu.vector_store %arg11[%c0_48, %c8_49, %c0_50], %64 {strides = array<i32>} : memref<2x32x128xf32, #tpu.memory_space<vmem>>, vector<2x16x128xf32>,
    %c0_51 = arith.constant 0 : index
    %c6 = arith.constant 6 : index
    %c0_52 = arith.constant 0 : index
    %66 = vector.load %arg11[%c0_51, %c6, %c0_52] : memref<2x32x128xf32, #tpu.memory_space<vmem>>, vector<2x16x128xf32>
    %c0_53 = arith.constant 0 : index
    %c10 = arith.constant 10 : index
    %c0_54 = arith.constant 0 : index
    %67 = vector.load %arg11[%c0_53, %c10, %c0_54] : memref<2x32x128xf32, #tpu.memory_space<vmem>>, vector<2x16x128xf32>
    %c8_i32_55 = arith.constant 8 : i32
    %68 = tpu.dynamic_rotate %64 by %c8_i32_55 dim 2 : vector<2x16x128xf32>, i32 -> vector<2x16x128xf32>
    %69 = arith.addf %66, %68 : vector<2x16x128xf32>
    %c16_i32_56 = arith.constant 16 : i32
    %70 = tpu.dynamic_rotate %67 by %c16_i32_56 dim 2 : vector<2x16x128xf32>, i32 -> vector<2x16x128xf32>
    %71 = arith.addf %69, %70 : vector<2x16x128xf32>
    %72 = vector.shape_cast %71 : vector<2x16x128xf32> to vector<32x128xf32>
    %c0_57 = arith.constant 0 : index
    %c0_58 = arith.constant 0 : index
    %73 = vector.load %arg8[%c0_57, %c0_58] : memref<128x128xf32, #tpu.memory_space<vmem>>, vector<128x128xf32>
    %cst_59 = arith.constant dense<0.000000e+00> : vector<32x128xf32>
    %74 = tpu.matmul %72, %73, %cst_59 {dimension_numbers = #tpu.dot_dimension_numbers<[1], [0], [0], [1], [0, 0, 1, 1], [], []>} : vector<32x128xf32>, vector<128x128xf32>, vector<32x128xf32> -> vector<32x128xf32>
    %75 = vector.broadcast %8 : vector<1x128xf32> to vector<32x128xf32>
    %76 = arith.addf %74, %75 : vector<32x128xf32>
    %cst_60 = arith.constant 0.000000e+00 : f32
    %77 = vector.broadcast %cst_60 : f32 to vector<32x128xf32>
    %78 = arith.maximumf %76, %77 : vector<32x128xf32>
    %cst_61 = arith.constant dense<0.000000e+00> : vector<32xf32>
    %79 = vector.multi_reduction <add>, %78, %cst_61 [1] : vector<32x128xf32> to vector<32xf32>
    %80 = vector.shape_cast %79 : vector<32xf32> to vector<32x1xf32>
    %cst_62 = arith.constant 1.250000e-01 : f32
    %81 = vector.broadcast %cst_62 : f32 to vector<32x1xf32>
    %82 = arith.mulf %80, %81 : vector<32x1xf32>
    %83 = vector.broadcast %82 : vector<32x1xf32> to vector<32x128xf32>
    %84 = arith.subf %78, %83 : vector<32x128xf32>
    %85 = vector.broadcast %4 : vector<1x128xf32> to vector<32x128xf32>
    %86 = arith.mulf %84, %85 : vector<32x128xf32>
    %87 = arith.mulf %86, %86 : vector<32x128xf32>
    %cst_63 = arith.constant dense<0.000000e+00> : vector<32xf32>
    %88 = vector.multi_reduction <add>, %87, %cst_63 [1] : vector<32x128xf32> to vector<32xf32>
    %89 = vector.shape_cast %88 : vector<32xf32> to vector<32x1xf32>
    %cst_64 = arith.constant 1.250000e-01 : f32
    %90 = vector.broadcast %cst_64 : f32 to vector<32x1xf32>
    %91 = arith.mulf %89, %90 : vector<32x1xf32>
    %cst_65 = arith.constant 9.99999974E-6 : f32
    %92 = vector.broadcast %cst_65 : f32 to vector<32x1xf32>
    %93 = arith.addf %91, %92 : vector<32x1xf32>
    %94 = math.rsqrt %93 : vector<32x1xf32>
    %95 = vector.broadcast %94 : vector<32x1xf32> to vector<32x128xf32>
    %96 = arith.mulf %86, %95 : vector<32x128xf32>
    %97 = vector.shape_cast %96 : vector<32x128xf32> to vector<2x16x128xf32>
    %c0_66 = arith.constant 0 : index
    %c8_67 = arith.constant 8 : index
    %c0_68 = arith.constant 0 : index
    %98 = vector.load %arg11[%c0_66, %c8_67, %c0_68] : memref<2x32x128xf32, #tpu.memory_space<vmem>>, vector<2x16x128xf32>
    tpu.vector_store %arg11[%c0_66, %c8_67, %c0_68], %97 {strides = array<i32>} : memref<2x32x128xf32, #tpu.memory_space<vmem>>, vector<2x16x128xf32>,
    %c0_69 = arith.constant 0 : index
    %c7_70 = arith.constant 7 : index
    %c0_71 = arith.constant 0 : index
    %99 = vector.load %arg11[%c0_69, %c7_70, %c0_71] : memref<2x32x128xf32, #tpu.memory_space<vmem>>, vector<2x16x128xf32>
    %c0_72 = arith.constant 0 : index
    %c9_73 = arith.constant 9 : index
    %c0_74 = arith.constant 0 : index
    %100 = vector.load %arg11[%c0_72, %c9_73, %c0_74] : memref<2x32x128xf32, #tpu.memory_space<vmem>>, vector<2x16x128xf32>
    %c8_i32_75 = arith.constant 8 : i32
    %101 = tpu.dynamic_rotate %97 by %c8_i32_75 dim 2 : vector<2x16x128xf32>, i32 -> vector<2x16x128xf32>
    %102 = arith.addf %99, %101 : vector<2x16x128xf32>
    %c16_i32_76 = arith.constant 16 : i32
    %103 = tpu.dynamic_rotate %100 by %c16_i32_76 dim 2 : vector<2x16x128xf32>, i32 -> vector<2x16x128xf32>
    %104 = arith.addf %102, %103 : vector<2x16x128xf32>
    %105 = vector.shape_cast %104 : vector<2x16x128xf32> to vector<32x128xf32>
    %c0_77 = arith.constant 0 : index
    %c0_78 = arith.constant 0 : index
    %106 = vector.load %arg4[%c0_77, %c0_78] : memref<128x128xf32, #tpu.memory_space<vmem>>, vector<128x128xf32>
    %cst_79 = arith.constant dense<0.000000e+00> : vector<32x128xf32>
    %107 = tpu.matmul %105, %106, %cst_79 {dimension_numbers = #tpu.dot_dimension_numbers<[1], [0], [0], [1], [0, 0, 1, 1], [], []>} : vector<32x128xf32>, vector<128x128xf32>, vector<32x128xf32> -> vector<32x128xf32>
    %108 = vector.broadcast %6 : vector<1x128xf32> to vector<32x128xf32>
    %109 = arith.addf %107, %108 : vector<32x128xf32>
    %cst_80 = arith.constant 0.000000e+00 : f32
    %110 = vector.broadcast %cst_80 : f32 to vector<32x128xf32>
    %111 = arith.maximumf %109, %110 : vector<32x128xf32>
    %cst_81 = arith.constant dense<0.000000e+00> : vector<32xf32>
    %112 = vector.multi_reduction <add>, %111, %cst_81 [1] : vector<32x128xf32> to vector<32xf32>
    %113 = vector.shape_cast %112 : vector<32xf32> to vector<32x1xf32>
    %cst_82 = arith.constant 1.250000e-01 : f32
    %114 = vector.broadcast %cst_82 : f32 to vector<32x1xf32>
    %115 = arith.mulf %113, %114 : vector<32x1xf32>
    %116 = vector.broadcast %115 : vector<32x1xf32> to vector<32x128xf32>
    %117 = arith.subf %111, %116 : vector<32x128xf32>
    %118 = vector.broadcast %4 : vector<1x128xf32> to vector<32x128xf32>
    %119 = arith.mulf %117, %118 : vector<32x128xf32>
    %120 = arith.mulf %119, %119 : vector<32x128xf32>
    %cst_83 = arith.constant dense<0.000000e+00> : vector<32xf32>
    %121 = vector.multi_reduction <add>, %120, %cst_83 [1] : vector<32x128xf32> to vector<32xf32>
    %122 = vector.shape_cast %121 : vector<32xf32> to vector<32x1xf32>
    %cst_84 = arith.constant 1.250000e-01 : f32
    %123 = vector.broadcast %cst_84 : f32 to vector<32x1xf32>
    %124 = arith.mulf %122, %123 : vector<32x1xf32>
    %cst_85 = arith.constant 9.99999974E-6 : f32
    %125 = vector.broadcast %cst_85 : f32 to vector<32x1xf32>
    %126 = arith.addf %124, %125 : vector<32x1xf32>
    %127 = math.rsqrt %126 : vector<32x1xf32>
    %128 = vector.broadcast %127 : vector<32x1xf32> to vector<32x128xf32>
    %129 = arith.mulf %119, %128 : vector<32x128xf32>
    %130 = vector.shape_cast %129 : vector<32x128xf32> to vector<2x16x128xf32>
    %c0_86 = arith.constant 0 : index
    %c8_87 = arith.constant 8 : index
    %c0_88 = arith.constant 0 : index
    %131 = vector.load %arg11[%c0_86, %c8_87, %c0_88] : memref<2x32x128xf32, #tpu.memory_space<vmem>>, vector<2x16x128xf32>
    tpu.vector_store %arg11[%c0_86, %c8_87, %c0_88], %130 {strides = array<i32>} : memref<2x32x128xf32, #tpu.memory_space<vmem>>, vector<2x16x128xf32>,
    %c0_89 = arith.constant 0 : index
    %c7_90 = arith.constant 7 : index
    %c0_91 = arith.constant 0 : index
    %132 = vector.load %arg11[%c0_89, %c7_90, %c0_91] : memref<2x32x128xf32, #tpu.memory_space<vmem>>, vector<2x16x128xf32>
    %c0_92 = arith.constant 0 : index
    %c9_93 = arith.constant 9 : index
    %c0_94 = arith.constant 0 : index
    %133 = vector.load %arg11[%c0_92, %c9_93, %c0_94] : memref<2x32x128xf32, #tpu.memory_space<vmem>>, vector<2x16x128xf32>
    %c8_i32_95 = arith.constant 8 : i32
    %134 = tpu.dynamic_rotate %130 by %c8_i32_95 dim 2 : vector<2x16x128xf32>, i32 -> vector<2x16x128xf32>
    %135 = arith.addf %132, %134 : vector<2x16x128xf32>
    %c16_i32_96 = arith.constant 16 : i32
    %136 = tpu.dynamic_rotate %133 by %c16_i32_96 dim 2 : vector<2x16x128xf32>, i32 -> vector<2x16x128xf32>
    %137 = arith.addf %135, %136 : vector<2x16x128xf32>
    %138 = vector.shape_cast %137 : vector<2x16x128xf32> to vector<32x128xf32>
    %c0_97 = arith.constant 0 : index
    %c0_98 = arith.constant 0 : index
    %139 = vector.load %arg6[%c0_97, %c0_98] : memref<128x128xf32, #tpu.memory_space<vmem>>, vector<128x128xf32>
    %cst_99 = arith.constant dense<0.000000e+00> : vector<32x128xf32>
    %140 = tpu.matmul %138, %139, %cst_99 {dimension_numbers = #tpu.dot_dimension_numbers<[1], [0], [0], [1], [0, 0, 1, 1], [], []>} : vector<32x128xf32>, vector<128x128xf32>, vector<32x128xf32> -> vector<32x128xf32>
    %141 = vector.broadcast %7 : vector<1x128xf32> to vector<32x128xf32>
    %142 = arith.addf %140, %141 : vector<32x128xf32>
    %143 = vector.shape_cast %142 : vector<32x128xf32> to vector<2x16x128xf32>
    %c0_100 = arith.constant 0 : index
    %c8_101 = arith.constant 8 : index
    %c0_102 = arith.constant 0 : index
    %144 = vector.load %arg11[%c0_100, %c8_101, %c0_102] : memref<2x32x128xf32, #tpu.memory_space<vmem>>, vector<2x16x128xf32>
    tpu.vector_store %arg11[%c0_100, %c8_101, %c0_102], %143 {strides = array<i32>} : memref<2x32x128xf32, #tpu.memory_space<vmem>>, vector<2x16x128xf32>,
    %c0_103 = arith.constant 0 : index
    %c6_104 = arith.constant 6 : index
    %c0_105 = arith.constant 0 : index
    %145 = vector.load %arg11[%c0_103, %c6_104, %c0_105] : memref<2x32x128xf32, #tpu.memory_space<vmem>>, vector<2x16x128xf32>
    %c0_106 = arith.constant 0 : index
    %c10_107 = arith.constant 10 : index
    %c0_108 = arith.constant 0 : index
    %146 = vector.load %arg11[%c0_106, %c10_107, %c0_108] : memref<2x32x128xf32, #tpu.memory_space<vmem>>, vector<2x16x128xf32>
    %c8_i32_109 = arith.constant 8 : i32
    %147 = tpu.dynamic_rotate %143 by %c8_i32_109 dim 2 : vector<2x16x128xf32>, i32 -> vector<2x16x128xf32>
    %148 = arith.addf %145, %147 : vector<2x16x128xf32>
    %c16_i32_110 = arith.constant 16 : i32
    %149 = tpu.dynamic_rotate %146 by %c16_i32_110 dim 2 : vector<2x16x128xf32>, i32 -> vector<2x16x128xf32>
    %150 = arith.addf %148, %149 : vector<2x16x128xf32>
    %151 = vector.shape_cast %150 : vector<2x16x128xf32> to vector<32x128xf32>
    %c0_111 = arith.constant 0 : index
    %c0_112 = arith.constant 0 : index
    %152 = vector.load %arg8[%c0_111, %c0_112] : memref<128x128xf32, #tpu.memory_space<vmem>>, vector<128x128xf32>
    %cst_113 = arith.constant dense<0.000000e+00> : vector<32x128xf32>
    %153 = tpu.matmul %151, %152, %cst_113 {dimension_numbers = #tpu.dot_dimension_numbers<[1], [0], [0], [1], [0, 0, 1, 1], [], []>} : vector<32x128xf32>, vector<128x128xf32>, vector<32x128xf32> -> vector<32x128xf32>
    %154 = vector.broadcast %8 : vector<1x128xf32> to vector<32x128xf32>
    %155 = arith.addf %153, %154 : vector<32x128xf32>
    %156 = vector.shape_cast %155 : vector<32x128xf32> to vector<2x16x128xf32>
    %c0_114 = arith.constant 0 : index
    %c8_115 = arith.constant 8 : index
    %c0_116 = arith.constant 0 : index
    %157 = vector.load %arg11[%c0_114, %c8_115, %c0_116] : memref<2x32x128xf32, #tpu.memory_space<vmem>>, vector<2x16x128xf32>
    tpu.vector_store %arg11[%c0_114, %c8_115, %c0_116], %156 {strides = array<i32>} : memref<2x32x128xf32, #tpu.memory_space<vmem>>, vector<2x16x128xf32>,
    %c0_117 = arith.constant 0 : index
    %c7_118 = arith.constant 7 : index
    %c0_119 = arith.constant 0 : index
    %158 = vector.load %arg11[%c0_117, %c7_118, %c0_119] : memref<2x32x128xf32, #tpu.memory_space<vmem>>, vector<2x16x128xf32>
    %c0_120 = arith.constant 0 : index
    %c9_121 = arith.constant 9 : index
    %c0_122 = arith.constant 0 : index
    %159 = vector.load %arg11[%c0_120, %c9_121, %c0_122] : memref<2x32x128xf32, #tpu.memory_space<vmem>>, vector<2x16x128xf32>
    %c8_i32_123 = arith.constant 8 : i32
    %160 = tpu.dynamic_rotate %156 by %c8_i32_123 dim 2 : vector<2x16x128xf32>, i32 -> vector<2x16x128xf32>
    %161 = arith.addf %158, %160 : vector<2x16x128xf32>
    %c16_i32_124 = arith.constant 16 : i32
    %162 = tpu.dynamic_rotate %159 by %c16_i32_124 dim 2 : vector<2x16x128xf32>, i32 -> vector<2x16x128xf32>
    %163 = arith.addf %161, %162 : vector<2x16x128xf32>
    %164 = vector.shape_cast %163 : vector<2x16x128xf32> to vector<32x128xf32>
    %c0_125 = arith.constant 0 : index
    %c0_126 = arith.constant 0 : index
    %165 = vector.load %arg4[%c0_125, %c0_126] : memref<128x128xf32, #tpu.memory_space<vmem>>, vector<128x128xf32>
    %cst_127 = arith.constant dense<0.000000e+00> : vector<32x128xf32>
    %166 = tpu.matmul %164, %165, %cst_127 {dimension_numbers = #tpu.dot_dimension_numbers<[1], [0], [0], [1], [0, 0, 1, 1], [], []>} : vector<32x128xf32>, vector<128x128xf32>, vector<32x128xf32> -> vector<32x128xf32>
    %167 = vector.broadcast %6 : vector<1x128xf32> to vector<32x128xf32>
    %168 = arith.addf %166, %167 : vector<32x128xf32>
    %cst_128 = arith.constant 0.000000e+00 : f32
    %169 = vector.broadcast %cst_128 : f32 to vector<32x128xf32>
    %170 = arith.maximumf %168, %169 : vector<32x128xf32>
    %cst_129 = arith.constant dense<0.000000e+00> : vector<32xf32>
    %171 = vector.multi_reduction <add>, %170, %cst_129 [1] : vector<32x128xf32> to vector<32xf32>
    %172 = vector.shape_cast %171 : vector<32xf32> to vector<32x1xf32>
    %cst_130 = arith.constant 1.250000e-01 : f32
    %173 = vector.broadcast %cst_130 : f32 to vector<32x1xf32>
    %174 = arith.mulf %172, %173 : vector<32x1xf32>
    %175 = vector.broadcast %174 : vector<32x1xf32> to vector<32x128xf32>
    %176 = arith.subf %170, %175 : vector<32x128xf32>
    %177 = vector.broadcast %4 : vector<1x128xf32> to vector<32x128xf32>
    %178 = arith.mulf %176, %177 : vector<32x128xf32>
    %179 = arith.mulf %178, %178 : vector<32x128xf32>
    %cst_131 = arith.constant dense<0.000000e+00> : vector<32xf32>
    %180 = vector.multi_reduction <add>, %179, %cst_131 [1] : vector<32x128xf32> to vector<32xf32>
    %181 = vector.shape_cast %180 : vector<32xf32> to vector<32x1xf32>
    %cst_132 = arith.constant 1.250000e-01 : f32
    %182 = vector.broadcast %cst_132 : f32 to vector<32x1xf32>
    %183 = arith.mulf %181, %182 : vector<32x1xf32>
    %cst_133 = arith.constant 9.99999974E-6 : f32
    %184 = vector.broadcast %cst_133 : f32 to vector<32x1xf32>
    %185 = arith.addf %183, %184 : vector<32x1xf32>
    %186 = math.rsqrt %185 : vector<32x1xf32>
    %187 = vector.broadcast %186 : vector<32x1xf32> to vector<32x128xf32>
    %188 = arith.mulf %178, %187 : vector<32x128xf32>
    %189 = vector.shape_cast %188 : vector<32x128xf32> to vector<2x16x128xf32>
    %c0_134 = arith.constant 0 : index
    %c8_135 = arith.constant 8 : index
    %c0_136 = arith.constant 0 : index
    %190 = vector.load %arg11[%c0_134, %c8_135, %c0_136] : memref<2x32x128xf32, #tpu.memory_space<vmem>>, vector<2x16x128xf32>
    tpu.vector_store %arg11[%c0_134, %c8_135, %c0_136], %189 {strides = array<i32>} : memref<2x32x128xf32, #tpu.memory_space<vmem>>, vector<2x16x128xf32>,
    %c0_137 = arith.constant 0 : index
    %c7_138 = arith.constant 7 : index
    %c0_139 = arith.constant 0 : index
    %191 = vector.load %arg11[%c0_137, %c7_138, %c0_139] : memref<2x32x128xf32, #tpu.memory_space<vmem>>, vector<2x16x128xf32>
    %c0_140 = arith.constant 0 : index
    %c9_141 = arith.constant 9 : index
    %c0_142 = arith.constant 0 : index
    %192 = vector.load %arg11[%c0_140, %c9_141, %c0_142] : memref<2x32x128xf32, #tpu.memory_space<vmem>>, vector<2x16x128xf32>
    %c8_i32_143 = arith.constant 8 : i32
    %193 = tpu.dynamic_rotate %189 by %c8_i32_143 dim 2 : vector<2x16x128xf32>, i32 -> vector<2x16x128xf32>
    %194 = arith.addf %191, %193 : vector<2x16x128xf32>
    %c16_i32_144 = arith.constant 16 : i32
    %195 = tpu.dynamic_rotate %192 by %c16_i32_144 dim 2 : vector<2x16x128xf32>, i32 -> vector<2x16x128xf32>
    %196 = arith.addf %194, %195 : vector<2x16x128xf32>
    %197 = vector.shape_cast %196 : vector<2x16x128xf32> to vector<32x128xf32>
    %c0_145 = arith.constant 0 : index
    %c0_146 = arith.constant 0 : index
    %198 = vector.load %arg6[%c0_145, %c0_146] : memref<128x128xf32, #tpu.memory_space<vmem>>, vector<128x128xf32>
    %cst_147 = arith.constant dense<0.000000e+00> : vector<32x128xf32>
    %199 = tpu.matmul %197, %198, %cst_147 {dimension_numbers = #tpu.dot_dimension_numbers<[1], [0], [0], [1], [0, 0, 1, 1], [], []>} : vector<32x128xf32>, vector<128x128xf32>, vector<32x128xf32> -> vector<32x128xf32>
    %200 = vector.broadcast %7 : vector<1x128xf32> to vector<32x128xf32>
    %201 = arith.addf %199, %200 : vector<32x128xf32>
    %202 = vector.shape_cast %201 : vector<32x128xf32> to vector<2x16x128xf32>
    %c0_148 = arith.constant 0 : index
    %c8_149 = arith.constant 8 : index
    %c0_150 = arith.constant 0 : index
    %203 = vector.load %arg11[%c0_148, %c8_149, %c0_150] : memref<2x32x128xf32, #tpu.memory_space<vmem>>, vector<2x16x128xf32>
    tpu.vector_store %arg11[%c0_148, %c8_149, %c0_150], %202 {strides = array<i32>} : memref<2x32x128xf32, #tpu.memory_space<vmem>>, vector<2x16x128xf32>,
    %c0_151 = arith.constant 0 : index
    %c6_152 = arith.constant 6 : index
    %c0_153 = arith.constant 0 : index
    %204 = vector.load %arg11[%c0_151, %c6_152, %c0_153] : memref<2x32x128xf32, #tpu.memory_space<vmem>>, vector<2x16x128xf32>
    %c0_154 = arith.constant 0 : index
    %c10_155 = arith.constant 10 : index
    %c0_156 = arith.constant 0 : index
    %205 = vector.load %arg11[%c0_154, %c10_155, %c0_156] : memref<2x32x128xf32, #tpu.memory_space<vmem>>, vector<2x16x128xf32>
    %c8_i32_157 = arith.constant 8 : i32
    %206 = tpu.dynamic_rotate %202 by %c8_i32_157 dim 2 : vector<2x16x128xf32>, i32 -> vector<2x16x128xf32>
    %207 = arith.addf %204, %206 : vector<2x16x128xf32>
    %c16_i32_158 = arith.constant 16 : i32
    %208 = tpu.dynamic_rotate %205 by %c16_i32_158 dim 2 : vector<2x16x128xf32>, i32 -> vector<2x16x128xf32>
    %209 = arith.addf %207, %208 : vector<2x16x128xf32>
    %210 = vector.shape_cast %209 : vector<2x16x128xf32> to vector<32x128xf32>
    %c0_159 = arith.constant 0 : index
    %c0_160 = arith.constant 0 : index
    %211 = vector.load %arg8[%c0_159, %c0_160] : memref<128x128xf32, #tpu.memory_space<vmem>>, vector<128x128xf32>
    %cst_161 = arith.constant dense<0.000000e+00> : vector<32x128xf32>
    %212 = tpu.matmul %210, %211, %cst_161 {dimension_numbers = #tpu.dot_dimension_numbers<[1], [0], [0], [1], [0, 0, 1, 1], [], []>} : vector<32x128xf32>, vector<128x128xf32>, vector<32x128xf32> -> vector<32x128xf32>
    %213 = vector.broadcast %8 : vector<1x128xf32> to vector<32x128xf32>
    %214 = arith.addf %212, %213 : vector<32x128xf32>
    %215 = vector.shape_cast %214 : vector<32x128xf32> to vector<2x16x128xf32>
    %c0_162 = arith.constant 0 : index
    %c8_163 = arith.constant 8 : index
    %c0_164 = arith.constant 0 : index
    %216 = vector.load %arg11[%c0_162, %c8_163, %c0_164] : memref<2x32x128xf32, #tpu.memory_space<vmem>>, vector<2x16x128xf32>
    tpu.vector_store %arg11[%c0_162, %c8_163, %c0_164], %215 {strides = array<i32>} : memref<2x32x128xf32, #tpu.memory_space<vmem>>, vector<2x16x128xf32>,
    %c0_165 = arith.constant 0 : index
    %c7_166 = arith.constant 7 : index
    %c0_167 = arith.constant 0 : index
    %217 = vector.load %arg11[%c0_165, %c7_166, %c0_167] : memref<2x32x128xf32, #tpu.memory_space<vmem>>, vector<2x16x128xf32>
    %c0_168 = arith.constant 0 : index
    %c9_169 = arith.constant 9 : index
    %c0_170 = arith.constant 0 : index
    %218 = vector.load %arg11[%c0_168, %c9_169, %c0_170] : memref<2x32x128xf32, #tpu.memory_space<vmem>>, vector<2x16x128xf32>
    %c8_i32_171 = arith.constant 8 : i32
    %219 = tpu.dynamic_rotate %215 by %c8_i32_171 dim 2 : vector<2x16x128xf32>, i32 -> vector<2x16x128xf32>
    %220 = arith.addf %217, %219 : vector<2x16x128xf32>
    %c16_i32_172 = arith.constant 16 : i32
    %221 = tpu.dynamic_rotate %218 by %c16_i32_172 dim 2 : vector<2x16x128xf32>, i32 -> vector<2x16x128xf32>
    %222 = arith.addf %220, %221 : vector<2x16x128xf32>
    %223 = vector.shape_cast %222 : vector<2x16x128xf32> to vector<32x128xf32>
    %c0_173 = arith.constant 0 : index
    %c0_174 = arith.constant 0 : index
    %224 = vector.load %arg4[%c0_173, %c0_174] : memref<128x128xf32, #tpu.memory_space<vmem>>, vector<128x128xf32>
    %cst_175 = arith.constant dense<0.000000e+00> : vector<32x128xf32>
    %225 = tpu.matmul %223, %224, %cst_175 {dimension_numbers = #tpu.dot_dimension_numbers<[1], [0], [0], [1], [0, 0, 1, 1], [], []>} : vector<32x128xf32>, vector<128x128xf32>, vector<32x128xf32> -> vector<32x128xf32>
    %226 = vector.broadcast %6 : vector<1x128xf32> to vector<32x128xf32>
    %227 = arith.addf %225, %226 : vector<32x128xf32>
    %cst_176 = arith.constant 0.000000e+00 : f32
    %228 = vector.broadcast %cst_176 : f32 to vector<32x128xf32>
    %229 = arith.maximumf %227, %228 : vector<32x128xf32>
    %cst_177 = arith.constant dense<0.000000e+00> : vector<32xf32>
    %230 = vector.multi_reduction <add>, %229, %cst_177 [1] : vector<32x128xf32> to vector<32xf32>
    %231 = vector.shape_cast %230 : vector<32xf32> to vector<32x1xf32>
    %cst_178 = arith.constant 1.250000e-01 : f32
    %232 = vector.broadcast %cst_178 : f32 to vector<32x1xf32>
    %233 = arith.mulf %231, %232 : vector<32x1xf32>
    %234 = vector.broadcast %233 : vector<32x1xf32> to vector<32x128xf32>
    %235 = arith.subf %229, %234 : vector<32x128xf32>
    %236 = vector.broadcast %4 : vector<1x128xf32> to vector<32x128xf32>
    %237 = arith.mulf %235, %236 : vector<32x128xf32>
    %238 = arith.mulf %237, %237 : vector<32x128xf32>
    %cst_179 = arith.constant dense<0.000000e+00> : vector<32xf32>
    %239 = vector.multi_reduction <add>, %238, %cst_179 [1] : vector<32x128xf32> to vector<32xf32>
    %240 = vector.shape_cast %239 : vector<32xf32> to vector<32x1xf32>
    %cst_180 = arith.constant 1.250000e-01 : f32
    %241 = vector.broadcast %cst_180 : f32 to vector<32x1xf32>
    %242 = arith.mulf %240, %241 : vector<32x1xf32>
    %cst_181 = arith.constant 9.99999974E-6 : f32
    %243 = vector.broadcast %cst_181 : f32 to vector<32x1xf32>
    %244 = arith.addf %242, %243 : vector<32x1xf32>
    %245 = math.rsqrt %244 : vector<32x1xf32>
    %246 = vector.broadcast %245 : vector<32x1xf32> to vector<32x128xf32>
    %247 = arith.mulf %237, %246 : vector<32x128xf32>
    %248 = vector.shape_cast %247 : vector<32x128xf32> to vector<2x16x128xf32>
    %c0_182 = arith.constant 0 : index
    %c8_183 = arith.constant 8 : index
    %c0_184 = arith.constant 0 : index
    %249 = vector.load %arg11[%c0_182, %c8_183, %c0_184] : memref<2x32x128xf32, #tpu.memory_space<vmem>>, vector<2x16x128xf32>
    tpu.vector_store %arg11[%c0_182, %c8_183, %c0_184], %248 {strides = array<i32>} : memref<2x32x128xf32, #tpu.memory_space<vmem>>, vector<2x16x128xf32>,
    %c0_185 = arith.constant 0 : index
    %c7_186 = arith.constant 7 : index
    %c0_187 = arith.constant 0 : index
    %250 = vector.load %arg11[%c0_185, %c7_186, %c0_187] : memref<2x32x128xf32, #tpu.memory_space<vmem>>, vector<2x16x128xf32>
    %c0_188 = arith.constant 0 : index
    %c9_189 = arith.constant 9 : index
    %c0_190 = arith.constant 0 : index
    %251 = vector.load %arg11[%c0_188, %c9_189, %c0_190] : memref<2x32x128xf32, #tpu.memory_space<vmem>>, vector<2x16x128xf32>
    %c8_i32_191 = arith.constant 8 : i32
    %252 = tpu.dynamic_rotate %248 by %c8_i32_191 dim 2 : vector<2x16x128xf32>, i32 -> vector<2x16x128xf32>
    %253 = arith.addf %250, %252 : vector<2x16x128xf32>
    %c16_i32_192 = arith.constant 16 : i32
    %254 = tpu.dynamic_rotate %251 by %c16_i32_192 dim 2 : vector<2x16x128xf32>, i32 -> vector<2x16x128xf32>
    %255 = arith.addf %253, %254 : vector<2x16x128xf32>
    %256 = vector.shape_cast %255 : vector<2x16x128xf32> to vector<32x128xf32>
    %c0_193 = arith.constant 0 : index
    %c0_194 = arith.constant 0 : index
    %257 = vector.load %arg6[%c0_193, %c0_194] : memref<128x128xf32, #tpu.memory_space<vmem>>, vector<128x128xf32>
    %cst_195 = arith.constant dense<0.000000e+00> : vector<32x128xf32>
    %258 = tpu.matmul %256, %257, %cst_195 {dimension_numbers = #tpu.dot_dimension_numbers<[1], [0], [0], [1], [0, 0, 1, 1], [], []>} : vector<32x128xf32>, vector<128x128xf32>, vector<32x128xf32> -> vector<32x128xf32>
    %259 = vector.broadcast %7 : vector<1x128xf32> to vector<32x128xf32>
    %260 = arith.addf %258, %259 : vector<32x128xf32>
    %261 = vector.shape_cast %260 : vector<32x128xf32> to vector<2x16x128xf32>
    %c0_196 = arith.constant 0 : index
    %c8_197 = arith.constant 8 : index
    %c0_198 = arith.constant 0 : index
    %262 = vector.load %arg11[%c0_196, %c8_197, %c0_198] : memref<2x32x128xf32, #tpu.memory_space<vmem>>, vector<2x16x128xf32>
    tpu.vector_store %arg11[%c0_196, %c8_197, %c0_198], %261 {strides = array<i32>} : memref<2x32x128xf32, #tpu.memory_space<vmem>>, vector<2x16x128xf32>,
    %c0_199 = arith.constant 0 : index
    %c6_200 = arith.constant 6 : index
    %c0_201 = arith.constant 0 : index
    %263 = vector.load %arg11[%c0_199, %c6_200, %c0_201] : memref<2x32x128xf32, #tpu.memory_space<vmem>>, vector<2x16x128xf32>
    %c0_202 = arith.constant 0 : index
    %c10_203 = arith.constant 10 : index
    %c0_204 = arith.constant 0 : index
    %264 = vector.load %arg11[%c0_202, %c10_203, %c0_204] : memref<2x32x128xf32, #tpu.memory_space<vmem>>, vector<2x16x128xf32>
    %c8_i32_205 = arith.constant 8 : i32
    %265 = tpu.dynamic_rotate %261 by %c8_i32_205 dim 2 : vector<2x16x128xf32>, i32 -> vector<2x16x128xf32>
    %266 = arith.addf %263, %265 : vector<2x16x128xf32>
    %c16_i32_206 = arith.constant 16 : i32
    %267 = tpu.dynamic_rotate %264 by %c16_i32_206 dim 2 : vector<2x16x128xf32>, i32 -> vector<2x16x128xf32>
    %268 = arith.addf %266, %267 : vector<2x16x128xf32>
    %269 = vector.shape_cast %268 : vector<2x16x128xf32> to vector<32x128xf32>
    %c0_207 = arith.constant 0 : index
    %c0_208 = arith.constant 0 : index
    %270 = vector.load %arg8[%c0_207, %c0_208] : memref<128x128xf32, #tpu.memory_space<vmem>>, vector<128x128xf32>
    %cst_209 = arith.constant dense<0.000000e+00> : vector<32x128xf32>
    %271 = tpu.matmul %269, %270, %cst_209 {dimension_numbers = #tpu.dot_dimension_numbers<[1], [0], [0], [1], [0, 0, 1, 1], [], []>} : vector<32x128xf32>, vector<128x128xf32>, vector<32x128xf32> -> vector<32x128xf32>
    %272 = vector.broadcast %8 : vector<1x128xf32> to vector<32x128xf32>
    %273 = arith.addf %271, %272 : vector<32x128xf32>
    %274 = vector.shape_cast %273 : vector<32x128xf32> to vector<2x16x128xf32>
    %c0_210 = arith.constant 0 : index
    %c0_211 = arith.constant 0 : index
    %c0_212 = arith.constant 0 : index
    %275 = vector.load %arg10[%c0_210, %c0_211, %c0_212] : memref<2x16x128xf32, #tpu.memory_space<vmem>>, vector<2x16x128xf32>
    tpu.vector_store %arg10[%c0_210, %c0_211, %c0_212], %274 {strides = array<i32>} : memref<2x16x128xf32, #tpu.memory_space<vmem>>, vector<2x16x128xf32>,
    return
  }
  func.func @transform_0(%arg0: i32) -> (i32, i32, i32) {
    %c0_i32 = arith.constant 0 : i32
    %c0_i32_0 = arith.constant 0 : i32
    %c0_i32_1 = arith.constant 0 : i32
    return %arg0, %c0_i32, %c0_i32_0 : i32, i32, i32
  }
  func.func @transform_1(%arg0: i32) -> (i32, i32) {
    %c0_i32 = arith.constant 0 : i32
    %c0_i32_0 = arith.constant 0 : i32
    %c0_i32_1 = arith.constant 0 : i32
    return %c0_i32, %c0_i32_0 : i32, i32
  }
  func.func @transform_2(%arg0: i32) -> (i32, i32) {
    %c0_i32 = arith.constant 0 : i32
    %c0_i32_0 = arith.constant 0 : i32
    %c0_i32_1 = arith.constant 0 : i32
    return %c0_i32, %c0_i32_0 : i32, i32
  }
  func.func @transform_3(%arg0: i32) -> (i32, i32) {
    %c0_i32 = arith.constant 0 : i32
    %c0_i32_0 = arith.constant 0 : i32
    %c0_i32_1 = arith.constant 0 : i32
    return %c0_i32, %c0_i32_0 : i32, i32
  }
  func.func @transform_4(%arg0: i32) -> (i32, i32) {
    %c0_i32 = arith.constant 0 : i32
    %c0_i32_0 = arith.constant 0 : i32
    %c0_i32_1 = arith.constant 0 : i32
    return %c0_i32, %c0_i32_0 : i32, i32
  }
  func.func @transform_5(%arg0: i32) -> (i32, i32) {
    %c0_i32 = arith.constant 0 : i32
    %c0_i32_0 = arith.constant 0 : i32
    %c0_i32_1 = arith.constant 0 : i32
    return %c0_i32, %c0_i32_0 : i32, i32
  }
  func.func @transform_6(%arg0: i32) -> (i32, i32) {
    %c0_i32 = arith.constant 0 : i32
    %c0_i32_0 = arith.constant 0 : i32
    %c0_i32_1 = arith.constant 0 : i32
    return %c0_i32, %c0_i32_0 : i32, i32
  }
  func.func @transform_7(%arg0: i32) -> (i32, i32) {
    %c0_i32 = arith.constant 0 : i32
    %c0_i32_0 = arith.constant 0 : i32
    %c0_i32_1 = arith.constant 0 : i32
    return %c0_i32, %c0_i32_0 : i32, i32
  }
  func.func @transform_8(%arg0: i32) -> (i32, i32) {
    %c0_i32 = arith.constant 0 : i32
    %c0_i32_0 = arith.constant 0 : i32
    %c0_i32_1 = arith.constant 0 : i32
    return %c0_i32, %c0_i32_0 : i32, i32
  }
  func.func @transform_9(%arg0: i32) -> (i32, i32, i32) {
    %c0_i32 = arith.constant 0 : i32
    %c0_i32_0 = arith.constant 0 : i32
    %c0_i32_1 = arith.constant 0 : i32
    return %arg0, %c0_i32, %c0_i32_0 : i32, i32, i32
  }
}

</mosaic_0001>

<llo_original>
// kernel: tpu_custom_call.1
$region0: #{tpu_custom_call.1}
  #allocation0 [shape = 'u32[]', space=smem, size = 0x4, offset = 0x4, fixed_abs, tag = 'smem constant byte address 0x4 - core index']
  #allocation1 [shape = 'u32[144,128]{1,0:T(1,128)}', space=vmem, size = 0x12000, scoped, tag = 'internal scratch']
  #allocation2 [shape = 'f32[2,32,128]{2,1,0:T(8,128)}', space=vmem, size = 0x8000, scoped, tag = 'scratch operand']
  %s0 = inlined_call_operand.hbm [shape: f32[2,16,128], index: 0, kind: input, shape index: {}]
  %s1 = inlined_call_operand.hbm [shape: f32[128,128], index: 1, kind: input, shape index: {}]
  %s2 = inlined_call_operand.vmem [shape: f32[1,128], index: 2, kind: input, shape index: {}]
  %s3 = inlined_call_operand.hbm [shape: f32[128,128], index: 3, kind: input, shape index: {}]
  %s4 = inlined_call_operand.vmem [shape: f32[1,128], index: 4, kind: input, shape index: {}]
  %s5 = inlined_call_operand.hbm [shape: f32[128,128], index: 5, kind: input, shape index: {}]
  %s6 = inlined_call_operand.vmem [shape: f32[1,128], index: 6, kind: input, shape index: {}]
  %s7 = inlined_call_operand.hbm [shape: f32[128,128], index: 7, kind: input, shape index: {}]
  %s8 = inlined_call_operand.vmem [shape: f32[1,128], index: 8, kind: input, shape index: {}]
  %s9 = inlined_call_operand.hbm [shape: f32[2,16,128], index: 9, kind: output, shape index: {}]
  %s10 = sld [smem:[#allocation0]]
  $region66: #{tpu_custom_call.1} parent=0
    _
  %s12 = ssub.s32 1, %s10
  %s13 = scalar_select 0, %s12, %s10
  $region1: #{tpu_custom_call.1} parent=0
    #allocation3 [shape = 'u8[16384]{0}', space=vmem, size = 0x4000, scoped, tag = 'input window, operand 0, single buffered']
    #allocation4 [shape = 's32[1]{0}', space=sflag, size = 0x4, scoped, tag = 'scoped memory for tpu_custom_call.1']
    #allocation5 [shape = 's32[1]{0}', space=sflag, size = 0x4, scoped, tag = 'scoped memory for tpu_custom_call.1']
    #allocation6 [shape = 'u8[65536]{0}', space=vmem, size = 0x10000, scoped, tag = 'input window, operand 1, single buffered']
    #allocation7 [shape = 's32[1]{0}', space=sflag, size = 0x4, scoped, tag = 'scoped memory for tpu_custom_call.1']
    #allocation8 [shape = 'u8[65536]{0}', space=vmem, size = 0x10000, scoped, tag = 'input window, operand 3, single buffered']
    #allocation9 [shape = 'u8[65536]{0}', space=vmem, size = 0x10000, scoped, tag = 'input window, operand 5, single buffered']
    #allocation10 [shape = 's32[1]{0}', space=sflag, size = 0x4, scoped, tag = 'scoped memory for tpu_custom_call.1']
    #allocation11 [shape = 'u8[65536]{0}', space=vmem, size = 0x10000, scoped, tag = 'input window, operand 7, single buffered']
    #allocation12 [shape = 'u8[16384]{0}', space=vmem, size = 0x4000, scoped, tag = 'output window, operand 0, single buffered']
    %14 = vsyncpa [#allocation4], 0
    %15 = vsyncpa [#allocation7], 0
    %16 = vsyncpa [#allocation10], 0
    %17 = vsyncpa [#allocation5], 0
    // Predicated region
    $region2: #{tpu_custom_call.1} parent=1 // pred_check
      _
    $region3: #{tpu_custom_call.1} parent=1 // pred_check_branch
      %19 = sbr.rel (0) target = $region5
    $region4: #{tpu_custom_call.1} parent=1 // pred_region
      %s21 = ssub.s32 512, 512
      %22 = vsyncadd [#allocation4], %s21
      %s23 = sshll.u32 [#allocation3], 4
      %s24 = int_to_ptr.vmem [resolvable:$true] %s23
      %29 = dma.hbm_to_vmem [thread:$0]  %s0, 512, %s24, [#allocation4], 128, 128, 8
    $region5: #{tpu_custom_call.1} parent=1 // pred_fallthru
      _
    // Predicated region
    $region6: #{tpu_custom_call.1} parent=1 // pred_check
      _
    $region7: #{tpu_custom_call.1} parent=1 // pred_check_branch
      %31 = sbr.rel (0) target = $region9
    $region8: #{tpu_custom_call.1} parent=1 // pred_region
      %s33 = ssub.s32 2048, 2048
      %34 = vsyncadd [#allocation7], %s33
      %s35 = sshll.u32 [#allocation6], 4
      %s36 = int_to_ptr.vmem [resolvable:$true] %s35
      %41 = dma.hbm_to_vmem [thread:$0]  %s1, 2048, %s36, [#allocation7], 128, 128, 8
    $region9: #{tpu_custom_call.1} parent=1 // pred_fallthru
      _
    // Predicated region
    $region10: #{tpu_custom_call.1} parent=1 // pred_check
      _
    $region11: #{tpu_custom_call.1} parent=1 // pred_check_branch
      %43 = sbr.rel (0) target = $region13
    $region12: #{tpu_custom_call.1} parent=1 // pred_region
      _
    $region13: #{tpu_custom_call.1} parent=1 // pred_fallthru
      _
    // Predicated region
    $region14: #{tpu_custom_call.1} parent=1 // pred_check
      _
    $region15: #{tpu_custom_call.1} parent=1 // pred_check_branch
      %45 = sbr.rel (0) target = $region17
    $region16: #{tpu_custom_call.1} parent=1 // pred_region
      %s47 = ssub.s32 2048, 2048
      %48 = vsyncadd [#allocation7], %s47
      %s49 = sshll.u32 [#allocation8], 4
      %s50 = int_to_ptr.vmem [resolvable:$true] %s49
      %55 = dma.hbm_to_vmem [thread:$0]  %s3, 2048, %s50, [#allocation7], 128, 128, 8
    $region17: #{tpu_custom_call.1} parent=1 // pred_fallthru
      _
    // Predicated region
    $region18: #{tpu_custom_call.1} parent=1 // pred_check
      _
    $region19: #{tpu_custom_call.1} parent=1 // pred_check_branch
      %57 = sbr.rel (0) target = $region21
    $region20: #{tpu_custom_call.1} parent=1 // pred_region
      _
    $region21: #{tpu_custom_call.1} parent=1 // pred_fallthru
      _
    // Predicated region
    $region22: #{tpu_custom_call.1} parent=1 // pred_check
      _
    $region23: #{tpu_custom_call.1} parent=1 // pred_check_branch
      %59 = sbr.rel (0) target = $region25
    $region24: #{tpu_custom_call.1} parent=1 // pred_region
      %s61 = ssub.s32 2048, 2048
      %62 = vsyncadd [#allocation10], %s61
      %s63 = sshll.u32 [#allocation9], 4
      %s64 = int_to_ptr.vmem [resolvable:$true] %s63
      %69 = dma.hbm_to_vmem [thread:$0]  %s5, 2048, %s64, [#allocation10], 128, 128, 8
    $region25: #{tpu_custom_call.1} parent=1 // pred_fallthru
      _
    // Predicated region
    $region26: #{tpu_custom_call.1} parent=1 // pred_check
      _
    $region27: #{tpu_custom_call.1} parent=1 // pred_check_branch
      %71 = sbr.rel (0) target = $region29
    $region28: #{tpu_custom_call.1} parent=1 // pred_region
      _
    $region29: #{tpu_custom_call.1} parent=1 // pred_fallthru
      _
    // Predicated region
    $region30: #{tpu_custom_call.1} parent=1 // pred_check
      _
    $region31: #{tpu_custom_call.1} parent=1 // pred_check_branch
      %73 = sbr.rel (0) target = $region33
    $region32: #{tpu_custom_call.1} parent=1 // pred_region
      %s75 = ssub.s32 2048, 2048
      %76 = vsyncadd [#allocation10], %s75
      %s77 = sshll.u32 [#allocation11], 4
      %s78 = int_to_ptr.vmem [resolvable:$true] %s77
      %83 = dma.hbm_to_vmem [thread:$0]  %s7, 2048, %s78, [#allocation10], 128, 128, 8
    $region33: #{tpu_custom_call.1} parent=1 // pred_fallthru
      _
    // Predicated region
    $region34: #{tpu_custom_call.1} parent=1 // pred_check
      _
    $region35: #{tpu_custom_call.1} parent=1 // pred_check_branch
      %85 = sbr.rel (0) target = $region37
    $region36: #{tpu_custom_call.1} parent=1 // pred_region
      _
    $region37: #{tpu_custom_call.1} parent=1 // pred_fallthru
      _
    // Predicated region
    $region38: #{tpu_custom_call.1} parent=1 // pred_check
      _
    $region39: #{tpu_custom_call.1} parent=1 // pred_check_branch
      %87 = sbr.rel (0) target = $region41
    $region40: #{tpu_custom_call.1} parent=1 // pred_region
      %88 = dma.done [#allocation4], 512
    $region41: #{tpu_custom_call.1} parent=1 // pred_fallthru
      _
    // Predicated region
    $region42: #{tpu_custom_call.1} parent=1 // pred_check
      _
    $region43: #{tpu_custom_call.1} parent=1 // pred_check_branch
      %90 = sbr.rel (0) target = $region45
    $region44: #{tpu_custom_call.1} parent=1 // pred_region
      %91 = dma.done [#allocation7], 2048
    $region45: #{tpu_custom_call.1} parent=1 // pred_fallthru
      _
    // Predicated region
    $region46: #{tpu_custom_call.1} parent=1 // pred_check
      _
    $region47: #{tpu_custom_call.1} parent=1 // pred_check_branch
      %93 = sbr.rel (0) target = $region49
    $region48: #{tpu_custom_call.1} parent=1 // pred_region
      %94 = dma.done [#allocation7], 2048
    $region49: #{tpu_custom_call.1} parent=1 // pred_fallthru
      _
    // Predicated region
    $region50: #{tpu_custom_call.1} parent=1 // pred_check
      _
    $region51: #{tpu_custom_call.1} parent=1 // pred_check_branch
      %96 = sbr.rel (0) target = $region53
    $region52: #{tpu_custom_call.1} parent=1 // pred_region
      %97 = dma.done [#allocation10], 2048
    $region53: #{tpu_custom_call.1} parent=1 // pred_fallthru
      _
    // Predicated region
    $region54: #{tpu_custom_call.1} parent=1 // pred_check
      _
    $region55: #{tpu_custom_call.1} parent=1 // pred_check_branch
      %99 = sbr.rel (0) target = $region57
    $region56: #{tpu_custom_call.1} parent=1 // pred_region
      %100 = dma.done [#allocation10], 2048
    $region57: #{tpu_custom_call.1} parent=1 // pred_fallthru
      _
    %v101 = vlaneseq
    %v102 = vand.u32 %v101, 127
    %vm103 = vcmp.lt.s32.totalorder %v102, 8
    %v104 = vsel %vm103, 1, 0
    %v105 = vcvt.s32.f32 %v104
    %v106 = vld [vmem:[%s2] sm:$0x1]
    %v107 = vld [vmem:[%s4] sm:$0x1]
    %v108 = vld [vmem:[%s6] sm:$0x1]
    %v109 = vld [vmem:[%s8] sm:$0x1]
    %110 = vst [vmem:[#allocation2] sm:$0xff] 0.0
    %111 = vst [vmem:[#allocation2 + $0x20] sm:$0xff] 0.0
    %112 = vst [vmem:[#allocation2 + $0x18] sm:$0xff] 0.0
    %113 = vst [vmem:[#allocation2 + $0x38] sm:$0xff] 0.0
    %v114 = vld [vmem:[#allocation3] sm:$0xff]
    %v115 = vld [vmem:[#allocation3 + $0x8] sm:$0xff]
    %v116 = vld [vmem:[#allocation3 + $0x10] sm:$0xff]
    %v117 = vld [vmem:[#allocation3 + $0x18] sm:$0xff]
    %v118 = vld [vmem:[#allocation6] sm:$0xff]
    %v119 = vld [vmem:[#allocation6 + $0x8] sm:$0xff]
    %v120 = vld [vmem:[#allocation6 + $0x10] sm:$0xff]
    %v121 = vld [vmem:[#allocation6 + $0x18] sm:$0xff]
    %v122 = vld [vmem:[#allocation6 + $0x20] sm:$0xff]
    %v123 = vld [vmem:[#allocation6 + $0x28] sm:$0xff]
    %v124 = vld [vmem:[#allocation6 + $0x30] sm:$0xff]
    %v125 = vld [vmem:[#allocation6 + $0x38] sm:$0xff]
    %v126 = vld [vmem:[#allocation6 + $0x40] sm:$0xff]
    %v127 = vld [vmem:[#allocation6 + $0x48] sm:$0xff]
    %v128 = vld [vmem:[#allocation6 + $0x50] sm:$0xff]
    %v129 = vld [vmem:[#allocation6 + $0x58] sm:$0xff]
    %v130 = vld [vmem:[#allocation6 + $0x60] sm:$0xff]
    %v131 = vld [vmem:[#allocation6 + $0x68] sm:$0xff]
    %v132 = vld [vmem:[#allocation6 + $0x70] sm:$0xff]
    %v133 = vld [vmem:[#allocation6 + $0x78] sm:$0xff]
    %v135 = vlaneseq
    %v136 = vshrl.u32 %v135, 7
    %v137 = vsub.s32 0, %v136
    %v138 = vrot.slane %v106, %v137
    %140 = vmatprep.subr.mxu0 0.0
    %141 = vmatpush1.msra.mxu0 %v133
    %142 = vmatprep.subr.mxu0 0.0
    %143 = vmatpush1.msra.mxu0 %v132
    %144 = vmatprep.subr.mxu0 0.0
    %145 = vmatpush1.msra.mxu0 %v131
    %146 = vmatprep.subr.mxu0 0.0
    %147 = vmatpush1.msra.mxu0 %v130
    %148 = vmatprep.subr.mxu0 0.0
    %149 = vmatpush1.msra.mxu0 %v129
    %150 = vmatprep.subr.mxu0 0.0
    %151 = vmatpush1.msra.mxu0 %v128
    %152 = vmatprep.subr.mxu0 0.0
    %153 = vmatpush1.msra.mxu0 %v127
    %154 = vmatprep.subr.mxu0 0.0
    %155 = vmatpush1.msra.mxu0 %v126
    %156 = vmatprep.subr.mxu0 0.0
    %157 = vmatpush1.msra.mxu0 %v125
    %158 = vmatprep.subr.mxu0 0.0
    %159 = vmatpush1.msra.mxu0 %v124
    %160 = vmatprep.subr.mxu0 0.0
    %161 = vmatpush1.msra.mxu0 %v123
    %162 = vmatprep.subr.mxu0 0.0
    %163 = vmatpush1.msra.mxu0 %v122
    %164 = vmatprep.subr.mxu0 0.0
    %165 = vmatpush1.msra.mxu0 %v121
    %166 = vmatprep.subr.mxu0 0.0
    %167 = vmatpush1.msra.mxu0 %v120
    %168 = vmatprep.subr.mxu0 0.0
    %169 = vmatpush1.msra.mxu0 %v119
    %170 = vmatprep.subr.mxu0 0.0
    %171 = vmatpush1.msra.mxu0 %v118
    %172 = vmatprep.subr.mxu0 0.0
    %173 = vmatpush2.msra.mxu0 0.0
    %174 = vmatprep.subr.mxu0 0.0
    %175 = vmatpush2.msra.mxu0 0.0
    %176 = vmatprep.subr.mxu0 0.0
    %177 = vmatpush2.msra.mxu0 0.0
    %178 = vmatprep.subr.mxu0 0.0
    %179 = vmatpush2.msra.mxu0 0.0
    %180 = vmatprep.subr.mxu0 0.0
    %181 = vmatpush2.msra.mxu0 0.0
    %182 = vmatprep.subr.mxu0 0.0
    %183 = vmatpush2.msra.mxu0 0.0
    %184 = vmatprep.subr.mxu0 0.0
    %185 = vmatpush2.msra.mxu0 0.0
    %186 = vmatprep.subr.mxu0 0.0
    %187 = vmatpush2.msra.mxu0 0.0
    %188 = vmatprep.subr.mxu0 0.0
    %189 = vmatpush2.msra.mxu0 0.0
    %190 = vmatprep.subr.mxu0 0.0
    %191 = vmatpush2.msra.mxu0 0.0
    %192 = vmatprep.subr.mxu0 0.0
    %193 = vmatpush2.msra.mxu0 0.0
    %194 = vmatprep.subr.mxu0 0.0
    %195 = vmatpush2.msra.mxu0 0.0
    %196 = vmatprep.subr.mxu0 0.0
    %197 = vmatpush2.msra.mxu0 0.0
    %198 = vmatprep.subr.mxu0 0.0
    %199 = vmatpush2.msra.mxu0 0.0
    %200 = vmatprep.subr.mxu0 0.0
    %201 = vmatpush2.msra.mxu0 0.0
    %202 = vmatprep.subr.mxu0 0.0
    %203 = vmatpush2.msra.mxu0 0.0
    %204 = vmatprep.mubr.f32.mxu0 0.0
    %205 = vmatmul.mubr.f32.gmra.mxu0 %v114
    %v206 = vpop.f32.mrf.mxu0
    %v207 = vadd.f32 %v138, %v206
    %v208 = vpop.f32.mrf.mxu0
    %209 = vmatprep.mubr.f32.mxu0 0.0
    %210 = vmatmul.mubr.f32.gmra.mxu0 %v115
    %v211 = vpop.f32.mrf.mxu0
    %v212 = vadd.f32 %v138, %v211
    %v213 = vpop.f32.mrf.mxu0
    %214 = vmatprep.mubr.f32.mxu0 0.0
    %215 = vmatmul.mubr.f32.gmra.mxu0 %v116
    %v216 = vpop.f32.mrf.mxu0
    %v217 = vadd.f32 %v138, %v216
    %v218 = vpop.f32.mrf.mxu0
    %219 = vmatprep.mubr.f32.mxu0 0.0
    %220 = vmatmul.mubr.f32.gmra.mxu0 %v117
    %v221 = vpop.f32.mrf.mxu0
    %v222 = vadd.f32 %v138, %v221
    %v223 = vpop.f32.mrf.mxu0
    %224 = vdwg.mxu0
    %225 = vst [vmem:[#allocation2 + $0x8] sm:$0xff] %v207
    %226 = vst [vmem:[#allocation2 + $0x10] sm:$0xff] %v212
    %227 = vst [vmem:[#allocation2 + $0x28] sm:$0xff] %v217
    %228 = vst [vmem:[#allocation2 + $0x30] sm:$0xff] %v222
    %v229 = vld [vmem:[#allocation2 + $0x7] sm:$0xff]
    %v230 = vld [vmem:[#allocation2 + $0xf] sm:$0xff]
    %v231 = vld [vmem:[#allocation2 + $0x27] sm:$0xff]
    %v232 = vld [vmem:[#allocation2 + $0x2f] sm:$0xff]
    %v233 = vld [vmem:[#allocation2 + $0x9] sm:$0xff]
    %v234 = vld [vmem:[#allocation2 + $0x11] sm:$0xff]
    %v235 = vld [vmem:[#allocation2 + $0x29] sm:$0xff]
    %v236 = vld [vmem:[#allocation2 + $0x31] sm:$0xff]
    %237 = vrot.lane.b32.xlu0 %v207, 8
    %v238 = vpop.permute.xlu0 %237
    %239 = vrot.lane.b32.xlu0 %v212, 8
    %v240 = vpop.permute.xlu0 %239
    %241 = vrot.lane.b32.xlu0 %v217, 8
    %v242 = vpop.permute.xlu0 %241
    %243 = vrot.lane.b32.xlu0 %v222, 8
    %v244 = vpop.permute.xlu0 %243
    %v245 = vadd.f32 %v229, %v238
    %v246 = vadd.f32 %v230, %v240
    %v247 = vadd.f32 %v231, %v242
    %v248 = vadd.f32 %v232, %v244
    %249 = vrot.lane.b32.xlu0 %v233, 16
    %v250 = vpop.permute.xlu0 %249
    %251 = vrot.lane.b32.xlu0 %v234, 16
    %v252 = vpop.permute.xlu0 %251
    %253 = vrot.lane.b32.xlu0 %v235, 16
    %v254 = vpop.permute.xlu0 %253
    %255 = vrot.lane.b32.xlu0 %v236, 16
    %v256 = vpop.permute.xlu0 %255
    %v257 = vadd.f32 %v245, %v250
    %v258 = vadd.f32 %v246, %v252
    %v259 = vadd.f32 %v247, %v254
    %v260 = vadd.f32 %v248, %v256
    %v261 = vld [vmem:[#allocation8] sm:$0xff]
    %v262 = vld [vmem:[#allocation8 + $0x8] sm:$0xff]
    %v263 = vld [vmem:[#allocation8 + $0x10] sm:$0xff]
    %v264 = vld [vmem:[#allocation8 + $0x18] sm:$0xff]
    %v265 = vld [vmem:[#allocation8 + $0x20] sm:$0xff]
    %v266 = vld [vmem:[#allocation8 + $0x28] sm:$0xff]
    %v267 = vld [vmem:[#allocation8 + $0x30] sm:$0xff]
    %v268 = vld [vmem:[#allocation8 + $0x38] sm:$0xff]
    %v269 = vld [vmem:[#allocation8 + $0x40] sm:$0xff]
    %v270 = vld [vmem:[#allocation8 + $0x48] sm:$0xff]
    %v271 = vld [vmem:[#allocation8 + $0x50] sm:$0xff]
    %v272 = vld [vmem:[#allocation8 + $0x58] sm:$0xff]
    %v273 = vld [vmem:[#allocation8 + $0x60] sm:$0xff]
    %v274 = vld [vmem:[#allocation8 + $0x68] sm:$0xff]
    %v275 = vld [vmem:[#allocation8 + $0x70] sm:$0xff]
    %v276 = vld [vmem:[#allocation8 + $0x78] sm:$0xff]
    %v278 = vlaneseq
    %v279 = vshrl.u32 %v278, 7
    %v280 = vsub.s32 0, %v279
    %v281 = vrot.slane %v107, %v280
    %283 = vmatprep.subr.mxu0 0.0
    %284 = vmatpush1.msra.mxu0 %v276
    %285 = vmatprep.subr.mxu0 0.0
    %286 = vmatpush1.msra.mxu0 %v275
    %287 = vmatprep.subr.mxu0 0.0
    %288 = vmatpush1.msra.mxu0 %v274
    %289 = vmatprep.subr.mxu0 0.0
    %290 = vmatpush1.msra.mxu0 %v273
    %291 = vmatprep.subr.mxu0 0.0
    %292 = vmatpush1.msra.mxu0 %v272
    %293 = vmatprep.subr.mxu0 0.0
    %294 = vmatpush1.msra.mxu0 %v271
    %295 = vmatprep.subr.mxu0 0.0
    %296 = vmatpush1.msra.mxu0 %v270
    %297 = vmatprep.subr.mxu0 0.0
    %298 = vmatpush1.msra.mxu0 %v269
    %299 = vmatprep.subr.mxu0 0.0
    %300 = vmatpush1.msra.mxu0 %v268
    %301 = vmatprep.subr.mxu0 0.0
    %302 = vmatpush1.msra.mxu0 %v267
    %303 = vmatprep.subr.mxu0 0.0
    %304 = vmatpush1.msra.mxu0 %v266
    %305 = vmatprep.subr.mxu0 0.0
    %306 = vmatpush1.msra.mxu0 %v265
    %307 = vmatprep.subr.mxu0 0.0
    %308 = vmatpush1.msra.mxu0 %v264
    %309 = vmatprep.subr.mxu0 0.0
    %310 = vmatpush1.msra.mxu0 %v263
    %311 = vmatprep.subr.mxu0 0.0
    %312 = vmatpush1.msra.mxu0 %v262
    %313 = vmatprep.subr.mxu0 0.0
    %314 = vmatpush1.msra.mxu0 %v261
    %315 = vmatprep.subr.mxu0 0.0
    %316 = vmatpush2.msra.mxu0 0.0
    %317 = vmatprep.subr.mxu0 0.0
    %318 = vmatpush2.msra.mxu0 0.0
    %319 = vmatprep.subr.mxu0 0.0
    %320 = vmatpush2.msra.mxu0 0.0
    %321 = vmatprep.subr.mxu0 0.0
    %322 = vmatpush2.msra.mxu0 0.0
    %323 = vmatprep.subr.mxu0 0.0
    %324 = vmatpush2.msra.mxu0 0.0
    %325 = vmatprep.subr.mxu0 0.0
    %326 = vmatpush2.msra.mxu0 0.0
    %327 = vmatprep.subr.mxu0 0.0
    %328 = vmatpush2.msra.mxu0 0.0
    %329 = vmatprep.subr.mxu0 0.0
    %330 = vmatpush2.msra.mxu0 0.0
    %331 = vmatprep.subr.mxu0 0.0
    %332 = vmatpush2.msra.mxu0 0.0
    %333 = vmatprep.subr.mxu0 0.0
    %334 = vmatpush2.msra.mxu0 0.0
    %335 = vmatprep.subr.mxu0 0.0
    %336 = vmatpush2.msra.mxu0 0.0
    %337 = vmatprep.subr.mxu0 0.0
    %338 = vmatpush2.msra.mxu0 0.0
    %339 = vmatprep.subr.mxu0 0.0
    %340 = vmatpush2.msra.mxu0 0.0
    %341 = vmatprep.subr.mxu0 0.0
    %342 = vmatpush2.msra.mxu0 0.0
    %343 = vmatprep.subr.mxu0 0.0
    %344 = vmatpush2.msra.mxu0 0.0
    %345 = vmatprep.subr.mxu0 0.0
    %346 = vmatpush2.msra.mxu0 0.0
    %347 = vmatprep.mubr.f32.mxu0 0.0
    %348 = vmatmul.mubr.f32.gmra.mxu0 %v257
    %v349 = vpop.f32.mrf.mxu0
    %v350 = vadd.f32 %v281, %v349
    %v351 = vpop.f32.mrf.mxu0
    %352 = vmatprep.mubr.f32.mxu0 0.0
    %353 = vmatmul.mubr.f32.gmra.mxu0 %v258
    %v354 = vpop.f32.mrf.mxu0
    %v355 = vadd.f32 %v281, %v354
    %v356 = vpop.f32.mrf.mxu0
    %357 = vmatprep.mubr.f32.mxu0 0.0
    %358 = vmatmul.mubr.f32.gmra.mxu0 %v259
    %v359 = vpop.f32.mrf.mxu0
    %v360 = vadd.f32 %v281, %v359
    %v361 = vpop.f32.mrf.mxu0
    %362 = vmatprep.mubr.f32.mxu0 0.0
    %363 = vmatmul.mubr.f32.gmra.mxu0 %v260
    %v364 = vpop.f32.mrf.mxu0
    %v365 = vadd.f32 %v281, %v364
    %v366 = vpop.f32.mrf.mxu0
    %367 = vdwg.mxu0
    %v368 = vmax.f32 %v350, 0.0
    %v369 = vmax.f32 %v355, 0.0
    %v370 = vmax.f32 %v360, 0.0
    %v371 = vmax.f32 %v365, 0.0
    %372 = vadd.xlane.f32.xlu0 %v368
    %v373 = vpop.xlane.xlu0 %372
    %374 = vadd.xlane.f32.xlu0 %v369
    %v375 = vpop.xlane.xlu0 %374
    %376 = vadd.xlane.f32.xlu0 %v370
    %v377 = vpop.xlane.xlu0 %376
    %378 = vadd.xlane.f32.xlu0 %v371
    %v379 = vpop.xlane.xlu0 %378
    %v380 = vmul.f32 %v373, 0.125
    %v381 = vmul.f32 %v375, 0.125
    %v382 = vmul.f32 %v377, 0.125
    %v383 = vmul.f32 %v379, 0.125
    %v384 = vsub.f32 %v368, %v380
    %v385 = vsub.f32 %v369, %v381
    %v386 = vsub.f32 %v370, %v382
    %v387 = vsub.f32 %v371, %v383
    %v388 = vmul.f32 %v384, %v105
    %v389 = vmul.f32 %v385, %v105
    %v390 = vmul.f32 %v386, %v105
    %v391 = vmul.f32 %v387, %v105
    %v392 = vmul.f32 %v388, %v388
    %v393 = vmul.f32 %v389, %v389
    %v394 = vmul.f32 %v390, %v390
    %v395 = vmul.f32 %v391, %v391
    %396 = vadd.xlane.f32.xlu0 %v392
    %v397 = vpop.xlane.xlu0 %396
    %398 = vadd.xlane.f32.xlu0 %v393
    %v399 = vpop.xlane.xlu0 %398
    %400 = vadd.xlane.f32.xlu0 %v394
    %v401 = vpop.xlane.xlu0 %400
    %402 = vadd.xlane.f32.xlu0 %v395
    %v403 = vpop.xlane.xlu0 %402
    %v404 = vmul.f32 %v397, 0.125
    %v405 = vmul.f32 %v399, 0.125
    %v406 = vmul.f32 %v401, 0.125
    %v407 = vmul.f32 %v403, 0.125
    %v408 = vadd.f32 %v404, 1e-05
    %v409 = vadd.f32 %v405, 1e-05
    %v410 = vadd.f32 %v406, 1e-05
    %v411 = vadd.f32 %v407, 1e-05
    %v412 = vrsqrt.pop %v408
    %v413 = vrsqrt.pop %v409
    %v414 = vrsqrt.pop %v410
    %v415 = vrsqrt.pop %v411
    %v416 = vmul.f32 %v388, %v412
    %v417 = vmul.f32 %v389, %v413
    %v418 = vmul.f32 %v390, %v414
    %v419 = vmul.f32 %v391, %v415
    %420 = vst [vmem:[#allocation2 + $0x8] sm:$0xff] %v416
    %421 = vst [vmem:[#allocation2 + $0x10] sm:$0xff] %v417
    %422 = vst [vmem:[#allocation2 + $0x28] sm:$0xff] %v418
    %423 = vst [vmem:[#allocation2 + $0x30] sm:$0xff] %v419
    %v424 = vld [vmem:[#allocation2 + $0x7] sm:$0xff]
    %v425 = vld [vmem:[#allocation2 + $0xf] sm:$0xff]
    %v426 = vld [vmem:[#allocation2 + $0x27] sm:$0xff]
    %v427 = vld [vmem:[#allocation2 + $0x2f] sm:$0xff]
    %v428 = vld [vmem:[#allocation2 + $0x9] sm:$0xff]
    %v429 = vld [vmem:[#allocation2 + $0x11] sm:$0xff]
    %v430 = vld [vmem:[#allocation2 + $0x29] sm:$0xff]
    %v431 = vld [vmem:[#allocation2 + $0x31] sm:$0xff]
    %432 = vrot.lane.b32.xlu0 %v416, 8
    %v433 = vpop.permute.xlu0 %432
    %434 = vrot.lane.b32.xlu0 %v417, 8
    %v435 = vpop.permute.xlu0 %434
    %436 = vrot.lane.b32.xlu0 %v418, 8
    %v437 = vpop.permute.xlu0 %436
    %438 = vrot.lane.b32.xlu0 %v419, 8
    %v439 = vpop.permute.xlu0 %438
    %v440 = vadd.f32 %v424, %v433
    %v441 = vadd.f32 %v425, %v435
    %v442 = vadd.f32 %v426, %v437
    %v443 = vadd.f32 %v427, %v439
    %444 = vrot.lane.b32.xlu0 %v428, 16
    %v445 = vpop.permute.xlu0 %444
    %446 = vrot.lane.b32.xlu0 %v429, 16
    %v447 = vpop.permute.xlu0 %446
    %448 = vrot.lane.b32.xlu0 %v430, 16
    %v449 = vpop.permute.xlu0 %448
    %450 = vrot.lane.b32.xlu0 %v431, 16
    %v451 = vpop.permute.xlu0 %450
    %v452 = vadd.f32 %v440, %v445
    %v453 = vadd.f32 %v441, %v447
    %v454 = vadd.f32 %v442, %v449
    %v455 = vadd.f32 %v443, %v451
    %v456 = vld [vmem:[#allocation9] sm:$0xff]
    %v457 = vld [vmem:[#allocation9 + $0x8] sm:$0xff]
    %v458 = vld [vmem:[#allocation9 + $0x10] sm:$0xff]
    %v459 = vld [vmem:[#allocation9 + $0x18] sm:$0xff]
    %v460 = vld [vmem:[#allocation9 + $0x20] sm:$0xff]
    %v461 = vld [vmem:[#allocation9 + $0x28] sm:$0xff]
    %v462 = vld [vmem:[#allocation9 + $0x30] sm:$0xff]
    %v463 = vld [vmem:[#allocation9 + $0x38] sm:$0xff]
    %v464 = vld [vmem:[#allocation9 + $0x40] sm:$0xff]
    %v465 = vld [vmem:[#allocation9 + $0x48] sm:$0xff]
    %v466 = vld [vmem:[#allocation9 + $0x50] sm:$0xff]
    %v467 = vld [vmem:[#allocation9 + $0x58] sm:$0xff]
    %v468 = vld [vmem:[#allocation9 + $0x60] sm:$0xff]
    %v469 = vld [vmem:[#allocation9 + $0x68] sm:$0xff]
    %v470 = vld [vmem:[#allocation9 + $0x70] sm:$0xff]
    %v471 = vld [vmem:[#allocation9 + $0x78] sm:$0xff]
    %v473 = vlaneseq
    %v474 = vshrl.u32 %v473, 7
    %v475 = vsub.s32 0, %v474
    %v476 = vrot.slane %v108, %v475
    %478 = vmatprep.subr.mxu0 0.0
    %479 = vmatpush1.msra.mxu0 %v471
    %480 = vmatprep.subr.mxu0 0.0
    %481 = vmatpush1.msra.mxu0 %v470
    %482 = vmatprep.subr.mxu0 0.0
    %483 = vmatpush1.msra.mxu0 %v469
    %484 = vmatprep.subr.mxu0 0.0
    %485 = vmatpush1.msra.mxu0 %v468
    %486 = vmatprep.subr.mxu0 0.0
    %487 = vmatpush1.msra.mxu0 %v467
    %488 = vmatprep.subr.mxu0 0.0
    %489 = vmatpush1.msra.mxu0 %v466
    %490 = vmatprep.subr.mxu0 0.0
    %491 = vmatpush1.msra.mxu0 %v465
    %492 = vmatprep.subr.mxu0 0.0
    %493 = vmatpush1.msra.mxu0 %v464
    %494 = vmatprep.subr.mxu0 0.0
    %495 = vmatpush1.msra.mxu0 %v463
    %496 = vmatprep.subr.mxu0 0.0
    %497 = vmatpush1.msra.mxu0 %v462
    %498 = vmatprep.subr.mxu0 0.0
    %499 = vmatpush1.msra.mxu0 %v461
    %500 = vmatprep.subr.mxu0 0.0
    %501 = vmatpush1.msra.mxu0 %v460
    %502 = vmatprep.subr.mxu0 0.0
    %503 = vmatpush1.msra.mxu0 %v459
    %504 = vmatprep.subr.mxu0 0.0
    %505 = vmatpush1.msra.mxu0 %v458
    %506 = vmatprep.subr.mxu0 0.0
    %507 = vmatpush1.msra.mxu0 %v457
    %508 = vmatprep.subr.mxu0 0.0
    %509 = vmatpush1.msra.mxu0 %v456
    %510 = vmatprep.subr.mxu0 0.0
    %511 = vmatpush2.msra.mxu0 0.0
    %512 = vmatprep.subr.mxu0 0.0
    %513 = vmatpush2.msra.mxu0 0.0
    %514 = vmatprep.subr.mxu0 0.0
    %515 = vmatpush2.msra.mxu0 0.0
    %516 = vmatprep.subr.mxu0 0.0
    %517 = vmatpush2.msra.mxu0 0.0
    %518 = vmatprep.subr.mxu0 0.0
    %519 = vmatpush2.msra.mxu0 0.0
    %520 = vmatprep.subr.mxu0 0.0
    %521 = vmatpush2.msra.mxu0 0.0
    %522 = vmatprep.subr.mxu0 0.0
    %523 = vmatpush2.msra.mxu0 0.0
    %524 = vmatprep.subr.mxu0 0.0
    %525 = vmatpush2.msra.mxu0 0.0
    %526 = vmatprep.subr.mxu0 0.0
    %527 = vmatpush2.msra.mxu0 0.0
    %528 = vmatprep.subr.mxu0 0.0
    %529 = vmatpush2.msra.mxu0 0.0
    %530 = vmatprep.subr.mxu0 0.0
    %531 = vmatpush2.msra.mxu0 0.0
    %532 = vmatprep.subr.mxu0 0.0
    %533 = vmatpush2.msra.mxu0 0.0
    %534 = vmatprep.subr.mxu0 0.0
    %535 = vmatpush2.msra.mxu0 0.0
    %536 = vmatprep.subr.mxu0 0.0
    %537 = vmatpush2.msra.mxu0 0.0
    %538 = vmatprep.subr.mxu0 0.0
    %539 = vmatpush2.msra.mxu0 0.0
    %540 = vmatprep.subr.mxu0 0.0
    %541 = vmatpush2.msra.mxu0 0.0
    %542 = vmatprep.mubr.f32.mxu0 0.0
    %543 = vmatmul.mubr.f32.gmra.mxu0 %v452
    %v544 = vpop.f32.mrf.mxu0
    %v545 = vadd.f32 %v476, %v544
    %v546 = vpop.f32.mrf.mxu0
    %547 = vmatprep.mubr.f32.mxu0 0.0
    %548 = vmatmul.mubr.f32.gmra.mxu0 %v453
    %v549 = vpop.f32.mrf.mxu0
    %v550 = vadd.f32 %v476, %v549
    %v551 = vpop.f32.mrf.mxu0
    %552 = vmatprep.mubr.f32.mxu0 0.0
    %553 = vmatmul.mubr.f32.gmra.mxu0 %v454
    %v554 = vpop.f32.mrf.mxu0
    %v555 = vadd.f32 %v476, %v554
    %v556 = vpop.f32.mrf.mxu0
    %557 = vmatprep.mubr.f32.mxu0 0.0
    %558 = vmatmul.mubr.f32.gmra.mxu0 %v455
    %v559 = vpop.f32.mrf.mxu0
    %v560 = vadd.f32 %v476, %v559
    %v561 = vpop.f32.mrf.mxu0
    %562 = vdwg.mxu0
    %563 = vst [vmem:[#allocation2 + $0x8] sm:$0xff] %v545
    %564 = vst [vmem:[#allocation2 + $0x10] sm:$0xff] %v550
    %565 = vst [vmem:[#allocation2 + $0x28] sm:$0xff] %v555
    %566 = vst [vmem:[#allocation2 + $0x30] sm:$0xff] %v560
    %v567 = vld [vmem:[#allocation2 + $0x6] sm:$0xff]
    %v568 = vld [vmem:[#allocation2 + $0xe] sm:$0xff]
    %v569 = vld [vmem:[#allocation2 + $0x26] sm:$0xff]
    %v570 = vld [vmem:[#allocation2 + $0x2e] sm:$0xff]
    %v571 = vld [vmem:[#allocation2 + $0xa] sm:$0xff]
    %v572 = vld [vmem:[#allocation2 + $0x12] sm:$0xff]
    %v573 = vld [vmem:[#allocation2 + $0x2a] sm:$0xff]
    %v574 = vld [vmem:[#allocation2 + $0x32] sm:$0xff]
    %575 = vrot.lane.b32.xlu0 %v545, 8
    %v576 = vpop.permute.xlu0 %575
    %577 = vrot.lane.b32.xlu0 %v550, 8
    %v578 = vpop.permute.xlu0 %577
    %579 = vrot.lane.b32.xlu0 %v555, 8
    %v580 = vpop.permute.xlu0 %579
    %581 = vrot.lane.b32.xlu0 %v560, 8
    %v582 = vpop.permute.xlu0 %581
    %v583 = vadd.f32 %v567, %v576
    %v584 = vadd.f32 %v568, %v578
    %v585 = vadd.f32 %v569, %v580
    %v586 = vadd.f32 %v570, %v582
    %587 = vrot.lane.b32.xlu0 %v571, 16
    %v588 = vpop.permute.xlu0 %587
    %589 = vrot.lane.b32.xlu0 %v572, 16
    %v590 = vpop.permute.xlu0 %589
    %591 = vrot.lane.b32.xlu0 %v573, 16
    %v592 = vpop.permute.xlu0 %591
    %593 = vrot.lane.b32.xlu0 %v574, 16
    %v594 = vpop.permute.xlu0 %593
    %v595 = vadd.f32 %v583, %v588
    %v596 = vadd.f32 %v584, %v590
    %v597 = vadd.f32 %v585, %v592
    %v598 = vadd.f32 %v586, %v594
    %v599 = vld [vmem:[#allocation11] sm:$0xff]
    %v600 = vld [vmem:[#allocation11 + $0x8] sm:$0xff]
    %v601 = vld [vmem:[#allocation11 + $0x10] sm:$0xff]
    %v602 = vld [vmem:[#allocation11 + $0x18] sm:$0xff]
    %v603 = vld [vmem:[#allocation11 + $0x20] sm:$0xff]
    %v604 = vld [vmem:[#allocation11 + $0x28] sm:$0xff]
    %v605 = vld [vmem:[#allocation11 + $0x30] sm:$0xff]
    %v606 = vld [vmem:[#allocation11 + $0x38] sm:$0xff]
    %v607 = vld [vmem:[#allocation11 + $0x40] sm:$0xff]
    %v608 = vld [vmem:[#allocation11 + $0x48] sm:$0xff]
    %v609 = vld [vmem:[#allocation11 + $0x50] sm:$0xff]
    %v610 = vld [vmem:[#allocation11 + $0x58] sm:$0xff]
    %v611 = vld [vmem:[#allocation11 + $0x60] sm:$0xff]
    %v612 = vld [vmem:[#allocation11 + $0x68] sm:$0xff]
    %v613 = vld [vmem:[#allocation11 + $0x70] sm:$0xff]
    %v614 = vld [vmem:[#allocation11 + $0x78] sm:$0xff]
    %v616 = vlaneseq
    %v617 = vshrl.u32 %v616, 7
    %v618 = vsub.s32 0, %v617
    %v619 = vrot.slane %v109, %v618
    %621 = vmatprep.subr.mxu0 0.0
    %622 = vmatpush1.msra.mxu0 %v614
    %623 = vmatprep.subr.mxu0 0.0
    %624 = vmatpush1.msra.mxu0 %v613
    %625 = vmatprep.subr.mxu0 0.0
    %626 = vmatpush1.msra.mxu0 %v612
    %627 = vmatprep.subr.mxu0 0.0
    %628 = vmatpush1.msra.mxu0 %v611
    %629 = vmatprep.subr.mxu0 0.0
    %630 = vmatpush1.msra.mxu0 %v610
    %631 = vmatprep.subr.mxu0 0.0
    %632 = vmatpush1.msra.mxu0 %v609
    %633 = vmatprep.subr.mxu0 0.0
    %634 = vmatpush1.msra.mxu0 %v608
    %635 = vmatprep.subr.mxu0 0.0
    %636 = vmatpush1.msra.mxu0 %v607
    %637 = vmatprep.subr.mxu0 0.0
    %638 = vmatpush1.msra.mxu0 %v606
    %639 = vmatprep.subr.mxu0 0.0
    %640 = vmatpush1.msra.mxu0 %v605
    %641 = vmatprep.subr.mxu0 0.0
    %642 = vmatpush1.msra.mxu0 %v604
    %643 = vmatprep.subr.mxu0 0.0
    %644 = vmatpush1.msra.mxu0 %v603
    %645 = vmatprep.subr.mxu0 0.0
    %646 = vmatpush1.msra.mxu0 %v602
    %647 = vmatprep.subr.mxu0 0.0
    %648 = vmatpush1.msra.mxu0 %v601
    %649 = vmatprep.subr.mxu0 0.0
    %650 = vmatpush1.msra.mxu0 %v600
    %651 = vmatprep.subr.mxu0 0.0
    %652 = vmatpush1.msra.mxu0 %v599
    %653 = vmatprep.subr.mxu0 0.0
    %654 = vmatpush2.msra.mxu0 0.0
    %655 = vmatprep.subr.mxu0 0.0
    %656 = vmatpush2.msra.mxu0 0.0
    %657 = vmatprep.subr.mxu0 0.0
    %658 = vmatpush2.msra.mxu0 0.0
    %659 = vmatprep.subr.mxu0 0.0
    %660 = vmatpush2.msra.mxu0 0.0
    %661 = vmatprep.subr.mxu0 0.0
    %662 = vmatpush2.msra.mxu0 0.0
    %663 = vmatprep.subr.mxu0 0.0
    %664 = vmatpush2.msra.mxu0 0.0
    %665 = vmatprep.subr.mxu0 0.0
    %666 = vmatpush2.msra.mxu0 0.0
    %667 = vmatprep.subr.mxu0 0.0
    %668 = vmatpush2.msra.mxu0 0.0
    %669 = vmatprep.subr.mxu0 0.0
    %670 = vmatpush2.msra.mxu0 0.0
    %671 = vmatprep.subr.mxu0 0.0
    %672 = vmatpush2.msra.mxu0 0.0
    %673 = vmatprep.subr.mxu0 0.0
    %674 = vmatpush2.msra.mxu0 0.0
    %675 = vmatprep.subr.mxu0 0.0
    %676 = vmatpush2.msra.mxu0 0.0
    %677 = vmatprep.subr.mxu0 0.0
    %678 = vmatpush2.msra.mxu0 0.0
    %679 = vmatprep.subr.mxu0 0.0
    %680 = vmatpush2.msra.mxu0 0.0
    %681 = vmatprep.subr.mxu0 0.0
    %682 = vmatpush2.msra.mxu0 0.0
    %683 = vmatprep.subr.mxu0 0.0
    %684 = vmatpush2.msra.mxu0 0.0
    %685 = vmatprep.mubr.f32.mxu0 0.0
    %686 = vmatmul.mubr.f32.gmra.mxu0 %v595
    %v687 = vpop.f32.mrf.mxu0
    %v688 = vadd.f32 %v619, %v687
    %v689 = vpop.f32.mrf.mxu0
    %690 = vmatprep.mubr.f32.mxu0 0.0
    %691 = vmatmul.mubr.f32.gmra.mxu0 %v596
    %v692 = vpop.f32.mrf.mxu0
    %v693 = vadd.f32 %v619, %v692
    %v694 = vpop.f32.mrf.mxu0
    %695 = vmatprep.mubr.f32.mxu0 0.0
    %696 = vmatmul.mubr.f32.gmra.mxu0 %v597
    %v697 = vpop.f32.mrf.mxu0
    %v698 = vadd.f32 %v619, %v697
    %v699 = vpop.f32.mrf.mxu0
    %700 = vmatprep.mubr.f32.mxu0 0.0
    %701 = vmatmul.mubr.f32.gmra.mxu0 %v598
    %v702 = vpop.f32.mrf.mxu0
    %v703 = vadd.f32 %v619, %v702
    %v704 = vpop.f32.mrf.mxu0
    %705 = vdwg.mxu0
    %v706 = vmax.f32 %v688, 0.0
    %v707 = vmax.f32 %v693, 0.0
    %v708 = vmax.f32 %v698, 0.0
    %v709 = vmax.f32 %v703, 0.0
    %710 = vadd.xlane.f32.xlu0 %v706
    %v711 = vpop.xlane.xlu0 %710
    %712 = vadd.xlane.f32.xlu0 %v707
    %v713 = vpop.xlane.xlu0 %712
    %714 = vadd.xlane.f32.xlu0 %v708
    %v715 = vpop.xlane.xlu0 %714
    %716 = vadd.xlane.f32.xlu0 %v709
    %v717 = vpop.xlane.xlu0 %716
    %v718 = vmul.f32 %v711, 0.125
    %v719 = vmul.f32 %v713, 0.125
    %v720 = vmul.f32 %v715, 0.125
    %v721 = vmul.f32 %v717, 0.125
    %v722 = vsub.f32 %v706, %v718
    %v723 = vsub.f32 %v707, %v719
    %v724 = vsub.f32 %v708, %v720
    %v725 = vsub.f32 %v709, %v721
    %v726 = vmul.f32 %v722, %v105
    %v727 = vmul.f32 %v723, %v105
    %v728 = vmul.f32 %v724, %v105
    %v729 = vmul.f32 %v725, %v105
    %v730 = vmul.f32 %v726, %v726
    %v731 = vmul.f32 %v727, %v727
    %v732 = vmul.f32 %v728, %v728
    %v733 = vmul.f32 %v729, %v729
    %734 = vadd.xlane.f32.xlu0 %v730
    %v735 = vpop.xlane.xlu0 %734
    %736 = vadd.xlane.f32.xlu0 %v731
    %v737 = vpop.xlane.xlu0 %736
    %738 = vadd.xlane.f32.xlu0 %v732
    %v739 = vpop.xlane.xlu0 %738
    %740 = vadd.xlane.f32.xlu0 %v733
    %v741 = vpop.xlane.xlu0 %740
    %v742 = vmul.f32 %v735, 0.125
    %v743 = vmul.f32 %v737, 0.125
    %v744 = vmul.f32 %v739, 0.125
    %v745 = vmul.f32 %v741, 0.125
    %v746 = vadd.f32 %v742, 1e-05
    %v747 = vadd.f32 %v743, 1e-05
    %v748 = vadd.f32 %v744, 1e-05
    %v749 = vadd.f32 %v745, 1e-05
    %v750 = vrsqrt.pop %v746
    %v751 = vrsqrt.pop %v747
    %v752 = vrsqrt.pop %v748
    %v753 = vrsqrt.pop %v749
    %v754 = vmul.f32 %v726, %v750
    %v755 = vmul.f32 %v727, %v751
    %v756 = vmul.f32 %v728, %v752
    %v757 = vmul.f32 %v729, %v753
    %758 = vst [vmem:[#allocation2 + $0x8] sm:$0xff] %v754
    %759 = vst [vmem:[#allocation2 + $0x10] sm:$0xff] %v755
    %760 = vst [vmem:[#allocation2 + $0x28] sm:$0xff] %v756
    %761 = vst [vmem:[#allocation2 + $0x30] sm:$0xff] %v757
    %v762 = vld [vmem:[#allocation2 + $0x7] sm:$0xff]
    %v763 = vld [vmem:[#allocation2 + $0xf] sm:$0xff]
    %v764 = vld [vmem:[#allocation2 + $0x27] sm:$0xff]
    %v765 = vld [vmem:[#allocation2 + $0x2f] sm:$0xff]
    %v766 = vld [vmem:[#allocation2 + $0x9] sm:$0xff]
    %v767 = vld [vmem:[#allocation2 + $0x11] sm:$0xff]
    %v768 = vld [vmem:[#allocation2 + $0x29] sm:$0xff]
    %v769 = vld [vmem:[#allocation2 + $0x31] sm:$0xff]
    %770 = vrot.lane.b32.xlu0 %v754, 8
    %v771 = vpop.permute.xlu0 %770
    %772 = vrot.lane.b32.xlu0 %v755, 8
    %v773 = vpop.permute.xlu0 %772
    %774 = vrot.lane.b32.xlu0 %v756, 8
    %v775 = vpop.permute.xlu0 %774
    %776 = vrot.lane.b32.xlu0 %v757, 8
    %v777 = vpop.permute.xlu0 %776
    %v778 = vadd.f32 %v762, %v771
    %v779 = vadd.f32 %v763, %v773
    %v780 = vadd.f32 %v764, %v775
    %v781 = vadd.f32 %v765, %v777
    %782 = vrot.lane.b32.xlu0 %v766, 16
    %v783 = vpop.permute.xlu0 %782
    %784 = vrot.lane.b32.xlu0 %v767, 16
    %v785 = vpop.permute.xlu0 %784
    %786 = vrot.lane.b32.xlu0 %v768, 16
    %v787 = vpop.permute.xlu0 %786
    %788 = vrot.lane.b32.xlu0 %v769, 16
    %v789 = vpop.permute.xlu0 %788
    %v790 = vadd.f32 %v778, %v783
    %v791 = vadd.f32 %v779, %v785
    %v792 = vadd.f32 %v780, %v787
    %v793 = vadd.f32 %v781, %v789
    %v794 = vld [vmem:[#allocation8] sm:$0xff]
    %v795 = vld [vmem:[#allocation8 + $0x8] sm:$0xff]
    %v796 = vld [vmem:[#allocation8 + $0x10] sm:$0xff]
    %v797 = vld [vmem:[#allocation8 + $0x18] sm:$0xff]
    %v798 = vld [vmem:[#allocation8 + $0x20] sm:$0xff]
    %v799 = vld [vmem:[#allocation8 + $0x28] sm:$0xff]
    %v800 = vld [vmem:[#allocation8 + $0x30] sm:$0xff]
    %v801 = vld [vmem:[#allocation8 + $0x38] sm:$0xff]
    %v802 = vld [vmem:[#allocation8 + $0x40] sm:$0xff]
    %v803 = vld [vmem:[#allocation8 + $0x48] sm:$0xff]
    %v804 = vld [vmem:[#allocation8 + $0x50] sm:$0xff]
    %v805 = vld [vmem:[#allocation8 + $0x58] sm:$0xff]
    %v806 = vld [vmem:[#allocation8 + $0x60] sm:$0xff]
    %v807 = vld [vmem:[#allocation8 + $0x68] sm:$0xff]
    %v808 = vld [vmem:[#allocation8 + $0x70] sm:$0xff]
    %v809 = vld [vmem:[#allocation8 + $0x78] sm:$0xff]
    %810 = vmatprep.subr.mxu0 0.0
    %811 = vmatpush1.msra.mxu0 %v809
    %812 = vmatprep.subr.mxu0 0.0
    %813 = vmatpush1.msra.mxu0 %v808
    %814 = vmatprep.subr.mxu0 0.0
    %815 = vmatpush1.msra.mxu0 %v807
    %816 = vmatprep.subr.mxu0 0.0
    %817 = vmatpush1.msra.mxu0 %v806
    %818 = vmatprep.subr.mxu0 0.0
    %819 = vmatpush1.msra.mxu0 %v805
    %820 = vmatprep.subr.mxu0 0.0
    %821 = vmatpush1.msra.mxu0 %v804
    %822 = vmatprep.subr.mxu0 0.0
    %823 = vmatpush1.msra.mxu0 %v803
    %824 = vmatprep.subr.mxu0 0.0
    %825 = vmatpush1.msra.mxu0 %v802
    %826 = vmatprep.subr.mxu0 0.0
    %827 = vmatpush1.msra.mxu0 %v801
    %828 = vmatprep.subr.mxu0 0.0
    %829 = vmatpush1.msra.mxu0 %v800
    %830 = vmatprep.subr.mxu0 0.0
    %831 = vmatpush1.msra.mxu0 %v799
    %832 = vmatprep.subr.mxu0 0.0
    %833 = vmatpush1.msra.mxu0 %v798
    %834 = vmatprep.subr.mxu0 0.0
    %835 = vmatpush1.msra.mxu0 %v797
    %836 = vmatprep.subr.mxu0 0.0
    %837 = vmatpush1.msra.mxu0 %v796
    %838 = vmatprep.subr.mxu0 0.0
    %839 = vmatpush1.msra.mxu0 %v795
    %840 = vmatprep.subr.mxu0 0.0
    %841 = vmatpush1.msra.mxu0 %v794
    %842 = vmatprep.subr.mxu0 0.0
    %843 = vmatpush2.msra.mxu0 0.0
    %844 = vmatprep.subr.mxu0 0.0
    %845 = vmatpush2.msra.mxu0 0.0
    %846 = vmatprep.subr.mxu0 0.0
    %847 = vmatpush2.msra.mxu0 0.0
    %848 = vmatprep.subr.mxu0 0.0
    %849 = vmatpush2.msra.mxu0 0.0
    %850 = vmatprep.subr.mxu0 0.0
    %851 = vmatpush2.msra.mxu0 0.0
    %852 = vmatprep.subr.mxu0 0.0
    %853 = vmatpush2.msra.mxu0 0.0
    %854 = vmatprep.subr.mxu0 0.0
    %855 = vmatpush2.msra.mxu0 0.0
    %856 = vmatprep.subr.mxu0 0.0
    %857 = vmatpush2.msra.mxu0 0.0
    %858 = vmatprep.subr.mxu0 0.0
    %859 = vmatpush2.msra.mxu0 0.0
    %860 = vmatprep.subr.mxu0 0.0
    %861 = vmatpush2.msra.mxu0 0.0
    %862 = vmatprep.subr.mxu0 0.0
    %863 = vmatpush2.msra.mxu0 0.0
    %864 = vmatprep.subr.mxu0 0.0
    %865 = vmatpush2.msra.mxu0 0.0
    %866 = vmatprep.subr.mxu0 0.0
    %867 = vmatpush2.msra.mxu0 0.0
    %868 = vmatprep.subr.mxu0 0.0
    %869 = vmatpush2.msra.mxu0 0.0
    %870 = vmatprep.subr.mxu0 0.0
    %871 = vmatpush2.msra.mxu0 0.0
    %872 = vmatprep.subr.mxu0 0.0
    %873 = vmatpush2.msra.mxu0 0.0
    %874 = vmatprep.mubr.f32.mxu0 0.0
    %875 = vmatmul.mubr.f32.gmra.mxu0 %v790
    %v876 = vpop.f32.mrf.mxu0
    %v877 = vadd.f32 %v281, %v876
    %v878 = vpop.f32.mrf.mxu0
    %879 = vmatprep.mubr.f32.mxu0 0.0
    %880 = vmatmul.mubr.f32.gmra.mxu0 %v791
    %v881 = vpop.f32.mrf.mxu0
    %v882 = vadd.f32 %v281, %v881
    %v883 = vpop.f32.mrf.mxu0
    %884 = vmatprep.mubr.f32.mxu0 0.0
    %885 = vmatmul.mubr.f32.gmra.mxu0 %v792
    %v886 = vpop.f32.mrf.mxu0
    %v887 = vadd.f32 %v281, %v886
    %v888 = vpop.f32.mrf.mxu0
    %889 = vmatprep.mubr.f32.mxu0 0.0
    %890 = vmatmul.mubr.f32.gmra.mxu0 %v793
    %v891 = vpop.f32.mrf.mxu0
    %v892 = vadd.f32 %v281, %v891
    %v893 = vpop.f32.mrf.mxu0
    %894 = vdwg.mxu0
    %v895 = vmax.f32 %v877, 0.0
    %v896 = vmax.f32 %v882, 0.0
    %v897 = vmax.f32 %v887, 0.0
    %v898 = vmax.f32 %v892, 0.0
    %899 = vadd.xlane.f32.xlu0 %v895
    %v900 = vpop.xlane.xlu0 %899
    %901 = vadd.xlane.f32.xlu0 %v896
    %v902 = vpop.xlane.xlu0 %901
    %903 = vadd.xlane.f32.xlu0 %v897
    %v904 = vpop.xlane.xlu0 %903
    %905 = vadd.xlane.f32.xlu0 %v898
    %v906 = vpop.xlane.xlu0 %905
    %v907 = vmul.f32 %v900, 0.125
    %v908 = vmul.f32 %v902, 0.125
    %v909 = vmul.f32 %v904, 0.125
    %v910 = vmul.f32 %v906, 0.125
    %v911 = vsub.f32 %v895, %v907
    %v912 = vsub.f32 %v896, %v908
    %v913 = vsub.f32 %v897, %v909
    %v914 = vsub.f32 %v898, %v910
    %v915 = vmul.f32 %v911, %v105
    %v916 = vmul.f32 %v912, %v105
    %v917 = vmul.f32 %v913, %v105
    %v918 = vmul.f32 %v914, %v105
    %v919 = vmul.f32 %v915, %v915
    %v920 = vmul.f32 %v916, %v916
    %v921 = vmul.f32 %v917, %v917
    %v922 = vmul.f32 %v918, %v918
    %923 = vadd.xlane.f32.xlu0 %v919
    %v924 = vpop.xlane.xlu0 %923
    %925 = vadd.xlane.f32.xlu0 %v920
    %v926 = vpop.xlane.xlu0 %925
    %927 = vadd.xlane.f32.xlu0 %v921
    %v928 = vpop.xlane.xlu0 %927
    %929 = vadd.xlane.f32.xlu0 %v922
    %v930 = vpop.xlane.xlu0 %929
    %v931 = vmul.f32 %v924, 0.125
    %v932 = vmul.f32 %v926, 0.125
    %v933 = vmul.f32 %v928, 0.125
    %v934 = vmul.f32 %v930, 0.125
    %v935 = vadd.f32 %v931, 1e-05
    %v936 = vadd.f32 %v932, 1e-05
    %v937 = vadd.f32 %v933, 1e-05
    %v938 = vadd.f32 %v934, 1e-05
    %v939 = vrsqrt.pop %v935
    %v940 = vrsqrt.pop %v936
    %v941 = vrsqrt.pop %v937
    %v942 = vrsqrt.pop %v938
    %v943 = vmul.f32 %v915, %v939
    %v944 = vmul.f32 %v916, %v940
    %v945 = vmul.f32 %v917, %v941
    %v946 = vmul.f32 %v918, %v942
    %947 = vst [vmem:[#allocation2 + $0x8] sm:$0xff] %v943
    %948 = vst [vmem:[#allocation2 + $0x10] sm:$0xff] %v944
    %949 = vst [vmem:[#allocation2 + $0x28] sm:$0xff] %v945
    %950 = vst [vmem:[#allocation2 + $0x30] sm:$0xff] %v946
    %v951 = vld [vmem:[#allocation2 + $0x7] sm:$0xff]
    %v952 = vld [vmem:[#allocation2 + $0xf] sm:$0xff]
    %v953 = vld [vmem:[#allocation2 + $0x27] sm:$0xff]
    %v954 = vld [vmem:[#allocation2 + $0x2f] sm:$0xff]
    %v955 = vld [vmem:[#allocation2 + $0x9] sm:$0xff]
    %v956 = vld [vmem:[#allocation2 + $0x11] sm:$0xff]
    %v957 = vld [vmem:[#allocation2 + $0x29] sm:$0xff]
    %v958 = vld [vmem:[#allocation2 + $0x31] sm:$0xff]
    %959 = vrot.lane.b32.xlu0 %v943, 8
    %v960 = vpop.permute.xlu0 %959
    %961 = vrot.lane.b32.xlu0 %v944, 8
    %v962 = vpop.permute.xlu0 %961
    %963 = vrot.lane.b32.xlu0 %v945, 8
    %v964 = vpop.permute.xlu0 %963
    %965 = vrot.lane.b32.xlu0 %v946, 8
    %v966 = vpop.permute.xlu0 %965
    %v967 = vadd.f32 %v951, %v960
    %v968 = vadd.f32 %v952, %v962
    %v969 = vadd.f32 %v953, %v964
    %v970 = vadd.f32 %v954, %v966
    %971 = vrot.lane.b32.xlu0 %v955, 16
    %v972 = vpop.permute.xlu0 %971
    %973 = vrot.lane.b32.xlu0 %v956, 16
    %v974 = vpop.permute.xlu0 %973
    %975 = vrot.lane.b32.xlu0 %v957, 16
    %v976 = vpop.permute.xlu0 %975
    %977 = vrot.lane.b32.xlu0 %v958, 16
    %v978 = vpop.permute.xlu0 %977
    %v979 = vadd.f32 %v967, %v972
    %v980 = vadd.f32 %v968, %v974
    %v981 = vadd.f32 %v969, %v976
    %v982 = vadd.f32 %v970, %v978
    %v983 = vld [vmem:[#allocation9] sm:$0xff]
    %v984 = vld [vmem:[#allocation9 + $0x8] sm:$0xff]
    %v985 = vld [vmem:[#allocation9 + $0x10] sm:$0xff]
    %v986 = vld [vmem:[#allocation9 + $0x18] sm:$0xff]
    %v987 = vld [vmem:[#allocation9 + $0x20] sm:$0xff]
    %v988 = vld [vmem:[#allocation9 + $0x28] sm:$0xff]
    %v989 = vld [vmem:[#allocation9 + $0x30] sm:$0xff]
    %v990 = vld [vmem:[#allocation9 + $0x38] sm:$0xff]
    %v991 = vld [vmem:[#allocation9 + $0x40] sm:$0xff]
    %v992 = vld [vmem:[#allocation9 + $0x48] sm:$0xff]
    %v993 = vld [vmem:[#allocation9 + $0x50] sm:$0xff]
    %v994 = vld [vmem:[#allocation9 + $0x58] sm:$0xff]
    %v995 = vld [vmem:[#allocation9 + $0x60] sm:$0xff]
    %v996 = vld [vmem:[#allocation9 + $0x68] sm:$0xff]
    %v997 = vld [vmem:[#allocation9 + $0x70] sm:$0xff]
    %v998 = vld [vmem:[#allocation9 + $0x78] sm:$0xff]
    %999 = vmatprep.subr.mxu0 0.0
    %1000 = vmatpush1.msra.mxu0 %v998
    %1001 = vmatprep.subr.mxu0 0.0
    %1002 = vmatpush1.msra.mxu0 %v997
    %1003 = vmatprep.subr.mxu0 0.0
    %1004 = vmatpush1.msra.mxu0 %v996
    %1005 = vmatprep.subr.mxu0 0.0
    %1006 = vmatpush1.msra.mxu0 %v995
    %1007 = vmatprep.subr.mxu0 0.0
    %1008 = vmatpush1.msra.mxu0 %v994
    %1009 = vmatprep.subr.mxu0 0.0
    %1010 = vmatpush1.msra.mxu0 %v993
    %1011 = vmatprep.subr.mxu0 0.0
    %1012 = vmatpush1.msra.mxu0 %v992
    %1013 = vmatprep.subr.mxu0 0.0
    %1014 = vmatpush1.msra.mxu0 %v991
    %1015 = vmatprep.subr.mxu0 0.0
    %1016 = vmatpush1.msra.mxu0 %v990
    %1017 = vmatprep.subr.mxu0 0.0
    %1018 = vmatpush1.msra.mxu0 %v989
    %1019 = vmatprep.subr.mxu0 0.0
    %1020 = vmatpush1.msra.mxu0 %v988
    %1021 = vmatprep.subr.mxu0 0.0
    %1022 = vmatpush1.msra.mxu0 %v987
    %1023 = vmatprep.subr.mxu0 0.0
    %1024 = vmatpush1.msra.mxu0 %v986
    %1025 = vmatprep.subr.mxu0 0.0
    %1026 = vmatpush1.msra.mxu0 %v985
    %1027 = vmatprep.subr.mxu0 0.0
    %1028 = vmatpush1.msra.mxu0 %v984
    %1029 = vmatprep.subr.mxu0 0.0
    %1030 = vmatpush1.msra.mxu0 %v983
    %1031 = vmatprep.subr.mxu0 0.0
    %1032 = vmatpush2.msra.mxu0 0.0
    %1033 = vmatprep.subr.mxu0 0.0
    %1034 = vmatpush2.msra.mxu0 0.0
    %1035 = vmatprep.subr.mxu0 0.0
    %1036 = vmatpush2.msra.mxu0 0.0
    %1037 = vmatprep.subr.mxu0 0.0
    %1038 = vmatpush2.msra.mxu0 0.0
    %1039 = vmatprep.subr.mxu0 0.0
    %1040 = vmatpush2.msra.mxu0 0.0
    %1041 = vmatprep.subr.mxu0 0.0
    %1042 = vmatpush2.msra.mxu0 0.0
    %1043 = vmatprep.subr.mxu0 0.0
    %1044 = vmatpush2.msra.mxu0 0.0
    %1045 = vmatprep.subr.mxu0 0.0
    %1046 = vmatpush2.msra.mxu0 0.0
    %1047 = vmatprep.subr.mxu0 0.0
    %1048 = vmatpush2.msra.mxu0 0.0
    %1049 = vmatprep.subr.mxu0 0.0
    %1050 = vmatpush2.msra.mxu0 0.0
    %1051 = vmatprep.subr.mxu0 0.0
    %1052 = vmatpush2.msra.mxu0 0.0
    %1053 = vmatprep.subr.mxu0 0.0
    %1054 = vmatpush2.msra.mxu0 0.0
    %1055 = vmatprep.subr.mxu0 0.0
    %1056 = vmatpush2.msra.mxu0 0.0
    %1057 = vmatprep.subr.mxu0 0.0
    %1058 = vmatpush2.msra.mxu0 0.0
    %1059 = vmatprep.subr.mxu0 0.0
    %1060 = vmatpush2.msra.mxu0 0.0
    %1061 = vmatprep.subr.mxu0 0.0
    %1062 = vmatpush2.msra.mxu0 0.0
    %1063 = vmatprep.mubr.f32.mxu0 0.0
    %1064 = vmatmul.mubr.f32.gmra.mxu0 %v979
    %v1065 = vpop.f32.mrf.mxu0
    %v1066 = vadd.f32 %v476, %v1065
    %v1067 = vpop.f32.mrf.mxu0
    %1068 = vmatprep.mubr.f32.mxu0 0.0
    %1069 = vmatmul.mubr.f32.gmra.mxu0 %v980
    %v1070 = vpop.f32.mrf.mxu0
    %v1071 = vadd.f32 %v476, %v1070
    %v1072 = vpop.f32.mrf.mxu0
    %1073 = vmatprep.mubr.f32.mxu0 0.0
    %1074 = vmatmul.mubr.f32.gmra.mxu0 %v981
    %v1075 = vpop.f32.mrf.mxu0
    %v1076 = vadd.f32 %v476, %v1075
    %v1077 = vpop.f32.mrf.mxu0
    %1078 = vmatprep.mubr.f32.mxu0 0.0
    %1079 = vmatmul.mubr.f32.gmra.mxu0 %v982
    %v1080 = vpop.f32.mrf.mxu0
    %v1081 = vadd.f32 %v476, %v1080
    %v1082 = vpop.f32.mrf.mxu0
    %1083 = vdwg.mxu0
    %1084 = vst [vmem:[#allocation2 + $0x8] sm:$0xff] %v1066
    %1085 = vst [vmem:[#allocation2 + $0x10] sm:$0xff] %v1071
    %1086 = vst [vmem:[#allocation2 + $0x28] sm:$0xff] %v1076
    %1087 = vst [vmem:[#allocation2 + $0x30] sm:$0xff] %v1081
    %v1088 = vld [vmem:[#allocation2 + $0x6] sm:$0xff]
    %v1089 = vld [vmem:[#allocation2 + $0xe] sm:$0xff]
    %v1090 = vld [vmem:[#allocation2 + $0x26] sm:$0xff]
    %v1091 = vld [vmem:[#allocation2 + $0x2e] sm:$0xff]
    %v1092 = vld [vmem:[#allocation2 + $0xa] sm:$0xff]
    %v1093 = vld [vmem:[#allocation2 + $0x12] sm:$0xff]
    %v1094 = vld [vmem:[#allocation2 + $0x2a] sm:$0xff]
    %v1095 = vld [vmem:[#allocation2 + $0x32] sm:$0xff]
    %1096 = vrot.lane.b32.xlu0 %v1066, 8
    %v1097 = vpop.permute.xlu0 %1096
    %1098 = vrot.lane.b32.xlu0 %v1071, 8
    %v1099 = vpop.permute.xlu0 %1098
    %1100 = vrot.lane.b32.xlu0 %v1076, 8
    %v1101 = vpop.permute.xlu0 %1100
    %1102 = vrot.lane.b32.xlu0 %v1081, 8
    %v1103 = vpop.permute.xlu0 %1102
    %v1104 = vadd.f32 %v1088, %v1097
    %v1105 = vadd.f32 %v1089, %v1099
    %v1106 = vadd.f32 %v1090, %v1101
    %v1107 = vadd.f32 %v1091, %v1103
    %1108 = vrot.lane.b32.xlu0 %v1092, 16
    %v1109 = vpop.permute.xlu0 %1108
    %1110 = vrot.lane.b32.xlu0 %v1093, 16
    %v1111 = vpop.permute.xlu0 %1110
    %1112 = vrot.lane.b32.xlu0 %v1094, 16
    %v1113 = vpop.permute.xlu0 %1112
    %1114 = vrot.lane.b32.xlu0 %v1095, 16
    %v1115 = vpop.permute.xlu0 %1114
    %v1116 = vadd.f32 %v1104, %v1109
    %v1117 = vadd.f32 %v1105, %v1111
    %v1118 = vadd.f32 %v1106, %v1113
    %v1119 = vadd.f32 %v1107, %v1115
    %v1120 = vld [vmem:[#allocation11] sm:$0xff]
    %v1121 = vld [vmem:[#allocation11 + $0x8] sm:$0xff]
    %v1122 = vld [vmem:[#allocation11 + $0x10] sm:$0xff]
    %v1123 = vld [vmem:[#allocation11 + $0x18] sm:$0xff]
    %v1124 = vld [vmem:[#allocation11 + $0x20] sm:$0xff]
    %v1125 = vld [vmem:[#allocation11 + $0x28] sm:$0xff]
    %v1126 = vld [vmem:[#allocation11 + $0x30] sm:$0xff]
    %v1127 = vld [vmem:[#allocation11 + $0x38] sm:$0xff]
    %v1128 = vld [vmem:[#allocation11 + $0x40] sm:$0xff]
    %v1129 = vld [vmem:[#allocation11 + $0x48] sm:$0xff]
    %v1130 = vld [vmem:[#allocation11 + $0x50] sm:$0xff]
    %v1131 = vld [vmem:[#allocation11 + $0x58] sm:$0xff]
    %v1132 = vld [vmem:[#allocation11 + $0x60] sm:$0xff]
    %v1133 = vld [vmem:[#allocation11 + $0x68] sm:$0xff]
    %v1134 = vld [vmem:[#allocation11 + $0x70] sm:$0xff]
    %v1135 = vld [vmem:[#allocation11 + $0x78] sm:$0xff]
    %1136 = vmatprep.subr.mxu0 0.0
    %1137 = vmatpush1.msra.mxu0 %v1135
    %1138 = vmatprep.subr.mxu0 0.0
    %1139 = vmatpush1.msra.mxu0 %v1134
    %1140 = vmatprep.subr.mxu0 0.0
    %1141 = vmatpush1.msra.mxu0 %v1133
    %1142 = vmatprep.subr.mxu0 0.0
    %1143 = vmatpush1.msra.mxu0 %v1132
    %1144 = vmatprep.subr.mxu0 0.0
    %1145 = vmatpush1.msra.mxu0 %v1131
    %1146 = vmatprep.subr.mxu0 0.0
    %1147 = vmatpush1.msra.mxu0 %v1130
    %1148 = vmatprep.subr.mxu0 0.0
    %1149 = vmatpush1.msra.mxu0 %v1129
    %1150 = vmatprep.subr.mxu0 0.0
    %1151 = vmatpush1.msra.mxu0 %v1128
    %1152 = vmatprep.subr.mxu0 0.0
    %1153 = vmatpush1.msra.mxu0 %v1127
    %1154 = vmatprep.subr.mxu0 0.0
    %1155 = vmatpush1.msra.mxu0 %v1126
    %1156 = vmatprep.subr.mxu0 0.0
    %1157 = vmatpush1.msra.mxu0 %v1125
    %1158 = vmatprep.subr.mxu0 0.0
    %1159 = vmatpush1.msra.mxu0 %v1124
    %1160 = vmatprep.subr.mxu0 0.0
    %1161 = vmatpush1.msra.mxu0 %v1123
    %1162 = vmatprep.subr.mxu0 0.0
    %1163 = vmatpush1.msra.mxu0 %v1122
    %1164 = vmatprep.subr.mxu0 0.0
    %1165 = vmatpush1.msra.mxu0 %v1121
    %1166 = vmatprep.subr.mxu0 0.0
    %1167 = vmatpush1.msra.mxu0 %v1120
    %1168 = vmatprep.subr.mxu0 0.0
    %1169 = vmatpush2.msra.mxu0 0.0
    %1170 = vmatprep.subr.mxu0 0.0
    %1171 = vmatpush2.msra.mxu0 0.0
    %1172 = vmatprep.subr.mxu0 0.0
    %1173 = vmatpush2.msra.mxu0 0.0
    %1174 = vmatprep.subr.mxu0 0.0
    %1175 = vmatpush2.msra.mxu0 0.0
    %1176 = vmatprep.subr.mxu0 0.0
    %1177 = vmatpush2.msra.mxu0 0.0
    %1178 = vmatprep.subr.mxu0 0.0
    %1179 = vmatpush2.msra.mxu0 0.0
    %1180 = vmatprep.subr.mxu0 0.0
    %1181 = vmatpush2.msra.mxu0 0.0
    %1182 = vmatprep.subr.mxu0 0.0
    %1183 = vmatpush2.msra.mxu0 0.0
    %1184 = vmatprep.subr.mxu0 0.0
    %1185 = vmatpush2.msra.mxu0 0.0
    %1186 = vmatprep.subr.mxu0 0.0
    %1187 = vmatpush2.msra.mxu0 0.0
    %1188 = vmatprep.subr.mxu0 0.0
    %1189 = vmatpush2.msra.mxu0 0.0
    %1190 = vmatprep.subr.mxu0 0.0
    %1191 = vmatpush2.msra.mxu0 0.0
    %1192 = vmatprep.subr.mxu0 0.0
    %1193 = vmatpush2.msra.mxu0 0.0
    %1194 = vmatprep.subr.mxu0 0.0
    %1195 = vmatpush2.msra.mxu0 0.0
    %1196 = vmatprep.subr.mxu0 0.0
    %1197 = vmatpush2.msra.mxu0 0.0
    %1198 = vmatprep.subr.mxu0 0.0
    %1199 = vmatpush2.msra.mxu0 0.0
    %1200 = vmatprep.mubr.f32.mxu0 0.0
    %1201 = vmatmul.mubr.f32.gmra.mxu0 %v1116
    %v1202 = vpop.f32.mrf.mxu0
    %v1203 = vadd.f32 %v619, %v1202
    %v1204 = vpop.f32.mrf.mxu0
    %1205 = vmatprep.mubr.f32.mxu0 0.0
    %1206 = vmatmul.mubr.f32.gmra.mxu0 %v1117
    %v1207 = vpop.f32.mrf.mxu0
    %v1208 = vadd.f32 %v619, %v1207
    %v1209 = vpop.f32.mrf.mxu0
    %1210 = vmatprep.mubr.f32.mxu0 0.0
    %1211 = vmatmul.mubr.f32.gmra.mxu0 %v1118
    %v1212 = vpop.f32.mrf.mxu0
    %v1213 = vadd.f32 %v619, %v1212
    %v1214 = vpop.f32.mrf.mxu0
    %1215 = vmatprep.mubr.f32.mxu0 0.0
    %1216 = vmatmul.mubr.f32.gmra.mxu0 %v1119
    %v1217 = vpop.f32.mrf.mxu0
    %v1218 = vadd.f32 %v619, %v1217
    %v1219 = vpop.f32.mrf.mxu0
    %1220 = vdwg.mxu0
    %1221 = vst [vmem:[#allocation2 + $0x8] sm:$0xff] %v1203
    %1222 = vst [vmem:[#allocation2 + $0x10] sm:$0xff] %v1208
    %1223 = vst [vmem:[#allocation2 + $0x28] sm:$0xff] %v1213
    %1224 = vst [vmem:[#allocation2 + $0x30] sm:$0xff] %v1218
    %v1225 = vld [vmem:[#allocation2 + $0x7] sm:$0xff]
    %v1226 = vld [vmem:[#allocation2 + $0xf] sm:$0xff]
    %v1227 = vld [vmem:[#allocation2 + $0x27] sm:$0xff]
    %v1228 = vld [vmem:[#allocation2 + $0x2f] sm:$0xff]
    %v1229 = vld [vmem:[#allocation2 + $0x9] sm:$0xff]
    %v1230 = vld [vmem:[#allocation2 + $0x11] sm:$0xff]
    %v1231 = vld [vmem:[#allocation2 + $0x29] sm:$0xff]
    %v1232 = vld [vmem:[#allocation2 + $0x31] sm:$0xff]
    %1233 = vrot.lane.b32.xlu0 %v1203, 8
    %v1234 = vpop.permute.xlu0 %1233
    %1235 = vrot.lane.b32.xlu0 %v1208, 8
    %v1236 = vpop.permute.xlu0 %1235
    %1237 = vrot.lane.b32.xlu0 %v1213, 8
    %v1238 = vpop.permute.xlu0 %1237
    %1239 = vrot.lane.b32.xlu0 %v1218, 8
    %v1240 = vpop.permute.xlu0 %1239
    %v1241 = vadd.f32 %v1225, %v1234
    %v1242 = vadd.f32 %v1226, %v1236
    %v1243 = vadd.f32 %v1227, %v1238
    %v1244 = vadd.f32 %v1228, %v1240
    %1245 = vrot.lane.b32.xlu0 %v1229, 16
    %v1246 = vpop.permute.xlu0 %1245
    %1247 = vrot.lane.b32.xlu0 %v1230, 16
    %v1248 = vpop.permute.xlu0 %1247
    %1249 = vrot.lane.b32.xlu0 %v1231, 16
    %v1250 = vpop.permute.xlu0 %1249
    %1251 = vrot.lane.b32.xlu0 %v1232, 16
    %v1252 = vpop.permute.xlu0 %1251
    %v1253 = vadd.f32 %v1241, %v1246
    %v1254 = vadd.f32 %v1242, %v1248
    %v1255 = vadd.f32 %v1243, %v1250
    %v1256 = vadd.f32 %v1244, %v1252
    %v1257 = vld [vmem:[#allocation8] sm:$0xff]
    %v1258 = vld [vmem:[#allocation8 + $0x8] sm:$0xff]
    %v1259 = vld [vmem:[#allocation8 + $0x10] sm:$0xff]
    %v1260 = vld [vmem:[#allocation8 + $0x18] sm:$0xff]
    %v1261 = vld [vmem:[#allocation8 + $0x20] sm:$0xff]
    %v1262 = vld [vmem:[#allocation8 + $0x28] sm:$0xff]
    %v1263 = vld [vmem:[#allocation8 + $0x30] sm:$0xff]
    %v1264 = vld [vmem:[#allocation8 + $0x38] sm:$0xff]
    %v1265 = vld [vmem:[#allocation8 + $0x40] sm:$0xff]
    %v1266 = vld [vmem:[#allocation8 + $0x48] sm:$0xff]
    %v1267 = vld [vmem:[#allocation8 + $0x50] sm:$0xff]
    %v1268 = vld [vmem:[#allocation8 + $0x58] sm:$0xff]
    %v1269 = vld [vmem:[#allocation8 + $0x60] sm:$0xff]
    %v1270 = vld [vmem:[#allocation8 + $0x68] sm:$0xff]
    %v1271 = vld [vmem:[#allocation8 + $0x70] sm:$0xff]
    %v1272 = vld [vmem:[#allocation8 + $0x78] sm:$0xff]
    %1273 = vmatprep.subr.mxu0 0.0
    %1274 = vmatpush1.msra.mxu0 %v1272
    %1275 = vmatprep.subr.mxu0 0.0
    %1276 = vmatpush1.msra.mxu0 %v1271
    %1277 = vmatprep.subr.mxu0 0.0
    %1278 = vmatpush1.msra.mxu0 %v1270
    %1279 = vmatprep.subr.mxu0 0.0
    %1280 = vmatpush1.msra.mxu0 %v1269
    %1281 = vmatprep.subr.mxu0 0.0
    %1282 = vmatpush1.msra.mxu0 %v1268
    %1283 = vmatprep.subr.mxu0 0.0
    %1284 = vmatpush1.msra.mxu0 %v1267
    %1285 = vmatprep.subr.mxu0 0.0
    %1286 = vmatpush1.msra.mxu0 %v1266
    %1287 = vmatprep.subr.mxu0 0.0
    %1288 = vmatpush1.msra.mxu0 %v1265
    %1289 = vmatprep.subr.mxu0 0.0
    %1290 = vmatpush1.msra.mxu0 %v1264
    %1291 = vmatprep.subr.mxu0 0.0
    %1292 = vmatpush1.msra.mxu0 %v1263
    %1293 = vmatprep.subr.mxu0 0.0
    %1294 = vmatpush1.msra.mxu0 %v1262
    %1295 = vmatprep.subr.mxu0 0.0
    %1296 = vmatpush1.msra.mxu0 %v1261
    %1297 = vmatprep.subr.mxu0 0.0
    %1298 = vmatpush1.msra.mxu0 %v1260
    %1299 = vmatprep.subr.mxu0 0.0
    %1300 = vmatpush1.msra.mxu0 %v1259
    %1301 = vmatprep.subr.mxu0 0.0
    %1302 = vmatpush1.msra.mxu0 %v1258
    %1303 = vmatprep.subr.mxu0 0.0
    %1304 = vmatpush1.msra.mxu0 %v1257
    %1305 = vmatprep.subr.mxu0 0.0
    %1306 = vmatpush2.msra.mxu0 0.0
    %1307 = vmatprep.subr.mxu0 0.0
    %1308 = vmatpush2.msra.mxu0 0.0
    %1309 = vmatprep.subr.mxu0 0.0
    %1310 = vmatpush2.msra.mxu0 0.0
    %1311 = vmatprep.subr.mxu0 0.0
    %1312 = vmatpush2.msra.mxu0 0.0
    %1313 = vmatprep.subr.mxu0 0.0
    %1314 = vmatpush2.msra.mxu0 0.0
    %1315 = vmatprep.subr.mxu0 0.0
    %1316 = vmatpush2.msra.mxu0 0.0
    %1317 = vmatprep.subr.mxu0 0.0
    %1318 = vmatpush2.msra.mxu0 0.0
    %1319 = vmatprep.subr.mxu0 0.0
    %1320 = vmatpush2.msra.mxu0 0.0
    %1321 = vmatprep.subr.mxu0 0.0
    %1322 = vmatpush2.msra.mxu0 0.0
    %1323 = vmatprep.subr.mxu0 0.0
    %1324 = vmatpush2.msra.mxu0 0.0
    %1325 = vmatprep.subr.mxu0 0.0
    %1326 = vmatpush2.msra.mxu0 0.0
    %1327 = vmatprep.subr.mxu0 0.0
    %1328 = vmatpush2.msra.mxu0 0.0
    %1329 = vmatprep.subr.mxu0 0.0
    %1330 = vmatpush2.msra.mxu0 0.0
    %1331 = vmatprep.subr.mxu0 0.0
    %1332 = vmatpush2.msra.mxu0 0.0
    %1333 = vmatprep.subr.mxu0 0.0
    %1334 = vmatpush2.msra.mxu0 0.0
    %1335 = vmatprep.subr.mxu0 0.0
    %1336 = vmatpush2.msra.mxu0 0.0
    %1337 = vmatprep.mubr.f32.mxu0 0.0
    %1338 = vmatmul.mubr.f32.gmra.mxu0 %v1253
    %v1339 = vpop.f32.mrf.mxu0
    %v1340 = vadd.f32 %v281, %v1339
    %v1341 = vpop.f32.mrf.mxu0
    %1342 = vmatprep.mubr.f32.mxu0 0.0
    %1343 = vmatmul.mubr.f32.gmra.mxu0 %v1254
    %v1344 = vpop.f32.mrf.mxu0
    %v1345 = vadd.f32 %v281, %v1344
    %v1346 = vpop.f32.mrf.mxu0
    %1347 = vmatprep.mubr.f32.mxu0 0.0
    %1348 = vmatmul.mubr.f32.gmra.mxu0 %v1255
    %v1349 = vpop.f32.mrf.mxu0
    %v1350 = vadd.f32 %v281, %v1349
    %v1351 = vpop.f32.mrf.mxu0
    %1352 = vmatprep.mubr.f32.mxu0 0.0
    %1353 = vmatmul.mubr.f32.gmra.mxu0 %v1256
    %v1354 = vpop.f32.mrf.mxu0
    %v1355 = vadd.f32 %v281, %v1354
    %v1356 = vpop.f32.mrf.mxu0
    %1357 = vdwg.mxu0
    %v1358 = vmax.f32 %v1340, 0.0
    %v1359 = vmax.f32 %v1345, 0.0
    %v1360 = vmax.f32 %v1350, 0.0
    %v1361 = vmax.f32 %v1355, 0.0
    %1362 = vadd.xlane.f32.xlu0 %v1358
    %v1363 = vpop.xlane.xlu0 %1362
    %1364 = vadd.xlane.f32.xlu0 %v1359
    %v1365 = vpop.xlane.xlu0 %1364
    %1366 = vadd.xlane.f32.xlu0 %v1360
    %v1367 = vpop.xlane.xlu0 %1366
    %1368 = vadd.xlane.f32.xlu0 %v1361
    %v1369 = vpop.xlane.xlu0 %1368
    %v1370 = vmul.f32 %v1363, 0.125
    %v1371 = vmul.f32 %v1365, 0.125
    %v1372 = vmul.f32 %v1367, 0.125
    %v1373 = vmul.f32 %v1369, 0.125
    %v1374 = vsub.f32 %v1358, %v1370
    %v1375 = vsub.f32 %v1359, %v1371
    %v1376 = vsub.f32 %v1360, %v1372
    %v1377 = vsub.f32 %v1361, %v1373
    %v1378 = vmul.f32 %v1374, %v105
    %v1379 = vmul.f32 %v1375, %v105
    %v1380 = vmul.f32 %v1376, %v105
    %v1381 = vmul.f32 %v1377, %v105
    %v1382 = vmul.f32 %v1378, %v1378
    %v1383 = vmul.f32 %v1379, %v1379
    %v1384 = vmul.f32 %v1380, %v1380
    %v1385 = vmul.f32 %v1381, %v1381
    %1386 = vadd.xlane.f32.xlu0 %v1382
    %v1387 = vpop.xlane.xlu0 %1386
    %1388 = vadd.xlane.f32.xlu0 %v1383
    %v1389 = vpop.xlane.xlu0 %1388
    %1390 = vadd.xlane.f32.xlu0 %v1384
    %v1391 = vpop.xlane.xlu0 %1390
    %1392 = vadd.xlane.f32.xlu0 %v1385
    %v1393 = vpop.xlane.xlu0 %1392
    %v1394 = vmul.f32 %v1387, 0.125
    %v1395 = vmul.f32 %v1389, 0.125
    %v1396 = vmul.f32 %v1391, 0.125
    %v1397 = vmul.f32 %v1393, 0.125
    %v1398 = vadd.f32 %v1394, 1e-05
    %v1399 = vadd.f32 %v1395, 1e-05
    %v1400 = vadd.f32 %v1396, 1e-05
    %v1401 = vadd.f32 %v1397, 1e-05
    %v1402 = vrsqrt.pop %v1398
    %v1403 = vrsqrt.pop %v1399
    %v1404 = vrsqrt.pop %v1400
    %v1405 = vrsqrt.pop %v1401
    %v1406 = vmul.f32 %v1378, %v1402
    %v1407 = vmul.f32 %v1379, %v1403
    %v1408 = vmul.f32 %v1380, %v1404
    %v1409 = vmul.f32 %v1381, %v1405
    %1410 = vst [vmem:[#allocation2 + $0x8] sm:$0xff] %v1406
    %1411 = vst [vmem:[#allocation2 + $0x10] sm:$0xff] %v1407
    %1412 = vst [vmem:[#allocation2 + $0x28] sm:$0xff] %v1408
    %1413 = vst [vmem:[#allocation2 + $0x30] sm:$0xff] %v1409
    %v1414 = vld [vmem:[#allocation2 + $0x7] sm:$0xff]
    %v1415 = vld [vmem:[#allocation2 + $0xf] sm:$0xff]
    %v1416 = vld [vmem:[#allocation2 + $0x27] sm:$0xff]
    %v1417 = vld [vmem:[#allocation2 + $0x2f] sm:$0xff]
    %v1418 = vld [vmem:[#allocation2 + $0x9] sm:$0xff]
    %v1419 = vld [vmem:[#allocation2 + $0x11] sm:$0xff]
    %v1420 = vld [vmem:[#allocation2 + $0x29] sm:$0xff]
    %v1421 = vld [vmem:[#allocation2 + $0x31] sm:$0xff]
    %1422 = vrot.lane.b32.xlu0 %v1406, 8
    %v1423 = vpop.permute.xlu0 %1422
    %1424 = vrot.lane.b32.xlu0 %v1407, 8
    %v1425 = vpop.permute.xlu0 %1424
    %1426 = vrot.lane.b32.xlu0 %v1408, 8
    %v1427 = vpop.permute.xlu0 %1426
    %1428 = vrot.lane.b32.xlu0 %v1409, 8
    %v1429 = vpop.permute.xlu0 %1428
    %v1430 = vadd.f32 %v1414, %v1423
    %v1431 = vadd.f32 %v1415, %v1425
    %v1432 = vadd.f32 %v1416, %v1427
    %v1433 = vadd.f32 %v1417, %v1429
    %1434 = vrot.lane.b32.xlu0 %v1418, 16
    %v1435 = vpop.permute.xlu0 %1434
    %1436 = vrot.lane.b32.xlu0 %v1419, 16
    %v1437 = vpop.permute.xlu0 %1436
    %1438 = vrot.lane.b32.xlu0 %v1420, 16
    %v1439 = vpop.permute.xlu0 %1438
    %1440 = vrot.lane.b32.xlu0 %v1421, 16
    %v1441 = vpop.permute.xlu0 %1440
    %v1442 = vadd.f32 %v1430, %v1435
    %v1443 = vadd.f32 %v1431, %v1437
    %v1444 = vadd.f32 %v1432, %v1439
    %v1445 = vadd.f32 %v1433, %v1441
    %v1446 = vld [vmem:[#allocation9] sm:$0xff]
    %v1447 = vld [vmem:[#allocation9 + $0x8] sm:$0xff]
    %v1448 = vld [vmem:[#allocation9 + $0x10] sm:$0xff]
    %v1449 = vld [vmem:[#allocation9 + $0x18] sm:$0xff]
    %v1450 = vld [vmem:[#allocation9 + $0x20] sm:$0xff]
    %v1451 = vld [vmem:[#allocation9 + $0x28] sm:$0xff]
    %v1452 = vld [vmem:[#allocation9 + $0x30] sm:$0xff]
    %v1453 = vld [vmem:[#allocation9 + $0x38] sm:$0xff]
    %v1454 = vld [vmem:[#allocation9 + $0x40] sm:$0xff]
    %v1455 = vld [vmem:[#allocation9 + $0x48] sm:$0xff]
    %v1456 = vld [vmem:[#allocation9 + $0x50] sm:$0xff]
    %v1457 = vld [vmem:[#allocation9 + $0x58] sm:$0xff]
    %v1458 = vld [vmem:[#allocation9 + $0x60] sm:$0xff]
    %v1459 = vld [vmem:[#allocation9 + $0x68] sm:$0xff]
    %v1460 = vld [vmem:[#allocation9 + $0x70] sm:$0xff]
    %v1461 = vld [vmem:[#allocation9 + $0x78] sm:$0xff]
    %1462 = vmatprep.subr.mxu0 0.0
    %1463 = vmatpush1.msra.mxu0 %v1461
    %1464 = vmatprep.subr.mxu0 0.0
    %1465 = vmatpush1.msra.mxu0 %v1460
    %1466 = vmatprep.subr.mxu0 0.0
    %1467 = vmatpush1.msra.mxu0 %v1459
    %1468 = vmatprep.subr.mxu0 0.0
    %1469 = vmatpush1.msra.mxu0 %v1458
    %1470 = vmatprep.subr.mxu0 0.0
    %1471 = vmatpush1.msra.mxu0 %v1457
    %1472 = vmatprep.subr.mxu0 0.0
    %1473 = vmatpush1.msra.mxu0 %v1456
    %1474 = vmatprep.subr.mxu0 0.0
    %1475 = vmatpush1.msra.mxu0 %v1455
    %1476 = vmatprep.subr.mxu0 0.0
    %1477 = vmatpush1.msra.mxu0 %v1454
    %1478 = vmatprep.subr.mxu0 0.0
    %1479 = vmatpush1.msra.mxu0 %v1453
    %1480 = vmatprep.subr.mxu0 0.0
    %1481 = vmatpush1.msra.mxu0 %v1452
    %1482 = vmatprep.subr.mxu0 0.0
    %1483 = vmatpush1.msra.mxu0 %v1451
    %1484 = vmatprep.subr.mxu0 0.0
    %1485 = vmatpush1.msra.mxu0 %v1450
    %1486 = vmatprep.subr.mxu0 0.0
    %1487 = vmatpush1.msra.mxu0 %v1449
    %1488 = vmatprep.subr.mxu0 0.0
    %1489 = vmatpush1.msra.mxu0 %v1448
    %1490 = vmatprep.subr.mxu0 0.0
    %1491 = vmatpush1.msra.mxu0 %v1447
    %1492 = vmatprep.subr.mxu0 0.0
    %1493 = vmatpush1.msra.mxu0 %v1446
    %1494 = vmatprep.subr.mxu0 0.0
    %1495 = vmatpush2.msra.mxu0 0.0
    %1496 = vmatprep.subr.mxu0 0.0
    %1497 = vmatpush2.msra.mxu0 0.0
    %1498 = vmatprep.subr.mxu0 0.0
    %1499 = vmatpush2.msra.mxu0 0.0
    %1500 = vmatprep.subr.mxu0 0.0
    %1501 = vmatpush2.msra.mxu0 0.0
    %1502 = vmatprep.subr.mxu0 0.0
    %1503 = vmatpush2.msra.mxu0 0.0
    %1504 = vmatprep.subr.mxu0 0.0
    %1505 = vmatpush2.msra.mxu0 0.0
    %1506 = vmatprep.subr.mxu0 0.0
    %1507 = vmatpush2.msra.mxu0 0.0
    %1508 = vmatprep.subr.mxu0 0.0
    %1509 = vmatpush2.msra.mxu0 0.0
    %1510 = vmatprep.subr.mxu0 0.0
    %1511 = vmatpush2.msra.mxu0 0.0
    %1512 = vmatprep.subr.mxu0 0.0
    %1513 = vmatpush2.msra.mxu0 0.0
    %1514 = vmatprep.subr.mxu0 0.0
    %1515 = vmatpush2.msra.mxu0 0.0
    %1516 = vmatprep.subr.mxu0 0.0
    %1517 = vmatpush2.msra.mxu0 0.0
    %1518 = vmatprep.subr.mxu0 0.0
    %1519 = vmatpush2.msra.mxu0 0.0
    %1520 = vmatprep.subr.mxu0 0.0
    %1521 = vmatpush2.msra.mxu0 0.0
    %1522 = vmatprep.subr.mxu0 0.0
    %1523 = vmatpush2.msra.mxu0 0.0
    %1524 = vmatprep.subr.mxu0 0.0
    %1525 = vmatpush2.msra.mxu0 0.0
    %1526 = vmatprep.mubr.f32.mxu0 0.0
    %1527 = vmatmul.mubr.f32.gmra.mxu0 %v1442
    %v1528 = vpop.f32.mrf.mxu0
    %v1529 = vadd.f32 %v476, %v1528
    %v1530 = vpop.f32.mrf.mxu0
    %1531 = vmatprep.mubr.f32.mxu0 0.0
    %1532 = vmatmul.mubr.f32.gmra.mxu0 %v1443
    %v1533 = vpop.f32.mrf.mxu0
    %v1534 = vadd.f32 %v476, %v1533
    %v1535 = vpop.f32.mrf.mxu0
    %1536 = vmatprep.mubr.f32.mxu0 0.0
    %1537 = vmatmul.mubr.f32.gmra.mxu0 %v1444
    %v1538 = vpop.f32.mrf.mxu0
    %v1539 = vadd.f32 %v476, %v1538
    %v1540 = vpop.f32.mrf.mxu0
    %1541 = vmatprep.mubr.f32.mxu0 0.0
    %1542 = vmatmul.mubr.f32.gmra.mxu0 %v1445
    %v1543 = vpop.f32.mrf.mxu0
    %v1544 = vadd.f32 %v476, %v1543
    %v1545 = vpop.f32.mrf.mxu0
    %1546 = vdwg.mxu0
    %1547 = vst [vmem:[#allocation2 + $0x8] sm:$0xff] %v1529
    %1548 = vst [vmem:[#allocation2 + $0x10] sm:$0xff] %v1534
    %1549 = vst [vmem:[#allocation2 + $0x28] sm:$0xff] %v1539
    %1550 = vst [vmem:[#allocation2 + $0x30] sm:$0xff] %v1544
    %v1551 = vld [vmem:[#allocation2 + $0x6] sm:$0xff]
    %v1552 = vld [vmem:[#allocation2 + $0xe] sm:$0xff]
    %v1553 = vld [vmem:[#allocation2 + $0x26] sm:$0xff]
    %v1554 = vld [vmem:[#allocation2 + $0x2e] sm:$0xff]
    %v1555 = vld [vmem:[#allocation2 + $0xa] sm:$0xff]
    %v1556 = vld [vmem:[#allocation2 + $0x12] sm:$0xff]
    %v1557 = vld [vmem:[#allocation2 + $0x2a] sm:$0xff]
    %v1558 = vld [vmem:[#allocation2 + $0x32] sm:$0xff]
    %1559 = vrot.lane.b32.xlu0 %v1529, 8
    %v1560 = vpop.permute.xlu0 %1559
    %1561 = vrot.lane.b32.xlu0 %v1534, 8
    %v1562 = vpop.permute.xlu0 %1561
    %1563 = vrot.lane.b32.xlu0 %v1539, 8
    %v1564 = vpop.permute.xlu0 %1563
    %1565 = vrot.lane.b32.xlu0 %v1544, 8
    %v1566 = vpop.permute.xlu0 %1565
    %v1567 = vadd.f32 %v1551, %v1560
    %v1568 = vadd.f32 %v1552, %v1562
    %v1569 = vadd.f32 %v1553, %v1564
    %v1570 = vadd.f32 %v1554, %v1566
    %1571 = vrot.lane.b32.xlu0 %v1555, 16
    %v1572 = vpop.permute.xlu0 %1571
    %1573 = vrot.lane.b32.xlu0 %v1556, 16
    %v1574 = vpop.permute.xlu0 %1573
    %1575 = vrot.lane.b32.xlu0 %v1557, 16
    %v1576 = vpop.permute.xlu0 %1575
    %1577 = vrot.lane.b32.xlu0 %v1558, 16
    %v1578 = vpop.permute.xlu0 %1577
    %v1579 = vadd.f32 %v1567, %v1572
    %v1580 = vadd.f32 %v1568, %v1574
    %v1581 = vadd.f32 %v1569, %v1576
    %v1582 = vadd.f32 %v1570, %v1578
    %v1583 = vld [vmem:[#allocation11] sm:$0xff]
    %v1584 = vld [vmem:[#allocation11 + $0x8] sm:$0xff]
    %v1585 = vld [vmem:[#allocation11 + $0x10] sm:$0xff]
    %v1586 = vld [vmem:[#allocation11 + $0x18] sm:$0xff]
    %v1587 = vld [vmem:[#allocation11 + $0x20] sm:$0xff]
    %v1588 = vld [vmem:[#allocation11 + $0x28] sm:$0xff]
    %v1589 = vld [vmem:[#allocation11 + $0x30] sm:$0xff]
    %v1590 = vld [vmem:[#allocation11 + $0x38] sm:$0xff]
    %v1591 = vld [vmem:[#allocation11 + $0x40] sm:$0xff]
    %v1592 = vld [vmem:[#allocation11 + $0x48] sm:$0xff]
    %v1593 = vld [vmem:[#allocation11 + $0x50] sm:$0xff]
    %v1594 = vld [vmem:[#allocation11 + $0x58] sm:$0xff]
    %v1595 = vld [vmem:[#allocation11 + $0x60] sm:$0xff]
    %v1596 = vld [vmem:[#allocation11 + $0x68] sm:$0xff]
    %v1597 = vld [vmem:[#allocation11 + $0x70] sm:$0xff]
    %v1598 = vld [vmem:[#allocation11 + $0x78] sm:$0xff]
    %1599 = vmatprep.subr.mxu0 0.0
    %1600 = vmatpush1.msra.mxu0 %v1598
    %1601 = vmatprep.subr.mxu0 0.0
    %1602 = vmatpush1.msra.mxu0 %v1597
    %1603 = vmatprep.subr.mxu0 0.0
    %1604 = vmatpush1.msra.mxu0 %v1596
    %1605 = vmatprep.subr.mxu0 0.0
    %1606 = vmatpush1.msra.mxu0 %v1595
    %1607 = vmatprep.subr.mxu0 0.0
    %1608 = vmatpush1.msra.mxu0 %v1594
    %1609 = vmatprep.subr.mxu0 0.0
    %1610 = vmatpush1.msra.mxu0 %v1593
    %1611 = vmatprep.subr.mxu0 0.0
    %1612 = vmatpush1.msra.mxu0 %v1592
    %1613 = vmatprep.subr.mxu0 0.0
    %1614 = vmatpush1.msra.mxu0 %v1591
    %1615 = vmatprep.subr.mxu0 0.0
    %1616 = vmatpush1.msra.mxu0 %v1590
    %1617 = vmatprep.subr.mxu0 0.0
    %1618 = vmatpush1.msra.mxu0 %v1589
    %1619 = vmatprep.subr.mxu0 0.0
    %1620 = vmatpush1.msra.mxu0 %v1588
    %1621 = vmatprep.subr.mxu0 0.0
    %1622 = vmatpush1.msra.mxu0 %v1587
    %1623 = vmatprep.subr.mxu0 0.0
    %1624 = vmatpush1.msra.mxu0 %v1586
    %1625 = vmatprep.subr.mxu0 0.0
    %1626 = vmatpush1.msra.mxu0 %v1585
    %1627 = vmatprep.subr.mxu0 0.0
    %1628 = vmatpush1.msra.mxu0 %v1584
    %1629 = vmatprep.subr.mxu0 0.0
    %1630 = vmatpush1.msra.mxu0 %v1583
    %1631 = vmatprep.subr.mxu0 0.0
    %1632 = vmatpush2.msra.mxu0 0.0
    %1633 = vmatprep.subr.mxu0 0.0
    %1634 = vmatpush2.msra.mxu0 0.0
    %1635 = vmatprep.subr.mxu0 0.0
    %1636 = vmatpush2.msra.mxu0 0.0
    %1637 = vmatprep.subr.mxu0 0.0
    %1638 = vmatpush2.msra.mxu0 0.0
    %1639 = vmatprep.subr.mxu0 0.0
    %1640 = vmatpush2.msra.mxu0 0.0
    %1641 = vmatprep.subr.mxu0 0.0
    %1642 = vmatpush2.msra.mxu0 0.0
    %1643 = vmatprep.subr.mxu0 0.0
    %1644 = vmatpush2.msra.mxu0 0.0
    %1645 = vmatprep.subr.mxu0 0.0
    %1646 = vmatpush2.msra.mxu0 0.0
    %1647 = vmatprep.subr.mxu0 0.0
    %1648 = vmatpush2.msra.mxu0 0.0
    %1649 = vmatprep.subr.mxu0 0.0
    %1650 = vmatpush2.msra.mxu0 0.0
    %1651 = vmatprep.subr.mxu0 0.0
    %1652 = vmatpush2.msra.mxu0 0.0
    %1653 = vmatprep.subr.mxu0 0.0
    %1654 = vmatpush2.msra.mxu0 0.0
    %1655 = vmatprep.subr.mxu0 0.0
    %1656 = vmatpush2.msra.mxu0 0.0
    %1657 = vmatprep.subr.mxu0 0.0
    %1658 = vmatpush2.msra.mxu0 0.0
    %1659 = vmatprep.subr.mxu0 0.0
    %1660 = vmatpush2.msra.mxu0 0.0
    %1661 = vmatprep.subr.mxu0 0.0
    %1662 = vmatpush2.msra.mxu0 0.0
    %1663 = vmatprep.mubr.f32.mxu0 0.0
    %1664 = vmatmul.mubr.f32.gmra.mxu0 %v1579
    %v1665 = vpop.f32.mrf.mxu0
    %v1666 = vadd.f32 %v619, %v1665
    %v1667 = vpop.f32.mrf.mxu0
    %1668 = vmatprep.mubr.f32.mxu0 0.0
    %1669 = vmatmul.mubr.f32.gmra.mxu0 %v1580
    %v1670 = vpop.f32.mrf.mxu0
    %v1671 = vadd.f32 %v619, %v1670
    %v1672 = vpop.f32.mrf.mxu0
    %1673 = vmatprep.mubr.f32.mxu0 0.0
    %1674 = vmatmul.mubr.f32.gmra.mxu0 %v1581
    %v1675 = vpop.f32.mrf.mxu0
    %v1676 = vadd.f32 %v619, %v1675
    %v1677 = vpop.f32.mrf.mxu0
    %1678 = vmatprep.mubr.f32.mxu0 0.0
    %1679 = vmatmul.mubr.f32.gmra.mxu0 %v1582
    %v1680 = vpop.f32.mrf.mxu0
    %v1681 = vadd.f32 %v619, %v1680
    %v1682 = vpop.f32.mrf.mxu0
    %1683 = vdwg.mxu0
    %1684 = vst [vmem:[#allocation2 + $0x8] sm:$0xff] %v1666
    %1685 = vst [vmem:[#allocation2 + $0x10] sm:$0xff] %v1671
    %1686 = vst [vmem:[#allocation2 + $0x28] sm:$0xff] %v1676
    %1687 = vst [vmem:[#allocation2 + $0x30] sm:$0xff] %v1681
    %v1688 = vld [vmem:[#allocation2 + $0x7] sm:$0xff]
    %v1689 = vld [vmem:[#allocation2 + $0xf] sm:$0xff]
    %v1690 = vld [vmem:[#allocation2 + $0x27] sm:$0xff]
    %v1691 = vld [vmem:[#allocation2 + $0x2f] sm:$0xff]
    %v1692 = vld [vmem:[#allocation2 + $0x9] sm:$0xff]
    %v1693 = vld [vmem:[#allocation2 + $0x11] sm:$0xff]
    %v1694 = vld [vmem:[#allocation2 + $0x29] sm:$0xff]
    %v1695 = vld [vmem:[#allocation2 + $0x31] sm:$0xff]
    %1696 = vrot.lane.b32.xlu0 %v1666, 8
    %v1697 = vpop.permute.xlu0 %1696
    %1698 = vrot.lane.b32.xlu0 %v1671, 8
    %v1699 = vpop.permute.xlu0 %1698
    %1700 = vrot.lane.b32.xlu0 %v1676, 8
    %v1701 = vpop.permute.xlu0 %1700
    %1702 = vrot.lane.b32.xlu0 %v1681, 8
    %v1703 = vpop.permute.xlu0 %1702
    %v1704 = vadd.f32 %v1688, %v1697
    %v1705 = vadd.f32 %v1689, %v1699
    %v1706 = vadd.f32 %v1690, %v1701
    %v1707 = vadd.f32 %v1691, %v1703
    %1708 = vrot.lane.b32.xlu0 %v1692, 16
    %v1709 = vpop.permute.xlu0 %1708
    %1710 = vrot.lane.b32.xlu0 %v1693, 16
    %v1711 = vpop.permute.xlu0 %1710
    %1712 = vrot.lane.b32.xlu0 %v1694, 16
    %v1713 = vpop.permute.xlu0 %1712
    %1714 = vrot.lane.b32.xlu0 %v1695, 16
    %v1715 = vpop.permute.xlu0 %1714
    %v1716 = vadd.f32 %v1704, %v1709
    %v1717 = vadd.f32 %v1705, %v1711
    %v1718 = vadd.f32 %v1706, %v1713
    %v1719 = vadd.f32 %v1707, %v1715
    %v1720 = vld [vmem:[#allocation8] sm:$0xff]
    %v1721 = vld [vmem:[#allocation8 + $0x8] sm:$0xff]
    %v1722 = vld [vmem:[#allocation8 + $0x10] sm:$0xff]
    %v1723 = vld [vmem:[#allocation8 + $0x18] sm:$0xff]
    %v1724 = vld [vmem:[#allocation8 + $0x20] sm:$0xff]
    %v1725 = vld [vmem:[#allocation8 + $0x28] sm:$0xff]
    %v1726 = vld [vmem:[#allocation8 + $0x30] sm:$0xff]
    %v1727 = vld [vmem:[#allocation8 + $0x38] sm:$0xff]
    %v1728 = vld [vmem:[#allocation8 + $0x40] sm:$0xff]
    %v1729 = vld [vmem:[#allocation8 + $0x48] sm:$0xff]
    %v1730 = vld [vmem:[#allocation8 + $0x50] sm:$0xff]
    %v1731 = vld [vmem:[#allocation8 + $0x58] sm:$0xff]
    %v1732 = vld [vmem:[#allocation8 + $0x60] sm:$0xff]
    %v1733 = vld [vmem:[#allocation8 + $0x68] sm:$0xff]
    %v1734 = vld [vmem:[#allocation8 + $0x70] sm:$0xff]
    %v1735 = vld [vmem:[#allocation8 + $0x78] sm:$0xff]
    %1736 = vmatprep.subr.mxu0 0.0
    %1737 = vmatpush1.msra.mxu0 %v1735
    %1738 = vmatprep.subr.mxu0 0.0
    %1739 = vmatpush1.msra.mxu0 %v1734
    %1740 = vmatprep.subr.mxu0 0.0
    %1741 = vmatpush1.msra.mxu0 %v1733
    %1742 = vmatprep.subr.mxu0 0.0
    %1743 = vmatpush1.msra.mxu0 %v1732
    %1744 = vmatprep.subr.mxu0 0.0
    %1745 = vmatpush1.msra.mxu0 %v1731
    %1746 = vmatprep.subr.mxu0 0.0
    %1747 = vmatpush1.msra.mxu0 %v1730
    %1748 = vmatprep.subr.mxu0 0.0
    %1749 = vmatpush1.msra.mxu0 %v1729
    %1750 = vmatprep.subr.mxu0 0.0
    %1751 = vmatpush1.msra.mxu0 %v1728
    %1752 = vmatprep.subr.mxu0 0.0
    %1753 = vmatpush1.msra.mxu0 %v1727
    %1754 = vmatprep.subr.mxu0 0.0
    %1755 = vmatpush1.msra.mxu0 %v1726
    %1756 = vmatprep.subr.mxu0 0.0
    %1757 = vmatpush1.msra.mxu0 %v1725
    %1758 = vmatprep.subr.mxu0 0.0
    %1759 = vmatpush1.msra.mxu0 %v1724
    %1760 = vmatprep.subr.mxu0 0.0
    %1761 = vmatpush1.msra.mxu0 %v1723
    %1762 = vmatprep.subr.mxu0 0.0
    %1763 = vmatpush1.msra.mxu0 %v1722
    %1764 = vmatprep.subr.mxu0 0.0
    %1765 = vmatpush1.msra.mxu0 %v1721
    %1766 = vmatprep.subr.mxu0 0.0
    %1767 = vmatpush1.msra.mxu0 %v1720
    %1768 = vmatprep.subr.mxu0 0.0
    %1769 = vmatpush2.msra.mxu0 0.0
    %1770 = vmatprep.subr.mxu0 0.0
    %1771 = vmatpush2.msra.mxu0 0.0
    %1772 = vmatprep.subr.mxu0 0.0
    %1773 = vmatpush2.msra.mxu0 0.0
    %1774 = vmatprep.subr.mxu0 0.0
    %1775 = vmatpush2.msra.mxu0 0.0
    %1776 = vmatprep.subr.mxu0 0.0
    %1777 = vmatpush2.msra.mxu0 0.0
    %1778 = vmatprep.subr.mxu0 0.0
    %1779 = vmatpush2.msra.mxu0 0.0
    %1780 = vmatprep.subr.mxu0 0.0
    %1781 = vmatpush2.msra.mxu0 0.0
    %1782 = vmatprep.subr.mxu0 0.0
    %1783 = vmatpush2.msra.mxu0 0.0
    %1784 = vmatprep.subr.mxu0 0.0
    %1785 = vmatpush2.msra.mxu0 0.0
    %1786 = vmatprep.subr.mxu0 0.0
    %1787 = vmatpush2.msra.mxu0 0.0
    %1788 = vmatprep.subr.mxu0 0.0
    %1789 = vmatpush2.msra.mxu0 0.0
    %1790 = vmatprep.subr.mxu0 0.0
    %1791 = vmatpush2.msra.mxu0 0.0
    %1792 = vmatprep.subr.mxu0 0.0
    %1793 = vmatpush2.msra.mxu0 0.0
    %1794 = vmatprep.subr.mxu0 0.0
    %1795 = vmatpush2.msra.mxu0 0.0
    %1796 = vmatprep.subr.mxu0 0.0
    %1797 = vmatpush2.msra.mxu0 0.0
    %1798 = vmatprep.subr.mxu0 0.0
    %1799 = vmatpush2.msra.mxu0 0.0
    %1800 = vmatprep.mubr.f32.mxu0 0.0
    %1801 = vmatmul.mubr.f32.gmra.mxu0 %v1716
    %v1802 = vpop.f32.mrf.mxu0
    %v1803 = vadd.f32 %v281, %v1802
    %v1804 = vpop.f32.mrf.mxu0
    %1805 = vmatprep.mubr.f32.mxu0 0.0
    %1806 = vmatmul.mubr.f32.gmra.mxu0 %v1717
    %v1807 = vpop.f32.mrf.mxu0
    %v1808 = vadd.f32 %v281, %v1807
    %v1809 = vpop.f32.mrf.mxu0
    %1810 = vmatprep.mubr.f32.mxu0 0.0
    %1811 = vmatmul.mubr.f32.gmra.mxu0 %v1718
    %v1812 = vpop.f32.mrf.mxu0
    %v1813 = vadd.f32 %v281, %v1812
    %v1814 = vpop.f32.mrf.mxu0
    %1815 = vmatprep.mubr.f32.mxu0 0.0
    %1816 = vmatmul.mubr.f32.gmra.mxu0 %v1719
    %v1817 = vpop.f32.mrf.mxu0
    %v1818 = vadd.f32 %v281, %v1817
    %v1819 = vpop.f32.mrf.mxu0
    %1820 = vdwg.mxu0
    %v1821 = vmax.f32 %v1803, 0.0
    %v1822 = vmax.f32 %v1808, 0.0
    %v1823 = vmax.f32 %v1813, 0.0
    %v1824 = vmax.f32 %v1818, 0.0
    %1825 = vadd.xlane.f32.xlu0 %v1821
    %v1826 = vpop.xlane.xlu0 %1825
    %1827 = vadd.xlane.f32.xlu0 %v1822
    %v1828 = vpop.xlane.xlu0 %1827
    %1829 = vadd.xlane.f32.xlu0 %v1823
    %v1830 = vpop.xlane.xlu0 %1829
    %1831 = vadd.xlane.f32.xlu0 %v1824
    %v1832 = vpop.xlane.xlu0 %1831
    %v1833 = vmul.f32 %v1826, 0.125
    %v1834 = vmul.f32 %v1828, 0.125
    %v1835 = vmul.f32 %v1830, 0.125
    %v1836 = vmul.f32 %v1832, 0.125
    %v1837 = vsub.f32 %v1821, %v1833
    %v1838 = vsub.f32 %v1822, %v1834
    %v1839 = vsub.f32 %v1823, %v1835
    %v1840 = vsub.f32 %v1824, %v1836
    %v1841 = vmul.f32 %v1837, %v105
    %v1842 = vmul.f32 %v1838, %v105
    %v1843 = vmul.f32 %v1839, %v105
    %v1844 = vmul.f32 %v1840, %v105
    %v1845 = vmul.f32 %v1841, %v1841
    %v1846 = vmul.f32 %v1842, %v1842
    %v1847 = vmul.f32 %v1843, %v1843
    %v1848 = vmul.f32 %v1844, %v1844
    %1849 = vadd.xlane.f32.xlu0 %v1845
    %v1850 = vpop.xlane.xlu0 %1849
    %1851 = vadd.xlane.f32.xlu0 %v1846
    %v1852 = vpop.xlane.xlu0 %1851
    %1853 = vadd.xlane.f32.xlu0 %v1847
    %v1854 = vpop.xlane.xlu0 %1853
    %1855 = vadd.xlane.f32.xlu0 %v1848
    %v1856 = vpop.xlane.xlu0 %1855
    %v1857 = vmul.f32 %v1850, 0.125
    %v1858 = vmul.f32 %v1852, 0.125
    %v1859 = vmul.f32 %v1854, 0.125
    %v1860 = vmul.f32 %v1856, 0.125
    %v1861 = vadd.f32 %v1857, 1e-05
    %v1862 = vadd.f32 %v1858, 1e-05
    %v1863 = vadd.f32 %v1859, 1e-05
    %v1864 = vadd.f32 %v1860, 1e-05
    %v1865 = vrsqrt.pop %v1861
    %v1866 = vrsqrt.pop %v1862
    %v1867 = vrsqrt.pop %v1863
    %v1868 = vrsqrt.pop %v1864
    %v1869 = vmul.f32 %v1841, %v1865
    %v1870 = vmul.f32 %v1842, %v1866
    %v1871 = vmul.f32 %v1843, %v1867
    %v1872 = vmul.f32 %v1844, %v1868
    %1873 = vst [vmem:[#allocation2 + $0x8] sm:$0xff] %v1869
    %1874 = vst [vmem:[#allocation2 + $0x10] sm:$0xff] %v1870
    %1875 = vst [vmem:[#allocation2 + $0x28] sm:$0xff] %v1871
    %1876 = vst [vmem:[#allocation2 + $0x30] sm:$0xff] %v1872
    %v1877 = vld [vmem:[#allocation2 + $0x7] sm:$0xff]
    %v1878 = vld [vmem:[#allocation2 + $0xf] sm:$0xff]
    %v1879 = vld [vmem:[#allocation2 + $0x27] sm:$0xff]
    %v1880 = vld [vmem:[#allocation2 + $0x2f] sm:$0xff]
    %v1881 = vld [vmem:[#allocation2 + $0x9] sm:$0xff]
    %v1882 = vld [vmem:[#allocation2 + $0x11] sm:$0xff]
    %v1883 = vld [vmem:[#allocation2 + $0x29] sm:$0xff]
    %v1884 = vld [vmem:[#allocation2 + $0x31] sm:$0xff]
    %1885 = vrot.lane.b32.xlu0 %v1869, 8
    %v1886 = vpop.permute.xlu0 %1885
    %1887 = vrot.lane.b32.xlu0 %v1870, 8
    %v1888 = vpop.permute.xlu0 %1887
    %1889 = vrot.lane.b32.xlu0 %v1871, 8
    %v1890 = vpop.permute.xlu0 %1889
    %1891 = vrot.lane.b32.xlu0 %v1872, 8
    %v1892 = vpop.permute.xlu0 %1891
    %v1893 = vadd.f32 %v1877, %v1886
    %v1894 = vadd.f32 %v1878, %v1888
    %v1895 = vadd.f32 %v1879, %v1890
    %v1896 = vadd.f32 %v1880, %v1892
    %1897 = vrot.lane.b32.xlu0 %v1881, 16
    %v1898 = vpop.permute.xlu0 %1897
    %1899 = vrot.lane.b32.xlu0 %v1882, 16
    %v1900 = vpop.permute.xlu0 %1899
    %1901 = vrot.lane.b32.xlu0 %v1883, 16
    %v1902 = vpop.permute.xlu0 %1901
    %1903 = vrot.lane.b32.xlu0 %v1884, 16
    %v1904 = vpop.permute.xlu0 %1903
    %v1905 = vadd.f32 %v1893, %v1898
    %v1906 = vadd.f32 %v1894, %v1900
    %v1907 = vadd.f32 %v1895, %v1902
    %v1908 = vadd.f32 %v1896, %v1904
    %v1909 = vld [vmem:[#allocation9] sm:$0xff]
    %v1910 = vld [vmem:[#allocation9 + $0x8] sm:$0xff]
    %v1911 = vld [vmem:[#allocation9 + $0x10] sm:$0xff]
    %v1912 = vld [vmem:[#allocation9 + $0x18] sm:$0xff]
    %v1913 = vld [vmem:[#allocation9 + $0x20] sm:$0xff]
    %v1914 = vld [vmem:[#allocation9 + $0x28] sm:$0xff]
    %v1915 = vld [vmem:[#allocation9 + $0x30] sm:$0xff]
    %v1916 = vld [vmem:[#allocation9 + $0x38] sm:$0xff]
    %v1917 = vld [vmem:[#allocation9 + $0x40] sm:$0xff]
    %v1918 = vld [vmem:[#allocation9 + $0x48] sm:$0xff]
    %v1919 = vld [vmem:[#allocation9 + $0x50] sm:$0xff]
    %v1920 = vld [vmem:[#allocation9 + $0x58] sm:$0xff]
    %v1921 = vld [vmem:[#allocation9 + $0x60] sm:$0xff]
    %v1922 = vld [vmem:[#allocation9 + $0x68] sm:$0xff]
    %v1923 = vld [vmem:[#allocation9 + $0x70] sm:$0xff]
    %v1924 = vld [vmem:[#allocation9 + $0x78] sm:$0xff]
    %1925 = vmatprep.subr.mxu0 0.0
    %1926 = vmatpush1.msra.mxu0 %v1924
    %1927 = vmatprep.subr.mxu0 0.0
    %1928 = vmatpush1.msra.mxu0 %v1923
    %1929 = vmatprep.subr.mxu0 0.0
    %1930 = vmatpush1.msra.mxu0 %v1922
    %1931 = vmatprep.subr.mxu0 0.0
    %1932 = vmatpush1.msra.mxu0 %v1921
    %1933 = vmatprep.subr.mxu0 0.0
    %1934 = vmatpush1.msra.mxu0 %v1920
    %1935 = vmatprep.subr.mxu0 0.0
    %1936 = vmatpush1.msra.mxu0 %v1919
    %1937 = vmatprep.subr.mxu0 0.0
    %1938 = vmatpush1.msra.mxu0 %v1918
    %1939 = vmatprep.subr.mxu0 0.0
    %1940 = vmatpush1.msra.mxu0 %v1917
    %1941 = vmatprep.subr.mxu0 0.0
    %1942 = vmatpush1.msra.mxu0 %v1916
    %1943 = vmatprep.subr.mxu0 0.0
    %1944 = vmatpush1.msra.mxu0 %v1915
    %1945 = vmatprep.subr.mxu0 0.0
    %1946 = vmatpush1.msra.mxu0 %v1914
    %1947 = vmatprep.subr.mxu0 0.0
    %1948 = vmatpush1.msra.mxu0 %v1913
    %1949 = vmatprep.subr.mxu0 0.0
    %1950 = vmatpush1.msra.mxu0 %v1912
    %1951 = vmatprep.subr.mxu0 0.0
    %1952 = vmatpush1.msra.mxu0 %v1911
    %1953 = vmatprep.subr.mxu0 0.0
    %1954 = vmatpush1.msra.mxu0 %v1910
    %1955 = vmatprep.subr.mxu0 0.0
    %1956 = vmatpush1.msra.mxu0 %v1909
    %1957 = vmatprep.subr.mxu0 0.0
    %1958 = vmatpush2.msra.mxu0 0.0
    %1959 = vmatprep.subr.mxu0 0.0
    %1960 = vmatpush2.msra.mxu0 0.0
    %1961 = vmatprep.subr.mxu0 0.0
    %1962 = vmatpush2.msra.mxu0 0.0
    %1963 = vmatprep.subr.mxu0 0.0
    %1964 = vmatpush2.msra.mxu0 0.0
    %1965 = vmatprep.subr.mxu0 0.0
    %1966 = vmatpush2.msra.mxu0 0.0
    %1967 = vmatprep.subr.mxu0 0.0
    %1968 = vmatpush2.msra.mxu0 0.0
    %1969 = vmatprep.subr.mxu0 0.0
    %1970 = vmatpush2.msra.mxu0 0.0
    %1971 = vmatprep.subr.mxu0 0.0
    %1972 = vmatpush2.msra.mxu0 0.0
    %1973 = vmatprep.subr.mxu0 0.0
    %1974 = vmatpush2.msra.mxu0 0.0
    %1975 = vmatprep.subr.mxu0 0.0
    %1976 = vmatpush2.msra.mxu0 0.0
    %1977 = vmatprep.subr.mxu0 0.0
    %1978 = vmatpush2.msra.mxu0 0.0
    %1979 = vmatprep.subr.mxu0 0.0
    %1980 = vmatpush2.msra.mxu0 0.0
    %1981 = vmatprep.subr.mxu0 0.0
    %1982 = vmatpush2.msra.mxu0 0.0
    %1983 = vmatprep.subr.mxu0 0.0
    %1984 = vmatpush2.msra.mxu0 0.0
    %1985 = vmatprep.subr.mxu0 0.0
    %1986 = vmatpush2.msra.mxu0 0.0
    %1987 = vmatprep.subr.mxu0 0.0
    %1988 = vmatpush2.msra.mxu0 0.0
    %1989 = vmatprep.mubr.f32.mxu0 0.0
    %1990 = vmatmul.mubr.f32.gmra.mxu0 %v1905
    %v1991 = vpop.f32.mrf.mxu0
    %v1992 = vadd.f32 %v476, %v1991
    %v1993 = vpop.f32.mrf.mxu0
    %1994 = vmatprep.mubr.f32.mxu0 0.0
    %1995 = vmatmul.mubr.f32.gmra.mxu0 %v1906
    %v1996 = vpop.f32.mrf.mxu0
    %v1997 = vadd.f32 %v476, %v1996
    %v1998 = vpop.f32.mrf.mxu0
    %1999 = vmatprep.mubr.f32.mxu0 0.0
    %2000 = vmatmul.mubr.f32.gmra.mxu0 %v1907
    %v2001 = vpop.f32.mrf.mxu0
    %v2002 = vadd.f32 %v476, %v2001
    %v2003 = vpop.f32.mrf.mxu0
    %2004 = vmatprep.mubr.f32.mxu0 0.0
    %2005 = vmatmul.mubr.f32.gmra.mxu0 %v1908
    %v2006 = vpop.f32.mrf.mxu0
    %v2007 = vadd.f32 %v476, %v2006
    %v2008 = vpop.f32.mrf.mxu0
    %2009 = vdwg.mxu0
    %2010 = vst [vmem:[#allocation2 + $0x8] sm:$0xff] %v1992
    %2011 = vst [vmem:[#allocation2 + $0x10] sm:$0xff] %v1997
    %2012 = vst [vmem:[#allocation2 + $0x28] sm:$0xff] %v2002
    %2013 = vst [vmem:[#allocation2 + $0x30] sm:$0xff] %v2007
    %v2014 = vld [vmem:[#allocation2 + $0x6] sm:$0xff]
    %v2015 = vld [vmem:[#allocation2 + $0xe] sm:$0xff]
    %v2016 = vld [vmem:[#allocation2 + $0x26] sm:$0xff]
    %v2017 = vld [vmem:[#allocation2 + $0x2e] sm:$0xff]
    %v2018 = vld [vmem:[#allocation2 + $0xa] sm:$0xff]
    %v2019 = vld [vmem:[#allocation2 + $0x12] sm:$0xff]
    %v2020 = vld [vmem:[#allocation2 + $0x2a] sm:$0xff]
    %v2021 = vld [vmem:[#allocation2 + $0x32] sm:$0xff]
    %2022 = vrot.lane.b32.xlu0 %v1992, 8
    %v2023 = vpop.permute.xlu0 %2022
    %2024 = vrot.lane.b32.xlu0 %v1997, 8
    %v2025 = vpop.permute.xlu0 %2024
    %2026 = vrot.lane.b32.xlu0 %v2002, 8
    %v2027 = vpop.permute.xlu0 %2026
    %2028 = vrot.lane.b32.xlu0 %v2007, 8
    %v2029 = vpop.permute.xlu0 %2028
    %v2030 = vadd.f32 %v2014, %v2023
    %v2031 = vadd.f32 %v2015, %v2025
    %v2032 = vadd.f32 %v2016, %v2027
    %v2033 = vadd.f32 %v2017, %v2029
    %2034 = vrot.lane.b32.xlu0 %v2018, 16
    %v2035 = vpop.permute.xlu0 %2034
    %2036 = vrot.lane.b32.xlu0 %v2019, 16
    %v2037 = vpop.permute.xlu0 %2036
    %2038 = vrot.lane.b32.xlu0 %v2020, 16
    %v2039 = vpop.permute.xlu0 %2038
    %2040 = vrot.lane.b32.xlu0 %v2021, 16
    %v2041 = vpop.permute.xlu0 %2040
    %v2042 = vadd.f32 %v2030, %v2035
    %v2043 = vadd.f32 %v2031, %v2037
    %v2044 = vadd.f32 %v2032, %v2039
    %v2045 = vadd.f32 %v2033, %v2041
    %v2046 = vld [vmem:[#allocation11] sm:$0xff]
    %v2047 = vld [vmem:[#allocation11 + $0x8] sm:$0xff]
    %v2048 = vld [vmem:[#allocation11 + $0x10] sm:$0xff]
    %v2049 = vld [vmem:[#allocation11 + $0x18] sm:$0xff]
    %v2050 = vld [vmem:[#allocation11 + $0x20] sm:$0xff]
    %v2051 = vld [vmem:[#allocation11 + $0x28] sm:$0xff]
    %v2052 = vld [vmem:[#allocation11 + $0x30] sm:$0xff]
    %v2053 = vld [vmem:[#allocation11 + $0x38] sm:$0xff]
    %v2054 = vld [vmem:[#allocation11 + $0x40] sm:$0xff]
    %v2055 = vld [vmem:[#allocation11 + $0x48] sm:$0xff]
    %v2056 = vld [vmem:[#allocation11 + $0x50] sm:$0xff]
    %v2057 = vld [vmem:[#allocation11 + $0x58] sm:$0xff]
    %v2058 = vld [vmem:[#allocation11 + $0x60] sm:$0xff]
    %v2059 = vld [vmem:[#allocation11 + $0x68] sm:$0xff]
    %v2060 = vld [vmem:[#allocation11 + $0x70] sm:$0xff]
    %v2061 = vld [vmem:[#allocation11 + $0x78] sm:$0xff]
    %2062 = vmatprep.subr.mxu0 0.0
    %2063 = vmatpush1.msra.mxu0 %v2061
    %2064 = vmatprep.subr.mxu0 0.0
    %2065 = vmatpush1.msra.mxu0 %v2060
    %2066 = vmatprep.subr.mxu0 0.0
    %2067 = vmatpush1.msra.mxu0 %v2059
    %2068 = vmatprep.subr.mxu0 0.0
    %2069 = vmatpush1.msra.mxu0 %v2058
    %2070 = vmatprep.subr.mxu0 0.0
    %2071 = vmatpush1.msra.mxu0 %v2057
    %2072 = vmatprep.subr.mxu0 0.0
    %2073 = vmatpush1.msra.mxu0 %v2056
    %2074 = vmatprep.subr.mxu0 0.0
    %2075 = vmatpush1.msra.mxu0 %v2055
    %2076 = vmatprep.subr.mxu0 0.0
    %2077 = vmatpush1.msra.mxu0 %v2054
    %2078 = vmatprep.subr.mxu0 0.0
    %2079 = vmatpush1.msra.mxu0 %v2053
    %2080 = vmatprep.subr.mxu0 0.0
    %2081 = vmatpush1.msra.mxu0 %v2052
    %2082 = vmatprep.subr.mxu0 0.0
    %2083 = vmatpush1.msra.mxu0 %v2051
    %2084 = vmatprep.subr.mxu0 0.0
    %2085 = vmatpush1.msra.mxu0 %v2050
    %2086 = vmatprep.subr.mxu0 0.0
    %2087 = vmatpush1.msra.mxu0 %v2049
    %2088 = vmatprep.subr.mxu0 0.0
    %2089 = vmatpush1.msra.mxu0 %v2048
    %2090 = vmatprep.subr.mxu0 0.0
    %2091 = vmatpush1.msra.mxu0 %v2047
    %2092 = vmatprep.subr.mxu0 0.0
    %2093 = vmatpush1.msra.mxu0 %v2046
    %2094 = vmatprep.subr.mxu0 0.0
    %2095 = vmatpush2.msra.mxu0 0.0
    %2096 = vmatprep.subr.mxu0 0.0
    %2097 = vmatpush2.msra.mxu0 0.0
    %2098 = vmatprep.subr.mxu0 0.0
    %2099 = vmatpush2.msra.mxu0 0.0
    %2100 = vmatprep.subr.mxu0 0.0
    %2101 = vmatpush2.msra.mxu0 0.0
    %2102 = vmatprep.subr.mxu0 0.0
    %2103 = vmatpush2.msra.mxu0 0.0
    %2104 = vmatprep.subr.mxu0 0.0
    %2105 = vmatpush2.msra.mxu0 0.0
    %2106 = vmatprep.subr.mxu0 0.0
    %2107 = vmatpush2.msra.mxu0 0.0
    %2108 = vmatprep.subr.mxu0 0.0
    %2109 = vmatpush2.msra.mxu0 0.0
    %2110 = vmatprep.subr.mxu0 0.0
    %2111 = vmatpush2.msra.mxu0 0.0
    %2112 = vmatprep.subr.mxu0 0.0
    %2113 = vmatpush2.msra.mxu0 0.0
    %2114 = vmatprep.subr.mxu0 0.0
    %2115 = vmatpush2.msra.mxu0 0.0
    %2116 = vmatprep.subr.mxu0 0.0
    %2117 = vmatpush2.msra.mxu0 0.0
    %2118 = vmatprep.subr.mxu0 0.0
    %2119 = vmatpush2.msra.mxu0 0.0
    %2120 = vmatprep.subr.mxu0 0.0
    %2121 = vmatpush2.msra.mxu0 0.0
    %2122 = vmatprep.subr.mxu0 0.0
    %2123 = vmatpush2.msra.mxu0 0.0
    %2124 = vmatprep.subr.mxu0 0.0
    %2125 = vmatpush2.msra.mxu0 0.0
    %2126 = vmatprep.mubr.f32.mxu0 0.0
    %2127 = vmatmul.mubr.f32.gmra.mxu0 %v2042
    %v2128 = vpop.f32.mrf.mxu0
    %v2129 = vadd.f32 %v619, %v2128
    %v2130 = vpop.f32.mrf.mxu0
    %2131 = vmatprep.mubr.f32.mxu0 0.0
    %2132 = vmatmul.mubr.f32.gmra.mxu0 %v2043
    %v2133 = vpop.f32.mrf.mxu0
    %v2134 = vadd.f32 %v619, %v2133
    %v2135 = vpop.f32.mrf.mxu0
    %2136 = vmatprep.mubr.f32.mxu0 0.0
    %2137 = vmatmul.mubr.f32.gmra.mxu0 %v2044
    %v2138 = vpop.f32.mrf.mxu0
    %v2139 = vadd.f32 %v619, %v2138
    %v2140 = vpop.f32.mrf.mxu0
    %2141 = vmatprep.mubr.f32.mxu0 0.0
    %2142 = vmatmul.mubr.f32.gmra.mxu0 %v2045
    %v2143 = vpop.f32.mrf.mxu0
    %v2144 = vadd.f32 %v619, %v2143
    %v2145 = vpop.f32.mrf.mxu0
    %2146 = vdwg.mxu0
    %2147 = vst [vmem:[#allocation12] sm:$0xff] %v2129
    %2148 = vst [vmem:[#allocation12 + $0x8] sm:$0xff] %v2134
    %2149 = vst [vmem:[#allocation12 + $0x10] sm:$0xff] %v2139
    %2150 = vst [vmem:[#allocation12 + $0x18] sm:$0xff] %v2144
    // Predicated region
    $region58: #{tpu_custom_call.1} parent=1 // pred_check
      _
    $region59: #{tpu_custom_call.1} parent=1 // pred_check_branch
      %2152 = sbr.rel (0) target = $region61
    $region60: #{tpu_custom_call.1} parent=1 // pred_region
      %s2154 = ssub.s32 512, 512
      %2155 = vsyncadd [#allocation5], %s2154
      %s2156 = sshll.u32 [#allocation12], 4
      %s2157 = int_to_ptr.vmem [resolvable:$true] %s2156
      %2162 = dma.vmem_to_hbm [thread:$0]  %s2157, 512, %s9, [#allocation5], 128, 128, 8
    $region61: #{tpu_custom_call.1} parent=1 // pred_fallthru
      _
    // Predicated region
    $region62: #{tpu_custom_call.1} parent=1 // pred_check
      _
    $region63: #{tpu_custom_call.1} parent=1 // pred_check_branch
      %2164 = sbr.rel (0) target = $region65
    $region64: #{tpu_custom_call.1} parent=1 // pred_region
      %2165 = dma.done [#allocation5], 512
    $region65: #{tpu_custom_call.1} parent=1 // pred_fallthru
      _
    %2166 = vsyncpa [#allocation4], 1
    %2167 = vsyncpa [#allocation7], 1
    %2168 = vsyncpa [#allocation10], 1
    %2169 = vsyncpa [#allocation5], 1

</llo_original>
